<compile_context>
chip_gen: v5e
topology: v5e:2x2
jax: 0.10.0
libtpu: 0.0.40
codegen_flags: <defaults>
</compile_context>

<pallas_src>
import functools

import jax
import jax.numpy as jnp
from jax.experimental import pallas as pl
from jax.experimental.pallas import tpu as pltpu

EPS = 1e-5


# ----------------------------------------------------------------------------
# Fused forward kernel: one grid step = `samples` batch samples (stacked along
# rows) through ALL residual blocks of all groups + the "+ info" adds.
# ----------------------------------------------------------------------------
def _forward_kernel(x_ref, info_ref, w_ref, g_ref, gt_ref, o_ref, *,
                    n_groups, n_blocks, samples, height):
    M, WC = x_ref.shape               # M = samples * height rows, lane-dense W*C
    H = height
    bpc = samples
    C = g_ref.shape[1]
    W = WC // C
    inv_n = 1.0 / float(H * W)

    g = g_ref[...]                    # (W*C, C)  per-channel gather (sum over W)
    gt = gt_ref[...]                  # (C, W*C)  per-channel broadcast
    x = x_ref[...]                    # (M, W*C)  bpc samples stacked along rows
    info = info_ref[...]              # (M, W*C)

    # H-direction zero-padding halo masks, hoisted once for every conv.  Rows
    # are stacked per sample, so row % H == 0 / H-1 marks both the image edge
    # and the sample boundary in the stacked layout.
    row = jax.lax.broadcasted_iota(jnp.int32, (M, WC), 0)
    top_halo = (row % H) == 0
    bot_halo = (row % H) == (H - 1)

    def conv3x3(xs, idx):
        # 3x3 conv as ONE K-concat MXU matmul: (M, 3*WC) @ (3*WC, WC).
        # Row shifts (ZeroPad2d along H) are XLU rolls + the halo mask; the
        # W-direction taps & padding are folded into banded weights (wrapper).
        x_up = jnp.where(top_halo, 0.0, pltpu.roll(xs, 1, axis=0))      # x[h-1]
        x_dn = jnp.where(bot_halo, 0.0, pltpu.roll(xs, M - 1, axis=0))  # x[h+1]
        lhs = jnp.concatenate([x_up, xs, x_dn], axis=1)                 # (M, 3*WC)
        return jnp.dot(lhs.astype(w_ref.dtype), w_ref[idx],
                       preferred_element_type=jnp.float32)

    def instance_norm(y):
        # Per-sample, per-channel stats in one pass (var = E[x^2] - mean^2).
        # All samples & both moments share ONE gather matmul and ONE broadcast
        # matmul (instead of 4 M=1 dots per norm).
        ybs, ssums, sqsums = [], [], []
        for b in range(bpc):
            yb = y[b * H:(b + 1) * H]                     # 8-aligned row slice
            ybs.append(yb)
            ssums.append(jnp.sum(yb, axis=0, keepdims=True))
            sqsums.append(jnp.sum(yb * yb, axis=0, keepdims=True))
        stats = jnp.concatenate(ssums + sqsums, axis=0)            # (2*bpc, WC)
        per_c = jnp.dot(stats, g,
                        preferred_element_type=jnp.float32) * inv_n  # (2*bpc, C)
        mean = per_c[:bpc]                                          # (bpc, C)
        ex2 = per_c[bpc:]                                           # (bpc, C)
        inv = jax.lax.rsqrt(ex2 - mean * mean + EPS)                # (bpc, C)
        coef = jnp.concatenate([inv, -mean * inv], axis=0)          # (2*bpc, C)
        coef_w = jnp.dot(coef, gt,
                         preferred_element_type=jnp.float32)        # (2*bpc, WC)
        outs = [ybs[b] * coef_w[b:b + 1] + coef_w[bpc + b:bpc + b + 1]
                for b in range(bpc)]
        return jnp.concatenate(outs, axis=0)                        # (M, WC)

    def res_block(xc, base_idx):
        # conv -> IN -> ReLU -> conv -> IN, + identity (biases folded away).
        h = jnp.maximum(instance_norm(conv3x3(xc, base_idx)), 0.0)
        h = instance_norm(conv3x3(h, base_idx + 1))
        return xc + h

    for gi in range(n_groups):
        x = jax.lax.fori_loop(
            0, n_blocks,
            lambda blk, xc, gi=gi: res_block(xc, (gi * n_blocks + blk) * 2),
            x)
        x = x + info                   # "+ info" after each group (fused)

    o_ref[...] = x.astype(o_ref.dtype)


# ----------------------------------------------------------------------------
# Wrapper-side weight preprocessing: fold the W-axis taps (and their zero
# padding) into a block-banded matrix per kernel row dy, then stack the three
# dy-bands along K so the whole 3x3 conv is one (3*W*C, W*C) matmul RHS.
#   band_dy[(w+dx-1)*C + cin, w*C + cout] = w_hwio[dy, dx, cin, cout]
# ----------------------------------------------------------------------------
def _conv_weight_matrix(w_hwio, width):
    blocks = []
    for dy in range(3):
        m = None
        for dx in range(3):
            shift = jnp.eye(width, width, k=1 - dx, dtype=jnp.float32)
            term = jnp.kron(shift, w_hwio[dy, dx].astype(jnp.float32))
            m = term if m is None else m + term
        blocks.append(m)
    return jnp.concatenate(blocks, axis=0)        # (3*W*C, W*C)


# ----------------------------------------------------------------------------
# Full forward: matches FeatureExtractorWithInfo.forward semantics (NCHW I/O).
# ----------------------------------------------------------------------------
def feature_extractor_with_info(x_nchw, info_nchw, params, *,
                                mxu_dtype=jnp.float32):
    B, C, H, W = x_nchw.shape
    WC = W * C
    n_groups = len(params)
    n_blocks = len(params[0])

    # Samples per grid step: stack batch samples along rows so the conv LHS
    # has up to ~256 rows (MXU depth on v6e/v7x) instead of a lone H rows.
    bpc = max(1, min(B, 256 // max(H, 1)))
    while B % bpc:
        bpc -= 1
    nb = B // bpc

    def to_lane_dense(a):                          # NCHW -> (B*H, W*C)
        return jnp.transpose(a, (0, 2, 3, 1)).reshape(B * H, WC)

    x = to_lane_dense(x_nchw)
    info = to_lane_dense(info_nchw)

    # Stacked per-conv weight matrices (f32 build, cast last).  Conv biases
    # are NOT passed: a per-channel constant before affine-free InstanceNorm
    # is exactly cancelled by the mean subtraction.
    mats = []
    for group in params:
        for (w1, _b1, w2, _b2) in group:
            mats.append(_conv_weight_matrix(w1, W))
            mats.append(_conv_weight_matrix(w2, W))
    w_stack = jnp.stack(mats, axis=0).astype(mxu_dtype)   # (n_convs, 3*WC, WC)

    # Constant per-channel gather / broadcast matrices for InstanceNorm.
    lane = jnp.arange(WC)[:, None]
    chan = jnp.arange(C)[None, :]
    g = (lane % C == chan).astype(jnp.float32)     # (W*C, C)
    gt = jnp.transpose(g)                          # (C, W*C)

    kernel = functools.partial(_forward_kernel, n_groups=n_groups,
                               n_blocks=n_blocks, samples=bpc, height=H)

    out = pl.pallas_call(
        kernel,
        out_shape=jax.ShapeDtypeStruct((B * H, WC), x.dtype),
        grid_spec=pltpu.PrefetchScalarGridSpec(
            num_scalar_prefetch=0,
            grid=(nb,),
            in_specs=[
                pl.BlockSpec((bpc * H, WC), lambda i: (i, 0)),      # x
                pl.BlockSpec((bpc * H, WC), lambda i: (i, 0)),      # info
                pl.BlockSpec(w_stack.shape, lambda i: (0, 0, 0)),   # weights (resident)
                pl.BlockSpec(g.shape, lambda i: (0, 0)),            # gather
                pl.BlockSpec(gt.shape, lambda i: (0, 0)),           # broadcast
            ],
            out_specs=pl.BlockSpec((bpc * H, WC), lambda i: (i, 0)),
        ),
        compiler_params=pltpu.CompilerParams(
            dimension_semantics=("parallel",)),    # batch chunks across TCs (v7x)
    )(x, info, w_stack, g, gt)

    return jnp.transpose(out.reshape(B, H, W, C), (0, 3, 1, 2))   # -> NCHW


# ----------------------------------------------------------------------------
# Parameter construction (deterministic, synthetic): 4 groups x n_residual_blocks
# residual blocks, each with two 3x3 convs (weights HWIO) + biases (1, C).
# ----------------------------------------------------------------------------
def init_params(key, n_residual_blocks, in_features):
    params = []
    scale = 1.0 / jnp.sqrt(9.0 * in_features)
    for _ in range(4):
        group = []
        for _ in range(n_residual_blocks):
            key, k1, k2, k3, k4 = jax.random.split(key, 5)
            w1 = jax.random.normal(k1, (3, 3, in_features, in_features),
                                   jnp.float32) * scale
            b1 = jax.random.normal(k2, (1, in_features), jnp.float32) * 0.01
            w2 = jax.random.normal(k3, (3, 3, in_features, in_features),
                                   jnp.float32) * scale
            b2 = jax.random.normal(k4, (1, in_features), jnp.float32) * 0.01
            group.append((w1, b1, w2, b2))
        params.append(group)
    return params


# ----------------------------------------------------------------------------
# Pure-JAX reference (mirrors the PyTorch graph, biases included) for checking.
# ----------------------------------------------------------------------------
def _reference(x_nchw, info_nchw, params):
    def inorm(x):
        mean = x.mean(axis=(2, 3), keepdims=True)
        var = ((x - mean) ** 2).mean(axis=(2, 3), keepdims=True)
        return (x - mean) / jnp.sqrt(var + EPS)

    def conv(x, w_hwio, b):
        y = jax.lax.conv_general_dilated(
            x, w_hwio, (1, 1), [(1, 1), (1, 1)],
            dimension_numbers=("NCHW", "HWIO", "NCHW"))
        return y + b.reshape(1, -1, 1, 1)

    def resblock(x, w1, b1, w2, b2):
        y = conv(x, w1, b1)
        y = jnp.maximum(inorm(y), 0.0)
        y = inorm(conv(y, w2, b2))
        return x + y

    x = x_nchw
    for group in params:
        for (w1, b1, w2, b2) in group:
            x = resblock(x, w1, b1, w2, b2)
        x = x + info_nchw
    return x


if __name__ == "__main__":
    B, C, H, W = 2, 8, 16, 16            # W*C = 128 -> lane-dense last dim
    n_residual_blocks = 2

    key = jax.random.PRNGKey(0)
    kx, ki = jax.random.split(key)
    x = jax.random.normal(kx, (B, C, H, W), jnp.float32)
    info = jax.random.normal(ki, (B, C, H, W), jnp.float32)

    params = init_params(jax.random.PRNGKey(42), n_residual_blocks, C)

    fwd = jax.jit(feature_extractor_with_info)
    out = jax.block_until_ready(fwd(x, info, params))

    ref = jax.block_until_ready(_reference(x, info, params))
    assert out.shape == (B, C, H, W)
    max_err = float(jnp.max(jnp.abs(out - ref)))
    assert jnp.allclose(out, ref, atol=2e-3, rtol=2e-3), max_err

    print("KERNEL_OK")
</pallas_src>

<mosaic_0001>
module attributes {stable_mosaic.version = 11 : i64} {
  func.func @_forward_kernel(%arg0: i32, %arg1: memref<32x128xf32, #tpu.memory_space<vmem>>, %arg2: memref<32x128xf32, #tpu.memory_space<vmem>>, %arg3: memref<16x384x128xf32, #tpu.memory_space<vmem>>, %arg4: memref<128x8xf32, #tpu.memory_space<vmem>>, %arg5: memref<8x128xf32, #tpu.memory_space<vmem>>, %arg6: memref<32x128xf32, #tpu.memory_space<vmem>>) attributes {dimension_semantics = [#tpu.dimension_semantics<parallel>], iteration_bounds = array<i64: 1>, scalar_prefetch = 0 : i64, scratch_operands = 0 : i64, tpu.core_type = #tpu.core_type<tc>, window_params = [{transform_indices = @transform_0, window_bounds = array<i64: 32, 128>}, {transform_indices = @transform_1, window_bounds = array<i64: 32, 128>}, {pipeline_mode = #tpu.pipeline_mode<synchronous>, transform_indices = @transform_2, window_bounds = array<i64: 16, 384, 128>}, {pipeline_mode = #tpu.pipeline_mode<synchronous>, transform_indices = @transform_3, window_bounds = array<i64: 128, 8>}, {pipeline_mode = #tpu.pipeline_mode<synchronous>, transform_indices = @transform_4, window_bounds = array<i64: 8, 128>}, {transform_indices = @transform_5, window_bounds = array<i64: 32, 128>}]} {
    %c0 = arith.constant 0 : index
    %c0_0 = arith.constant 0 : index
    %0 = vector.load %arg4[%c0, %c0_0] : memref<128x8xf32, #tpu.memory_space<vmem>>, vector<128x8xf32>
    %c0_1 = arith.constant 0 : index
    %c0_2 = arith.constant 0 : index
    %1 = vector.load %arg5[%c0_1, %c0_2] : memref<8x128xf32, #tpu.memory_space<vmem>>, vector<8x128xf32>
    %c0_3 = arith.constant 0 : index
    %c0_4 = arith.constant 0 : index
    %2 = vector.load %arg1[%c0_3, %c0_4] : memref<32x128xf32, #tpu.memory_space<vmem>>, vector<32x128xf32>
    %c0_5 = arith.constant 0 : index
    %c0_6 = arith.constant 0 : index
    %3 = vector.load %arg2[%c0_5, %c0_6] : memref<32x128xf32, #tpu.memory_space<vmem>>, vector<32x128xf32>
    %4 = tpu.iota {dimensions = array<i32: 0>} : vector<32x128xi32>
    %c16_i32 = arith.constant 16 : i32
    %c0_i32 = arith.constant 0 : i32
    %5 = arith.cmpi eq, %c16_i32, %c0_i32 : i32
    %c1_i32 = arith.constant 1 : i32
    %6 = arith.select %5, %c1_i32, %c16_i32 : i32
    %7 = vector.broadcast %6 : i32 to vector<32x128xi32>
    %8 = arith.remsi %4, %7 : vector<32x128xi32>
    %c0_i32_7 = arith.constant 0 : i32
    %9 = vector.broadcast %c0_i32_7 : i32 to vector<32x128xi32>
    %10 = arith.cmpi ne, %8, %9 : vector<32x128xi32>
    %c0_i32_8 = arith.constant 0 : i32
    %11 = vector.broadcast %c0_i32_8 : i32 to vector<32x128xi32>
    %12 = arith.cmpi slt, %8, %11 : vector<32x128xi32>
    %c0_i32_9 = arith.constant 0 : i32
    %13 = arith.cmpi slt, %6, %c0_i32_9 : i32
    %14 = vector.broadcast %13 : i1 to vector<32x128xi1>
    %15 = vector.broadcast %14 : vector<32x128xi1> to vector<32x128xi1>
    %16 = arith.xori %12, %15 : vector<32x128xi1>
    %17 = arith.andi %16, %10 : vector<32x128xi1>
    %18 = vector.broadcast %6 : i32 to vector<32x128xi32>
    %19 = arith.addi %8, %18 : vector<32x128xi32>
    %20 = arith.select %17, %19, %8 : vector<32x128xi1>, vector<32x128xi32>
    %c0_i32_10 = arith.constant 0 : i32
    %21 = vector.broadcast %c0_i32_10 : i32 to vector<32x128xi32>
    %22 = arith.cmpi eq, %20, %21 : vector<32x128xi32>
    %c16_i32_11 = arith.constant 16 : i32
    %c0_i32_12 = arith.constant 0 : i32
    %23 = arith.cmpi eq, %c16_i32_11, %c0_i32_12 : i32
    %c1_i32_13 = arith.constant 1 : i32
    %24 = arith.select %23, %c1_i32_13, %c16_i32_11 : i32
    %25 = vector.broadcast %24 : i32 to vector<32x128xi32>
    %26 = arith.remsi %4, %25 : vector<32x128xi32>
    %c0_i32_14 = arith.constant 0 : i32
    %27 = vector.broadcast %c0_i32_14 : i32 to vector<32x128xi32>
    %28 = arith.cmpi ne, %26, %27 : vector<32x128xi32>
    %c0_i32_15 = arith.constant 0 : i32
    %29 = vector.broadcast %c0_i32_15 : i32 to vector<32x128xi32>
    %30 = arith.cmpi slt, %26, %29 : vector<32x128xi32>
    %c0_i32_16 = arith.constant 0 : i32
    %31 = arith.cmpi slt, %24, %c0_i32_16 : i32
    %32 = vector.broadcast %31 : i1 to vector<32x128xi1>
    %33 = vector.broadcast %32 : vector<32x128xi1> to vector<32x128xi1>
    %34 = arith.xori %30, %33 : vector<32x128xi1>
    %35 = arith.andi %34, %28 : vector<32x128xi1>
    %36 = vector.broadcast %24 : i32 to vector<32x128xi32>
    %37 = arith.addi %26, %36 : vector<32x128xi32>
    %38 = arith.select %35, %37, %26 : vector<32x128xi1>, vector<32x128xi32>
    %c15_i32 = arith.constant 15 : i32
    %39 = vector.broadcast %c15_i32 : i32 to vector<32x128xi32>
    %40 = arith.cmpi eq, %38, %39 : vector<32x128xi32>
    %c0_i32_17 = arith.constant 0 : i32
    %c2_i32 = arith.constant 2 : i32
    %41 = arith.addi %c0_i32_17, %c2_i32 : i32
    %c1_i32_18 = arith.constant 1 : i32
    %42 = scf.for %arg7 = %c0_i32_17 to %41 step %c1_i32_18 iter_args(%arg8 = %2) -> (vector<32x128xf32>)  : i32 {
      %c0_i32_34 = arith.constant 0 : i32
      %54 = arith.addi %c0_i32_34, %arg7 : i32
      %c2_i32_35 = arith.constant 2 : i32
      %55 = arith.muli %54, %c2_i32_35 : i32
      %c1_i32_36 = arith.constant 1 : i32
      %56 = tpu.dynamic_rotate %arg8 by %c1_i32_36 dim 0 : vector<32x128xf32>, i32 -> vector<32x128xf32>
      %cst = arith.constant 0.000000e+00 : f32
      %57 = vector.broadcast %cst : f32 to vector<32x128xf32>
      %58 = arith.select %22, %57, %56 : vector<32x128xi1>, vector<32x128xf32>
      %c31_i32 = arith.constant 31 : i32
      %59 = tpu.dynamic_rotate %arg8 by %c31_i32 dim 0 : vector<32x128xf32>, i32 -> vector<32x128xf32>
      %cst_37 = arith.constant 0.000000e+00 : f32
      %60 = vector.broadcast %cst_37 : f32 to vector<32x128xf32>
      %61 = arith.select %40, %60, %59 : vector<32x128xi1>, vector<32x128xf32>
      %62 = tpu.concatenate %58, %arg8, %61 in 1 : vector<32x128xf32>, vector<32x128xf32>, vector<32x128xf32> -> vector<32x384xf32>
      %63 = arith.index_cast %55 : i32 to index
      %c0_38 = arith.constant 0 : index
      %c0_39 = arith.constant 0 : index
      %64 = vector.load %arg3[%63, %c0_38, %c0_39] : memref<16x384x128xf32, #tpu.memory_space<vmem>>, vector<1x384x128xf32>
      %65 = vector.shape_cast %64 : vector<1x384x128xf32> to vector<384x128xf32>
      %cst_40 = arith.constant dense<0.000000e+00> : vector<32x128xf32>
      %66 = tpu.matmul %62, %65, %cst_40 {dimension_numbers = #tpu.dot_dimension_numbers<[1], [0], [0], [1], [0, 0, 1, 1], [], []>} : vector<32x384xf32>, vector<384x128xf32>, vector<32x128xf32> -> vector<32x128xf32>
      %67 = vector.extract_strided_slice %66 {offsets = [0, 0], sizes = [16, 128], strides = [1, 1]} : vector<32x128xf32> to vector<16x128xf32>
      %cst_41 = arith.constant dense<0.000000e+00> : vector<128xf32>
      %68 = vector.multi_reduction <add>, %67, %cst_41 [0] : vector<16x128xf32> to vector<128xf32>
      %69 = vector.shape_cast %68 : vector<128xf32> to vector<1x128xf32>
      %70 = arith.mulf %67, %67 : vector<16x128xf32>
      %cst_42 = arith.constant dense<0.000000e+00> : vector<128xf32>
      %71 = vector.multi_reduction <add>, %70, %cst_42 [0] : vector<16x128xf32> to vector<128xf32>
      %72 = vector.shape_cast %71 : vector<128xf32> to vector<1x128xf32>
      %73 = vector.extract_strided_slice %66 {offsets = [16, 0], sizes = [16, 128], strides = [1, 1]} : vector<32x128xf32> to vector<16x128xf32>
      %cst_43 = arith.constant dense<0.000000e+00> : vector<128xf32>
      %74 = vector.multi_reduction <add>, %73, %cst_43 [0] : vector<16x128xf32> to vector<128xf32>
      %75 = vector.shape_cast %74 : vector<128xf32> to vector<1x128xf32>
      %76 = arith.mulf %73, %73 : vector<16x128xf32>
      %cst_44 = arith.constant dense<0.000000e+00> : vector<128xf32>
      %77 = vector.multi_reduction <add>, %76, %cst_44 [0] : vector<16x128xf32> to vector<128xf32>
      %78 = vector.shape_cast %77 : vector<128xf32> to vector<1x128xf32>
      %79 = tpu.concatenate %69, %75, %72, %78 in 0 : vector<1x128xf32>, vector<1x128xf32>, vector<1x128xf32>, vector<1x128xf32> -> vector<4x128xf32>
      %cst_45 = arith.constant dense<0.000000e+00> : vector<4x8xf32>
      %80 = tpu.matmul %79, %0, %cst_45 {dimension_numbers = #tpu.dot_dimension_numbers<[1], [0], [0], [1], [0, 0, 1, 1], [], []>} : vector<4x128xf32>, vector<128x8xf32>, vector<4x8xf32> -> vector<4x8xf32>
      %cst_46 = arith.constant 3.906250e-03 : f32
      %81 = vector.broadcast %cst_46 : f32 to vector<4x8xf32>
      %82 = arith.mulf %80, %81 : vector<4x8xf32>
      %83 = vector.extract_strided_slice %82 {offsets = [0, 0], sizes = [2, 8], strides = [1, 1]} : vector<4x8xf32> to vector<2x8xf32>
      %84 = vector.extract_strided_slice %82 {offsets = [2, 0], sizes = [2, 8], strides = [1, 1]} : vector<4x8xf32> to vector<2x8xf32>
      %85 = arith.mulf %83, %83 : vector<2x8xf32>
      %86 = arith.subf %84, %85 : vector<2x8xf32>
      %cst_47 = arith.constant 9.99999974E-6 : f32
      %87 = vector.broadcast %cst_47 : f32 to vector<2x8xf32>
      %88 = arith.addf %86, %87 : vector<2x8xf32>
      %89 = math.rsqrt %88 : vector<2x8xf32>
      %cst_48 = arith.constant 0.000000e+00 : f32
      %90 = vector.broadcast %cst_48 : f32 to vector<2x8xf32>
      %91 = arith.subf %90, %83 : vector<2x8xf32>
      %92 = arith.mulf %91, %89 : vector<2x8xf32>
      %93 = tpu.concatenate %89, %92 in 0 : vector<2x8xf32>, vector<2x8xf32> -> vector<4x8xf32>
      %cst_49 = arith.constant dense<0.000000e+00> : vector<4x128xf32>
      %94 = tpu.matmul %93, %1, %cst_49 {dimension_numbers = #tpu.dot_dimension_numbers<[1], [0], [0], [1], [0, 0, 1, 1], [], []>} : vector<4x8xf32>, vector<8x128xf32>, vector<4x128xf32> -> vector<4x128xf32>
      %95 = vector.extract_strided_slice %94 {offsets = [0, 0], sizes = [1, 128], strides = [1, 1]} : vector<4x128xf32> to vector<1x128xf32>
      %96 = vector.broadcast %95 : vector<1x128xf32> to vector<16x128xf32>
      %97 = arith.mulf %67, %96 : vector<16x128xf32>
      %98 = vector.extract_strided_slice %94 {offsets = [2, 0], sizes = [1, 128], strides = [1, 1]} : vector<4x128xf32> to vector<1x128xf32>
      %99 = vector.broadcast %98 : vector<1x128xf32> to vector<16x128xf32>
      %100 = arith.addf %97, %99 : vector<16x128xf32>
      %101 = vector.extract_strided_slice %94 {offsets = [1, 0], sizes = [1, 128], strides = [1, 1]} : vector<4x128xf32> to vector<1x128xf32>
      %102 = vector.broadcast %101 : vector<1x128xf32> to vector<16x128xf32>
      %103 = arith.mulf %73, %102 : vector<16x128xf32>
      %104 = vector.extract_strided_slice %94 {offsets = [3, 0], sizes = [1, 128], strides = [1, 1]} : vector<4x128xf32> to vector<1x128xf32>
      %105 = vector.broadcast %104 : vector<1x128xf32> to vector<16x128xf32>
      %106 = arith.addf %103, %105 : vector<16x128xf32>
      %107 = tpu.concatenate %100, %106 in 0 : vector<16x128xf32>, vector<16x128xf32> -> vector<32x128xf32>
      %cst_50 = arith.constant 0.000000e+00 : f32
      %108 = vector.broadcast %cst_50 : f32 to vector<32x128xf32>
      %109 = arith.maximumf %107, %108 : vector<32x128xf32>
      %c1_i32_51 = arith.constant 1 : i32
      %110 = arith.addi %55, %c1_i32_51 : i32
      %c1_i32_52 = arith.constant 1 : i32
      %111 = tpu.dynamic_rotate %109 by %c1_i32_52 dim 0 : vector<32x128xf32>, i32 -> vector<32x128xf32>
      %cst_53 = arith.constant 0.000000e+00 : f32
      %112 = vector.broadcast %cst_53 : f32 to vector<32x128xf32>
      %113 = arith.select %22, %112, %111 : vector<32x128xi1>, vector<32x128xf32>
      %c31_i32_54 = arith.constant 31 : i32
      %114 = tpu.dynamic_rotate %109 by %c31_i32_54 dim 0 : vector<32x128xf32>, i32 -> vector<32x128xf32>
      %cst_55 = arith.constant 0.000000e+00 : f32
      %115 = vector.broadcast %cst_55 : f32 to vector<32x128xf32>
      %116 = arith.select %40, %115, %114 : vector<32x128xi1>, vector<32x128xf32>
      %117 = tpu.concatenate %113, %109, %116 in 1 : vector<32x128xf32>, vector<32x128xf32>, vector<32x128xf32> -> vector<32x384xf32>
      %118 = arith.index_cast %110 : i32 to index
      %c0_56 = arith.constant 0 : index
      %c0_57 = arith.constant 0 : index
      %119 = vector.load %arg3[%118, %c0_56, %c0_57] : memref<16x384x128xf32, #tpu.memory_space<vmem>>, vector<1x384x128xf32>
      %120 = vector.shape_cast %119 : vector<1x384x128xf32> to vector<384x128xf32>
      %cst_58 = arith.constant dense<0.000000e+00> : vector<32x128xf32>
      %121 = tpu.matmul %117, %120, %cst_58 {dimension_numbers = #tpu.dot_dimension_numbers<[1], [0], [0], [1], [0, 0, 1, 1], [], []>} : vector<32x384xf32>, vector<384x128xf32>, vector<32x128xf32> -> vector<32x128xf32>
      %122 = vector.extract_strided_slice %121 {offsets = [0, 0], sizes = [16, 128], strides = [1, 1]} : vector<32x128xf32> to vector<16x128xf32>
      %cst_59 = arith.constant dense<0.000000e+00> : vector<128xf32>
      %123 = vector.multi_reduction <add>, %122, %cst_59 [0] : vector<16x128xf32> to vector<128xf32>
      %124 = vector.shape_cast %123 : vector<128xf32> to vector<1x128xf32>
      %125 = arith.mulf %122, %122 : vector<16x128xf32>
      %cst_60 = arith.constant dense<0.000000e+00> : vector<128xf32>
      %126 = vector.multi_reduction <add>, %125, %cst_60 [0] : vector<16x128xf32> to vector<128xf32>
      %127 = vector.shape_cast %126 : vector<128xf32> to vector<1x128xf32>
      %128 = vector.extract_strided_slice %121 {offsets = [16, 0], sizes = [16, 128], strides = [1, 1]} : vector<32x128xf32> to vector<16x128xf32>
      %cst_61 = arith.constant dense<0.000000e+00> : vector<128xf32>
      %129 = vector.multi_reduction <add>, %128, %cst_61 [0] : vector<16x128xf32> to vector<128xf32>
      %130 = vector.shape_cast %129 : vector<128xf32> to vector<1x128xf32>
      %131 = arith.mulf %128, %128 : vector<16x128xf32>
      %cst_62 = arith.constant dense<0.000000e+00> : vector<128xf32>
      %132 = vector.multi_reduction <add>, %131, %cst_62 [0] : vector<16x128xf32> to vector<128xf32>
      %133 = vector.shape_cast %132 : vector<128xf32> to vector<1x128xf32>
      %134 = tpu.concatenate %124, %130, %127, %133 in 0 : vector<1x128xf32>, vector<1x128xf32>, vector<1x128xf32>, vector<1x128xf32> -> vector<4x128xf32>
      %cst_63 = arith.constant dense<0.000000e+00> : vector<4x8xf32>
      %135 = tpu.matmul %134, %0, %cst_63 {dimension_numbers = #tpu.dot_dimension_numbers<[1], [0], [0], [1], [0, 0, 1, 1], [], []>} : vector<4x128xf32>, vector<128x8xf32>, vector<4x8xf32> -> vector<4x8xf32>
      %cst_64 = arith.constant 3.906250e-03 : f32
      %136 = vector.broadcast %cst_64 : f32 to vector<4x8xf32>
      %137 = arith.mulf %135, %136 : vector<4x8xf32>
      %138 = vector.extract_strided_slice %137 {offsets = [0, 0], sizes = [2, 8], strides = [1, 1]} : vector<4x8xf32> to vector<2x8xf32>
      %139 = vector.extract_strided_slice %137 {offsets = [2, 0], sizes = [2, 8], strides = [1, 1]} : vector<4x8xf32> to vector<2x8xf32>
      %140 = arith.mulf %138, %138 : vector<2x8xf32>
      %141 = arith.subf %139, %140 : vector<2x8xf32>
      %cst_65 = arith.constant 9.99999974E-6 : f32
      %142 = vector.broadcast %cst_65 : f32 to vector<2x8xf32>
      %143 = arith.addf %141, %142 : vector<2x8xf32>
      %144 = math.rsqrt %143 : vector<2x8xf32>
      %cst_66 = arith.constant 0.000000e+00 : f32
      %145 = vector.broadcast %cst_66 : f32 to vector<2x8xf32>
      %146 = arith.subf %145, %138 : vector<2x8xf32>
      %147 = arith.mulf %146, %144 : vector<2x8xf32>
      %148 = tpu.concatenate %144, %147 in 0 : vector<2x8xf32>, vector<2x8xf32> -> vector<4x8xf32>
      %cst_67 = arith.constant dense<0.000000e+00> : vector<4x128xf32>
      %149 = tpu.matmul %148, %1, %cst_67 {dimension_numbers = #tpu.dot_dimension_numbers<[1], [0], [0], [1], [0, 0, 1, 1], [], []>} : vector<4x8xf32>, vector<8x128xf32>, vector<4x128xf32> -> vector<4x128xf32>
      %150 = vector.extract_strided_slice %149 {offsets = [0, 0], sizes = [1, 128], strides = [1, 1]} : vector<4x128xf32> to vector<1x128xf32>
      %151 = vector.broadcast %150 : vector<1x128xf32> to vector<16x128xf32>
      %152 = arith.mulf %122, %151 : vector<16x128xf32>
      %153 = vector.extract_strided_slice %149 {offsets = [2, 0], sizes = [1, 128], strides = [1, 1]} : vector<4x128xf32> to vector<1x128xf32>
      %154 = vector.broadcast %153 : vector<1x128xf32> to vector<16x128xf32>
      %155 = arith.addf %152, %154 : vector<16x128xf32>
      %156 = vector.extract_strided_slice %149 {offsets = [1, 0], sizes = [1, 128], strides = [1, 1]} : vector<4x128xf32> to vector<1x128xf32>
      %157 = vector.broadcast %156 : vector<1x128xf32> to vector<16x128xf32>
      %158 = arith.mulf %128, %157 : vector<16x128xf32>
      %159 = vector.extract_strided_slice %149 {offsets = [3, 0], sizes = [1, 128], strides = [1, 1]} : vector<4x128xf32> to vector<1x128xf32>
      %160 = vector.broadcast %159 : vector<1x128xf32> to vector<16x128xf32>
      %161 = arith.addf %158, %160 : vector<16x128xf32>
      %162 = tpu.concatenate %155, %161 in 0 : vector<16x128xf32>, vector<16x128xf32> -> vector<32x128xf32>
      %163 = arith.addf %arg8, %162 : vector<32x128xf32>
      scf.yield %163 : vector<32x128xf32>
    }
    %c2_i32_19 = arith.constant 2 : i32
    %43 = arith.addf %42, %3 : vector<32x128xf32>
    %c0_i32_20 = arith.constant 0 : i32
    %c2_i32_21 = arith.constant 2 : i32
    %44 = arith.addi %c0_i32_20, %c2_i32_21 : i32
    %c1_i32_22 = arith.constant 1 : i32
    %45 = scf.for %arg7 = %c0_i32_20 to %44 step %c1_i32_22 iter_args(%arg8 = %43) -> (vector<32x128xf32>)  : i32 {
      %c2_i32_34 = arith.constant 2 : i32
      %54 = arith.addi %c2_i32_34, %arg7 : i32
      %c2_i32_35 = arith.constant 2 : i32
      %55 = arith.muli %54, %c2_i32_35 : i32
      %c1_i32_36 = arith.constant 1 : i32
      %56 = tpu.dynamic_rotate %arg8 by %c1_i32_36 dim 0 : vector<32x128xf32>, i32 -> vector<32x128xf32>
      %cst = arith.constant 0.000000e+00 : f32
      %57 = vector.broadcast %cst : f32 to vector<32x128xf32>
      %58 = arith.select %22, %57, %56 : vector<32x128xi1>, vector<32x128xf32>
      %c31_i32 = arith.constant 31 : i32
      %59 = tpu.dynamic_rotate %arg8 by %c31_i32 dim 0 : vector<32x128xf32>, i32 -> vector<32x128xf32>
      %cst_37 = arith.constant 0.000000e+00 : f32
      %60 = vector.broadcast %cst_37 : f32 to vector<32x128xf32>
      %61 = arith.select %40, %60, %59 : vector<32x128xi1>, vector<32x128xf32>
      %62 = tpu.concatenate %58, %arg8, %61 in 1 : vector<32x128xf32>, vector<32x128xf32>, vector<32x128xf32> -> vector<32x384xf32>
      %63 = arith.index_cast %55 : i32 to index
      %c0_38 = arith.constant 0 : index
      %c0_39 = arith.constant 0 : index
      %64 = vector.load %arg3[%63, %c0_38, %c0_39] : memref<16x384x128xf32, #tpu.memory_space<vmem>>, vector<1x384x128xf32>
      %65 = vector.shape_cast %64 : vector<1x384x128xf32> to vector<384x128xf32>
      %cst_40 = arith.constant dense<0.000000e+00> : vector<32x128xf32>
      %66 = tpu.matmul %62, %65, %cst_40 {dimension_numbers = #tpu.dot_dimension_numbers<[1], [0], [0], [1], [0, 0, 1, 1], [], []>} : vector<32x384xf32>, vector<384x128xf32>, vector<32x128xf32> -> vector<32x128xf32>
      %67 = vector.extract_strided_slice %66 {offsets = [0, 0], sizes = [16, 128], strides = [1, 1]} : vector<32x128xf32> to vector<16x128xf32>
      %cst_41 = arith.constant dense<0.000000e+00> : vector<128xf32>
      %68 = vector.multi_reduction <add>, %67, %cst_41 [0] : vector<16x128xf32> to vector<128xf32>
      %69 = vector.shape_cast %68 : vector<128xf32> to vector<1x128xf32>
      %70 = arith.mulf %67, %67 : vector<16x128xf32>
      %cst_42 = arith.constant dense<0.000000e+00> : vector<128xf32>
      %71 = vector.multi_reduction <add>, %70, %cst_42 [0] : vector<16x128xf32> to vector<128xf32>
      %72 = vector.shape_cast %71 : vector<128xf32> to vector<1x128xf32>
      %73 = vector.extract_strided_slice %66 {offsets = [16, 0], sizes = [16, 128], strides = [1, 1]} : vector<32x128xf32> to vector<16x128xf32>
      %cst_43 = arith.constant dense<0.000000e+00> : vector<128xf32>
      %74 = vector.multi_reduction <add>, %73, %cst_43 [0] : vector<16x128xf32> to vector<128xf32>
      %75 = vector.shape_cast %74 : vector<128xf32> to vector<1x128xf32>
      %76 = arith.mulf %73, %73 : vector<16x128xf32>
      %cst_44 = arith.constant dense<0.000000e+00> : vector<128xf32>
      %77 = vector.multi_reduction <add>, %76, %cst_44 [0] : vector<16x128xf32> to vector<128xf32>
      %78 = vector.shape_cast %77 : vector<128xf32> to vector<1x128xf32>
      %79 = tpu.concatenate %69, %75, %72, %78 in 0 : vector<1x128xf32>, vector<1x128xf32>, vector<1x128xf32>, vector<1x128xf32> -> vector<4x128xf32>
      %cst_45 = arith.constant dense<0.000000e+00> : vector<4x8xf32>
      %80 = tpu.matmul %79, %0, %cst_45 {dimension_numbers = #tpu.dot_dimension_numbers<[1], [0], [0], [1], [0, 0, 1, 1], [], []>} : vector<4x128xf32>, vector<128x8xf32>, vector<4x8xf32> -> vector<4x8xf32>
      %cst_46 = arith.constant 3.906250e-03 : f32
      %81 = vector.broadcast %cst_46 : f32 to vector<4x8xf32>
      %82 = arith.mulf %80, %81 : vector<4x8xf32>
      %83 = vector.extract_strided_slice %82 {offsets = [0, 0], sizes = [2, 8], strides = [1, 1]} : vector<4x8xf32> to vector<2x8xf32>
      %84 = vector.extract_strided_slice %82 {offsets = [2, 0], sizes = [2, 8], strides = [1, 1]} : vector<4x8xf32> to vector<2x8xf32>
      %85 = arith.mulf %83, %83 : vector<2x8xf32>
      %86 = arith.subf %84, %85 : vector<2x8xf32>
      %cst_47 = arith.constant 9.99999974E-6 : f32
      %87 = vector.broadcast %cst_47 : f32 to vector<2x8xf32>
      %88 = arith.addf %86, %87 : vector<2x8xf32>
      %89 = math.rsqrt %88 : vector<2x8xf32>
      %cst_48 = arith.constant 0.000000e+00 : f32
      %90 = vector.broadcast %cst_48 : f32 to vector<2x8xf32>
      %91 = arith.subf %90, %83 : vector<2x8xf32>
      %92 = arith.mulf %91, %89 : vector<2x8xf32>
      %93 = tpu.concatenate %89, %92 in 0 : vector<2x8xf32>, vector<2x8xf32> -> vector<4x8xf32>
      %cst_49 = arith.constant dense<0.000000e+00> : vector<4x128xf32>
      %94 = tpu.matmul %93, %1, %cst_49 {dimension_numbers = #tpu.dot_dimension_numbers<[1], [0], [0], [1], [0, 0, 1, 1], [], []>} : vector<4x8xf32>, vector<8x128xf32>, vector<4x128xf32> -> vector<4x128xf32>
      %95 = vector.extract_strided_slice %94 {offsets = [0, 0], sizes = [1, 128], strides = [1, 1]} : vector<4x128xf32> to vector<1x128xf32>
      %96 = vector.broadcast %95 : vector<1x128xf32> to vector<16x128xf32>
      %97 = arith.mulf %67, %96 : vector<16x128xf32>
      %98 = vector.extract_strided_slice %94 {offsets = [2, 0], sizes = [1, 128], strides = [1, 1]} : vector<4x128xf32> to vector<1x128xf32>
      %99 = vector.broadcast %98 : vector<1x128xf32> to vector<16x128xf32>
      %100 = arith.addf %97, %99 : vector<16x128xf32>
      %101 = vector.extract_strided_slice %94 {offsets = [1, 0], sizes = [1, 128], strides = [1, 1]} : vector<4x128xf32> to vector<1x128xf32>
      %102 = vector.broadcast %101 : vector<1x128xf32> to vector<16x128xf32>
      %103 = arith.mulf %73, %102 : vector<16x128xf32>
      %104 = vector.extract_strided_slice %94 {offsets = [3, 0], sizes = [1, 128], strides = [1, 1]} : vector<4x128xf32> to vector<1x128xf32>
      %105 = vector.broadcast %104 : vector<1x128xf32> to vector<16x128xf32>
      %106 = arith.addf %103, %105 : vector<16x128xf32>
      %107 = tpu.concatenate %100, %106 in 0 : vector<16x128xf32>, vector<16x128xf32> -> vector<32x128xf32>
      %cst_50 = arith.constant 0.000000e+00 : f32
      %108 = vector.broadcast %cst_50 : f32 to vector<32x128xf32>
      %109 = arith.maximumf %107, %108 : vector<32x128xf32>
      %c1_i32_51 = arith.constant 1 : i32
      %110 = arith.addi %55, %c1_i32_51 : i32
      %c1_i32_52 = arith.constant 1 : i32
      %111 = tpu.dynamic_rotate %109 by %c1_i32_52 dim 0 : vector<32x128xf32>, i32 -> vector<32x128xf32>
      %cst_53 = arith.constant 0.000000e+00 : f32
      %112 = vector.broadcast %cst_53 : f32 to vector<32x128xf32>
      %113 = arith.select %22, %112, %111 : vector<32x128xi1>, vector<32x128xf32>
      %c31_i32_54 = arith.constant 31 : i32
      %114 = tpu.dynamic_rotate %109 by %c31_i32_54 dim 0 : vector<32x128xf32>, i32 -> vector<32x128xf32>
      %cst_55 = arith.constant 0.000000e+00 : f32
      %115 = vector.broadcast %cst_55 : f32 to vector<32x128xf32>
      %116 = arith.select %40, %115, %114 : vector<32x128xi1>, vector<32x128xf32>
      %117 = tpu.concatenate %113, %109, %116 in 1 : vector<32x128xf32>, vector<32x128xf32>, vector<32x128xf32> -> vector<32x384xf32>
      %118 = arith.index_cast %110 : i32 to index
      %c0_56 = arith.constant 0 : index
      %c0_57 = arith.constant 0 : index
      %119 = vector.load %arg3[%118, %c0_56, %c0_57] : memref<16x384x128xf32, #tpu.memory_space<vmem>>, vector<1x384x128xf32>
      %120 = vector.shape_cast %119 : vector<1x384x128xf32> to vector<384x128xf32>
      %cst_58 = arith.constant dense<0.000000e+00> : vector<32x128xf32>
      %121 = tpu.matmul %117, %120, %cst_58 {dimension_numbers = #tpu.dot_dimension_numbers<[1], [0], [0], [1], [0, 0, 1, 1], [], []>} : vector<32x384xf32>, vector<384x128xf32>, vector<32x128xf32> -> vector<32x128xf32>
      %122 = vector.extract_strided_slice %121 {offsets = [0, 0], sizes = [16, 128], strides = [1, 1]} : vector<32x128xf32> to vector<16x128xf32>
      %cst_59 = arith.constant dense<0.000000e+00> : vector<128xf32>
      %123 = vector.multi_reduction <add>, %122, %cst_59 [0] : vector<16x128xf32> to vector<128xf32>
      %124 = vector.shape_cast %123 : vector<128xf32> to vector<1x128xf32>
      %125 = arith.mulf %122, %122 : vector<16x128xf32>
      %cst_60 = arith.constant dense<0.000000e+00> : vector<128xf32>
      %126 = vector.multi_reduction <add>, %125, %cst_60 [0] : vector<16x128xf32> to vector<128xf32>
      %127 = vector.shape_cast %126 : vector<128xf32> to vector<1x128xf32>
      %128 = vector.extract_strided_slice %121 {offsets = [16, 0], sizes = [16, 128], strides = [1, 1]} : vector<32x128xf32> to vector<16x128xf32>
      %cst_61 = arith.constant dense<0.000000e+00> : vector<128xf32>
      %129 = vector.multi_reduction <add>, %128, %cst_61 [0] : vector<16x128xf32> to vector<128xf32>
      %130 = vector.shape_cast %129 : vector<128xf32> to vector<1x128xf32>
      %131 = arith.mulf %128, %128 : vector<16x128xf32>
      %cst_62 = arith.constant dense<0.000000e+00> : vector<128xf32>
      %132 = vector.multi_reduction <add>, %131, %cst_62 [0] : vector<16x128xf32> to vector<128xf32>
      %133 = vector.shape_cast %132 : vector<128xf32> to vector<1x128xf32>
      %134 = tpu.concatenate %124, %130, %127, %133 in 0 : vector<1x128xf32>, vector<1x128xf32>, vector<1x128xf32>, vector<1x128xf32> -> vector<4x128xf32>
      %cst_63 = arith.constant dense<0.000000e+00> : vector<4x8xf32>
      %135 = tpu.matmul %134, %0, %cst_63 {dimension_numbers = #tpu.dot_dimension_numbers<[1], [0], [0], [1], [0, 0, 1, 1], [], []>} : vector<4x128xf32>, vector<128x8xf32>, vector<4x8xf32> -> vector<4x8xf32>
      %cst_64 = arith.constant 3.906250e-03 : f32
      %136 = vector.broadcast %cst_64 : f32 to vector<4x8xf32>
      %137 = arith.mulf %135, %136 : vector<4x8xf32>
      %138 = vector.extract_strided_slice %137 {offsets = [0, 0], sizes = [2, 8], strides = [1, 1]} : vector<4x8xf32> to vector<2x8xf32>
      %139 = vector.extract_strided_slice %137 {offsets = [2, 0], sizes = [2, 8], strides = [1, 1]} : vector<4x8xf32> to vector<2x8xf32>
      %140 = arith.mulf %138, %138 : vector<2x8xf32>
      %141 = arith.subf %139, %140 : vector<2x8xf32>
      %cst_65 = arith.constant 9.99999974E-6 : f32
      %142 = vector.broadcast %cst_65 : f32 to vector<2x8xf32>
      %143 = arith.addf %141, %142 : vector<2x8xf32>
      %144 = math.rsqrt %143 : vector<2x8xf32>
      %cst_66 = arith.constant 0.000000e+00 : f32
      %145 = vector.broadcast %cst_66 : f32 to vector<2x8xf32>
      %146 = arith.subf %145, %138 : vector<2x8xf32>
      %147 = arith.mulf %146, %144 : vector<2x8xf32>
      %148 = tpu.concatenate %144, %147 in 0 : vector<2x8xf32>, vector<2x8xf32> -> vector<4x8xf32>
      %cst_67 = arith.constant dense<0.000000e+00> : vector<4x128xf32>
      %149 = tpu.matmul %148, %1, %cst_67 {dimension_numbers = #tpu.dot_dimension_numbers<[1], [0], [0], [1], [0, 0, 1, 1], [], []>} : vector<4x8xf32>, vector<8x128xf32>, vector<4x128xf32> -> vector<4x128xf32>
      %150 = vector.extract_strided_slice %149 {offsets = [0, 0], sizes = [1, 128], strides = [1, 1]} : vector<4x128xf32> to vector<1x128xf32>
      %151 = vector.broadcast %150 : vector<1x128xf32> to vector<16x128xf32>
      %152 = arith.mulf %122, %151 : vector<16x128xf32>
      %153 = vector.extract_strided_slice %149 {offsets = [2, 0], sizes = [1, 128], strides = [1, 1]} : vector<4x128xf32> to vector<1x128xf32>
      %154 = vector.broadcast %153 : vector<1x128xf32> to vector<16x128xf32>
      %155 = arith.addf %152, %154 : vector<16x128xf32>
      %156 = vector.extract_strided_slice %149 {offsets = [1, 0], sizes = [1, 128], strides = [1, 1]} : vector<4x128xf32> to vector<1x128xf32>
      %157 = vector.broadcast %156 : vector<1x128xf32> to vector<16x128xf32>
      %158 = arith.mulf %128, %157 : vector<16x128xf32>
      %159 = vector.extract_strided_slice %149 {offsets = [3, 0], sizes = [1, 128], strides = [1, 1]} : vector<4x128xf32> to vector<1x128xf32>
      %160 = vector.broadcast %159 : vector<1x128xf32> to vector<16x128xf32>
      %161 = arith.addf %158, %160 : vector<16x128xf32>
      %162 = tpu.concatenate %155, %161 in 0 : vector<16x128xf32>, vector<16x128xf32> -> vector<32x128xf32>
      %163 = arith.addf %arg8, %162 : vector<32x128xf32>
      scf.yield %163 : vector<32x128xf32>
    }
    %c2_i32_23 = arith.constant 2 : i32
    %46 = arith.addf %45, %3 : vector<32x128xf32>
    %c0_i32_24 = arith.constant 0 : i32
    %c2_i32_25 = arith.constant 2 : i32
    %47 = arith.addi %c0_i32_24, %c2_i32_25 : i32
    %c1_i32_26 = arith.constant 1 : i32
    %48 = scf.for %arg7 = %c0_i32_24 to %47 step %c1_i32_26 iter_args(%arg8 = %46) -> (vector<32x128xf32>)  : i32 {
      %c4_i32 = arith.constant 4 : i32
      %54 = arith.addi %c4_i32, %arg7 : i32
      %c2_i32_34 = arith.constant 2 : i32
      %55 = arith.muli %54, %c2_i32_34 : i32
      %c1_i32_35 = arith.constant 1 : i32
      %56 = tpu.dynamic_rotate %arg8 by %c1_i32_35 dim 0 : vector<32x128xf32>, i32 -> vector<32x128xf32>
      %cst = arith.constant 0.000000e+00 : f32
      %57 = vector.broadcast %cst : f32 to vector<32x128xf32>
      %58 = arith.select %22, %57, %56 : vector<32x128xi1>, vector<32x128xf32>
      %c31_i32 = arith.constant 31 : i32
      %59 = tpu.dynamic_rotate %arg8 by %c31_i32 dim 0 : vector<32x128xf32>, i32 -> vector<32x128xf32>
      %cst_36 = arith.constant 0.000000e+00 : f32
      %60 = vector.broadcast %cst_36 : f32 to vector<32x128xf32>
      %61 = arith.select %40, %60, %59 : vector<32x128xi1>, vector<32x128xf32>
      %62 = tpu.concatenate %58, %arg8, %61 in 1 : vector<32x128xf32>, vector<32x128xf32>, vector<32x128xf32> -> vector<32x384xf32>
      %63 = arith.index_cast %55 : i32 to index
      %c0_37 = arith.constant 0 : index
      %c0_38 = arith.constant 0 : index
      %64 = vector.load %arg3[%63, %c0_37, %c0_38] : memref<16x384x128xf32, #tpu.memory_space<vmem>>, vector<1x384x128xf32>
      %65 = vector.shape_cast %64 : vector<1x384x128xf32> to vector<384x128xf32>
      %cst_39 = arith.constant dense<0.000000e+00> : vector<32x128xf32>
      %66 = tpu.matmul %62, %65, %cst_39 {dimension_numbers = #tpu.dot_dimension_numbers<[1], [0], [0], [1], [0, 0, 1, 1], [], []>} : vector<32x384xf32>, vector<384x128xf32>, vector<32x128xf32> -> vector<32x128xf32>
      %67 = vector.extract_strided_slice %66 {offsets = [0, 0], sizes = [16, 128], strides = [1, 1]} : vector<32x128xf32> to vector<16x128xf32>
      %cst_40 = arith.constant dense<0.000000e+00> : vector<128xf32>
      %68 = vector.multi_reduction <add>, %67, %cst_40 [0] : vector<16x128xf32> to vector<128xf32>
      %69 = vector.shape_cast %68 : vector<128xf32> to vector<1x128xf32>
      %70 = arith.mulf %67, %67 : vector<16x128xf32>
      %cst_41 = arith.constant dense<0.000000e+00> : vector<128xf32>
      %71 = vector.multi_reduction <add>, %70, %cst_41 [0] : vector<16x128xf32> to vector<128xf32>
      %72 = vector.shape_cast %71 : vector<128xf32> to vector<1x128xf32>
      %73 = vector.extract_strided_slice %66 {offsets = [16, 0], sizes = [16, 128], strides = [1, 1]} : vector<32x128xf32> to vector<16x128xf32>
      %cst_42 = arith.constant dense<0.000000e+00> : vector<128xf32>
      %74 = vector.multi_reduction <add>, %73, %cst_42 [0] : vector<16x128xf32> to vector<128xf32>
      %75 = vector.shape_cast %74 : vector<128xf32> to vector<1x128xf32>
      %76 = arith.mulf %73, %73 : vector<16x128xf32>
      %cst_43 = arith.constant dense<0.000000e+00> : vector<128xf32>
      %77 = vector.multi_reduction <add>, %76, %cst_43 [0] : vector<16x128xf32> to vector<128xf32>
      %78 = vector.shape_cast %77 : vector<128xf32> to vector<1x128xf32>
      %79 = tpu.concatenate %69, %75, %72, %78 in 0 : vector<1x128xf32>, vector<1x128xf32>, vector<1x128xf32>, vector<1x128xf32> -> vector<4x128xf32>
      %cst_44 = arith.constant dense<0.000000e+00> : vector<4x8xf32>
      %80 = tpu.matmul %79, %0, %cst_44 {dimension_numbers = #tpu.dot_dimension_numbers<[1], [0], [0], [1], [0, 0, 1, 1], [], []>} : vector<4x128xf32>, vector<128x8xf32>, vector<4x8xf32> -> vector<4x8xf32>
      %cst_45 = arith.constant 3.906250e-03 : f32
      %81 = vector.broadcast %cst_45 : f32 to vector<4x8xf32>
      %82 = arith.mulf %80, %81 : vector<4x8xf32>
      %83 = vector.extract_strided_slice %82 {offsets = [0, 0], sizes = [2, 8], strides = [1, 1]} : vector<4x8xf32> to vector<2x8xf32>
      %84 = vector.extract_strided_slice %82 {offsets = [2, 0], sizes = [2, 8], strides = [1, 1]} : vector<4x8xf32> to vector<2x8xf32>
      %85 = arith.mulf %83, %83 : vector<2x8xf32>
      %86 = arith.subf %84, %85 : vector<2x8xf32>
      %cst_46 = arith.constant 9.99999974E-6 : f32
      %87 = vector.broadcast %cst_46 : f32 to vector<2x8xf32>
      %88 = arith.addf %86, %87 : vector<2x8xf32>
      %89 = math.rsqrt %88 : vector<2x8xf32>
      %cst_47 = arith.constant 0.000000e+00 : f32
      %90 = vector.broadcast %cst_47 : f32 to vector<2x8xf32>
      %91 = arith.subf %90, %83 : vector<2x8xf32>
      %92 = arith.mulf %91, %89 : vector<2x8xf32>
      %93 = tpu.concatenate %89, %92 in 0 : vector<2x8xf32>, vector<2x8xf32> -> vector<4x8xf32>
      %cst_48 = arith.constant dense<0.000000e+00> : vector<4x128xf32>
      %94 = tpu.matmul %93, %1, %cst_48 {dimension_numbers = #tpu.dot_dimension_numbers<[1], [0], [0], [1], [0, 0, 1, 1], [], []>} : vector<4x8xf32>, vector<8x128xf32>, vector<4x128xf32> -> vector<4x128xf32>
      %95 = vector.extract_strided_slice %94 {offsets = [0, 0], sizes = [1, 128], strides = [1, 1]} : vector<4x128xf32> to vector<1x128xf32>
      %96 = vector.broadcast %95 : vector<1x128xf32> to vector<16x128xf32>
      %97 = arith.mulf %67, %96 : vector<16x128xf32>
      %98 = vector.extract_strided_slice %94 {offsets = [2, 0], sizes = [1, 128], strides = [1, 1]} : vector<4x128xf32> to vector<1x128xf32>
      %99 = vector.broadcast %98 : vector<1x128xf32> to vector<16x128xf32>
      %100 = arith.addf %97, %99 : vector<16x128xf32>
      %101 = vector.extract_strided_slice %94 {offsets = [1, 0], sizes = [1, 128], strides = [1, 1]} : vector<4x128xf32> to vector<1x128xf32>
      %102 = vector.broadcast %101 : vector<1x128xf32> to vector<16x128xf32>
      %103 = arith.mulf %73, %102 : vector<16x128xf32>
      %104 = vector.extract_strided_slice %94 {offsets = [3, 0], sizes = [1, 128], strides = [1, 1]} : vector<4x128xf32> to vector<1x128xf32>
      %105 = vector.broadcast %104 : vector<1x128xf32> to vector<16x128xf32>
      %106 = arith.addf %103, %105 : vector<16x128xf32>
      %107 = tpu.concatenate %100, %106 in 0 : vector<16x128xf32>, vector<16x128xf32> -> vector<32x128xf32>
      %cst_49 = arith.constant 0.000000e+00 : f32
      %108 = vector.broadcast %cst_49 : f32 to vector<32x128xf32>
      %109 = arith.maximumf %107, %108 : vector<32x128xf32>
      %c1_i32_50 = arith.constant 1 : i32
      %110 = arith.addi %55, %c1_i32_50 : i32
      %c1_i32_51 = arith.constant 1 : i32
      %111 = tpu.dynamic_rotate %109 by %c1_i32_51 dim 0 : vector<32x128xf32>, i32 -> vector<32x128xf32>
      %cst_52 = arith.constant 0.000000e+00 : f32
      %112 = vector.broadcast %cst_52 : f32 to vector<32x128xf32>
      %113 = arith.select %22, %112, %111 : vector<32x128xi1>, vector<32x128xf32>
      %c31_i32_53 = arith.constant 31 : i32
      %114 = tpu.dynamic_rotate %109 by %c31_i32_53 dim 0 : vector<32x128xf32>, i32 -> vector<32x128xf32>
      %cst_54 = arith.constant 0.000000e+00 : f32
      %115 = vector.broadcast %cst_54 : f32 to vector<32x128xf32>
      %116 = arith.select %40, %115, %114 : vector<32x128xi1>, vector<32x128xf32>
      %117 = tpu.concatenate %113, %109, %116 in 1 : vector<32x128xf32>, vector<32x128xf32>, vector<32x128xf32> -> vector<32x384xf32>
      %118 = arith.index_cast %110 : i32 to index
      %c0_55 = arith.constant 0 : index
      %c0_56 = arith.constant 0 : index
      %119 = vector.load %arg3[%118, %c0_55, %c0_56] : memref<16x384x128xf32, #tpu.memory_space<vmem>>, vector<1x384x128xf32>
      %120 = vector.shape_cast %119 : vector<1x384x128xf32> to vector<384x128xf32>
      %cst_57 = arith.constant dense<0.000000e+00> : vector<32x128xf32>
      %121 = tpu.matmul %117, %120, %cst_57 {dimension_numbers = #tpu.dot_dimension_numbers<[1], [0], [0], [1], [0, 0, 1, 1], [], []>} : vector<32x384xf32>, vector<384x128xf32>, vector<32x128xf32> -> vector<32x128xf32>
      %122 = vector.extract_strided_slice %121 {offsets = [0, 0], sizes = [16, 128], strides = [1, 1]} : vector<32x128xf32> to vector<16x128xf32>
      %cst_58 = arith.constant dense<0.000000e+00> : vector<128xf32>
      %123 = vector.multi_reduction <add>, %122, %cst_58 [0] : vector<16x128xf32> to vector<128xf32>
      %124 = vector.shape_cast %123 : vector<128xf32> to vector<1x128xf32>
      %125 = arith.mulf %122, %122 : vector<16x128xf32>
      %cst_59 = arith.constant dense<0.000000e+00> : vector<128xf32>
      %126 = vector.multi_reduction <add>, %125, %cst_59 [0] : vector<16x128xf32> to vector<128xf32>
      %127 = vector.shape_cast %126 : vector<128xf32> to vector<1x128xf32>
      %128 = vector.extract_strided_slice %121 {offsets = [16, 0], sizes = [16, 128], strides = [1, 1]} : vector<32x128xf32> to vector<16x128xf32>
      %cst_60 = arith.constant dense<0.000000e+00> : vector<128xf32>
      %129 = vector.multi_reduction <add>, %128, %cst_60 [0] : vector<16x128xf32> to vector<128xf32>
      %130 = vector.shape_cast %129 : vector<128xf32> to vector<1x128xf32>
      %131 = arith.mulf %128, %128 : vector<16x128xf32>
      %cst_61 = arith.constant dense<0.000000e+00> : vector<128xf32>
      %132 = vector.multi_reduction <add>, %131, %cst_61 [0] : vector<16x128xf32> to vector<128xf32>
      %133 = vector.shape_cast %132 : vector<128xf32> to vector<1x128xf32>
      %134 = tpu.concatenate %124, %130, %127, %133 in 0 : vector<1x128xf32>, vector<1x128xf32>, vector<1x128xf32>, vector<1x128xf32> -> vector<4x128xf32>
      %cst_62 = arith.constant dense<0.000000e+00> : vector<4x8xf32>
      %135 = tpu.matmul %134, %0, %cst_62 {dimension_numbers = #tpu.dot_dimension_numbers<[1], [0], [0], [1], [0, 0, 1, 1], [], []>} : vector<4x128xf32>, vector<128x8xf32>, vector<4x8xf32> -> vector<4x8xf32>
      %cst_63 = arith.constant 3.906250e-03 : f32
      %136 = vector.broadcast %cst_63 : f32 to vector<4x8xf32>
      %137 = arith.mulf %135, %136 : vector<4x8xf32>
      %138 = vector.extract_strided_slice %137 {offsets = [0, 0], sizes = [2, 8], strides = [1, 1]} : vector<4x8xf32> to vector<2x8xf32>
      %139 = vector.extract_strided_slice %137 {offsets = [2, 0], sizes = [2, 8], strides = [1, 1]} : vector<4x8xf32> to vector<2x8xf32>
      %140 = arith.mulf %138, %138 : vector<2x8xf32>
      %141 = arith.subf %139, %140 : vector<2x8xf32>
      %cst_64 = arith.constant 9.99999974E-6 : f32
      %142 = vector.broadcast %cst_64 : f32 to vector<2x8xf32>
      %143 = arith.addf %141, %142 : vector<2x8xf32>
      %144 = math.rsqrt %143 : vector<2x8xf32>
      %cst_65 = arith.constant 0.000000e+00 : f32
      %145 = vector.broadcast %cst_65 : f32 to vector<2x8xf32>
      %146 = arith.subf %145, %138 : vector<2x8xf32>
      %147 = arith.mulf %146, %144 : vector<2x8xf32>
      %148 = tpu.concatenate %144, %147 in 0 : vector<2x8xf32>, vector<2x8xf32> -> vector<4x8xf32>
      %cst_66 = arith.constant dense<0.000000e+00> : vector<4x128xf32>
      %149 = tpu.matmul %148, %1, %cst_66 {dimension_numbers = #tpu.dot_dimension_numbers<[1], [0], [0], [1], [0, 0, 1, 1], [], []>} : vector<4x8xf32>, vector<8x128xf32>, vector<4x128xf32> -> vector<4x128xf32>
      %150 = vector.extract_strided_slice %149 {offsets = [0, 0], sizes = [1, 128], strides = [1, 1]} : vector<4x128xf32> to vector<1x128xf32>
      %151 = vector.broadcast %150 : vector<1x128xf32> to vector<16x128xf32>
      %152 = arith.mulf %122, %151 : vector<16x128xf32>
      %153 = vector.extract_strided_slice %149 {offsets = [2, 0], sizes = [1, 128], strides = [1, 1]} : vector<4x128xf32> to vector<1x128xf32>
      %154 = vector.broadcast %153 : vector<1x128xf32> to vector<16x128xf32>
      %155 = arith.addf %152, %154 : vector<16x128xf32>
      %156 = vector.extract_strided_slice %149 {offsets = [1, 0], sizes = [1, 128], strides = [1, 1]} : vector<4x128xf32> to vector<1x128xf32>
      %157 = vector.broadcast %156 : vector<1x128xf32> to vector<16x128xf32>
      %158 = arith.mulf %128, %157 : vector<16x128xf32>
      %159 = vector.extract_strided_slice %149 {offsets = [3, 0], sizes = [1, 128], strides = [1, 1]} : vector<4x128xf32> to vector<1x128xf32>
      %160 = vector.broadcast %159 : vector<1x128xf32> to vector<16x128xf32>
      %161 = arith.addf %158, %160 : vector<16x128xf32>
      %162 = tpu.concatenate %155, %161 in 0 : vector<16x128xf32>, vector<16x128xf32> -> vector<32x128xf32>
      %163 = arith.addf %arg8, %162 : vector<32x128xf32>
      scf.yield %163 : vector<32x128xf32>
    }
    %c2_i32_27 = arith.constant 2 : i32
    %49 = arith.addf %48, %3 : vector<32x128xf32>
    %c0_i32_28 = arith.constant 0 : i32
    %c2_i32_29 = arith.constant 2 : i32
    %50 = arith.addi %c0_i32_28, %c2_i32_29 : i32
    %c1_i32_30 = arith.constant 1 : i32
    %51 = scf.for %arg7 = %c0_i32_28 to %50 step %c1_i32_30 iter_args(%arg8 = %49) -> (vector<32x128xf32>)  : i32 {
      %c6_i32 = arith.constant 6 : i32
      %54 = arith.addi %c6_i32, %arg7 : i32
      %c2_i32_34 = arith.constant 2 : i32
      %55 = arith.muli %54, %c2_i32_34 : i32
      %c1_i32_35 = arith.constant 1 : i32
      %56 = tpu.dynamic_rotate %arg8 by %c1_i32_35 dim 0 : vector<32x128xf32>, i32 -> vector<32x128xf32>
      %cst = arith.constant 0.000000e+00 : f32
      %57 = vector.broadcast %cst : f32 to vector<32x128xf32>
      %58 = arith.select %22, %57, %56 : vector<32x128xi1>, vector<32x128xf32>
      %c31_i32 = arith.constant 31 : i32
      %59 = tpu.dynamic_rotate %arg8 by %c31_i32 dim 0 : vector<32x128xf32>, i32 -> vector<32x128xf32>
      %cst_36 = arith.constant 0.000000e+00 : f32
      %60 = vector.broadcast %cst_36 : f32 to vector<32x128xf32>
      %61 = arith.select %40, %60, %59 : vector<32x128xi1>, vector<32x128xf32>
      %62 = tpu.concatenate %58, %arg8, %61 in 1 : vector<32x128xf32>, vector<32x128xf32>, vector<32x128xf32> -> vector<32x384xf32>
      %63 = arith.index_cast %55 : i32 to index
      %c0_37 = arith.constant 0 : index
      %c0_38 = arith.constant 0 : index
      %64 = vector.load %arg3[%63, %c0_37, %c0_38] : memref<16x384x128xf32, #tpu.memory_space<vmem>>, vector<1x384x128xf32>
      %65 = vector.shape_cast %64 : vector<1x384x128xf32> to vector<384x128xf32>
      %cst_39 = arith.constant dense<0.000000e+00> : vector<32x128xf32>
      %66 = tpu.matmul %62, %65, %cst_39 {dimension_numbers = #tpu.dot_dimension_numbers<[1], [0], [0], [1], [0, 0, 1, 1], [], []>} : vector<32x384xf32>, vector<384x128xf32>, vector<32x128xf32> -> vector<32x128xf32>
      %67 = vector.extract_strided_slice %66 {offsets = [0, 0], sizes = [16, 128], strides = [1, 1]} : vector<32x128xf32> to vector<16x128xf32>
      %cst_40 = arith.constant dense<0.000000e+00> : vector<128xf32>
      %68 = vector.multi_reduction <add>, %67, %cst_40 [0] : vector<16x128xf32> to vector<128xf32>
      %69 = vector.shape_cast %68 : vector<128xf32> to vector<1x128xf32>
      %70 = arith.mulf %67, %67 : vector<16x128xf32>
      %cst_41 = arith.constant dense<0.000000e+00> : vector<128xf32>
      %71 = vector.multi_reduction <add>, %70, %cst_41 [0] : vector<16x128xf32> to vector<128xf32>
      %72 = vector.shape_cast %71 : vector<128xf32> to vector<1x128xf32>
      %73 = vector.extract_strided_slice %66 {offsets = [16, 0], sizes = [16, 128], strides = [1, 1]} : vector<32x128xf32> to vector<16x128xf32>
      %cst_42 = arith.constant dense<0.000000e+00> : vector<128xf32>
      %74 = vector.multi_reduction <add>, %73, %cst_42 [0] : vector<16x128xf32> to vector<128xf32>
      %75 = vector.shape_cast %74 : vector<128xf32> to vector<1x128xf32>
      %76 = arith.mulf %73, %73 : vector<16x128xf32>
      %cst_43 = arith.constant dense<0.000000e+00> : vector<128xf32>
      %77 = vector.multi_reduction <add>, %76, %cst_43 [0] : vector<16x128xf32> to vector<128xf32>
      %78 = vector.shape_cast %77 : vector<128xf32> to vector<1x128xf32>
      %79 = tpu.concatenate %69, %75, %72, %78 in 0 : vector<1x128xf32>, vector<1x128xf32>, vector<1x128xf32>, vector<1x128xf32> -> vector<4x128xf32>
      %cst_44 = arith.constant dense<0.000000e+00> : vector<4x8xf32>
      %80 = tpu.matmul %79, %0, %cst_44 {dimension_numbers = #tpu.dot_dimension_numbers<[1], [0], [0], [1], [0, 0, 1, 1], [], []>} : vector<4x128xf32>, vector<128x8xf32>, vector<4x8xf32> -> vector<4x8xf32>
      %cst_45 = arith.constant 3.906250e-03 : f32
      %81 = vector.broadcast %cst_45 : f32 to vector<4x8xf32>
      %82 = arith.mulf %80, %81 : vector<4x8xf32>
      %83 = vector.extract_strided_slice %82 {offsets = [0, 0], sizes = [2, 8], strides = [1, 1]} : vector<4x8xf32> to vector<2x8xf32>
      %84 = vector.extract_strided_slice %82 {offsets = [2, 0], sizes = [2, 8], strides = [1, 1]} : vector<4x8xf32> to vector<2x8xf32>
      %85 = arith.mulf %83, %83 : vector<2x8xf32>
      %86 = arith.subf %84, %85 : vector<2x8xf32>
      %cst_46 = arith.constant 9.99999974E-6 : f32
      %87 = vector.broadcast %cst_46 : f32 to vector<2x8xf32>
      %88 = arith.addf %86, %87 : vector<2x8xf32>
      %89 = math.rsqrt %88 : vector<2x8xf32>
      %cst_47 = arith.constant 0.000000e+00 : f32
      %90 = vector.broadcast %cst_47 : f32 to vector<2x8xf32>
      %91 = arith.subf %90, %83 : vector<2x8xf32>
      %92 = arith.mulf %91, %89 : vector<2x8xf32>
      %93 = tpu.concatenate %89, %92 in 0 : vector<2x8xf32>, vector<2x8xf32> -> vector<4x8xf32>
      %cst_48 = arith.constant dense<0.000000e+00> : vector<4x128xf32>
      %94 = tpu.matmul %93, %1, %cst_48 {dimension_numbers = #tpu.dot_dimension_numbers<[1], [0], [0], [1], [0, 0, 1, 1], [], []>} : vector<4x8xf32>, vector<8x128xf32>, vector<4x128xf32> -> vector<4x128xf32>
      %95 = vector.extract_strided_slice %94 {offsets = [0, 0], sizes = [1, 128], strides = [1, 1]} : vector<4x128xf32> to vector<1x128xf32>
      %96 = vector.broadcast %95 : vector<1x128xf32> to vector<16x128xf32>
      %97 = arith.mulf %67, %96 : vector<16x128xf32>
      %98 = vector.extract_strided_slice %94 {offsets = [2, 0], sizes = [1, 128], strides = [1, 1]} : vector<4x128xf32> to vector<1x128xf32>
      %99 = vector.broadcast %98 : vector<1x128xf32> to vector<16x128xf32>
      %100 = arith.addf %97, %99 : vector<16x128xf32>
      %101 = vector.extract_strided_slice %94 {offsets = [1, 0], sizes = [1, 128], strides = [1, 1]} : vector<4x128xf32> to vector<1x128xf32>
      %102 = vector.broadcast %101 : vector<1x128xf32> to vector<16x128xf32>
      %103 = arith.mulf %73, %102 : vector<16x128xf32>
      %104 = vector.extract_strided_slice %94 {offsets = [3, 0], sizes = [1, 128], strides = [1, 1]} : vector<4x128xf32> to vector<1x128xf32>
      %105 = vector.broadcast %104 : vector<1x128xf32> to vector<16x128xf32>
      %106 = arith.addf %103, %105 : vector<16x128xf32>
      %107 = tpu.concatenate %100, %106 in 0 : vector<16x128xf32>, vector<16x128xf32> -> vector<32x128xf32>
      %cst_49 = arith.constant 0.000000e+00 : f32
      %108 = vector.broadcast %cst_49 : f32 to vector<32x128xf32>
      %109 = arith.maximumf %107, %108 : vector<32x128xf32>
      %c1_i32_50 = arith.constant 1 : i32
      %110 = arith.addi %55, %c1_i32_50 : i32
      %c1_i32_51 = arith.constant 1 : i32
      %111 = tpu.dynamic_rotate %109 by %c1_i32_51 dim 0 : vector<32x128xf32>, i32 -> vector<32x128xf32>
      %cst_52 = arith.constant 0.000000e+00 : f32
      %112 = vector.broadcast %cst_52 : f32 to vector<32x128xf32>
      %113 = arith.select %22, %112, %111 : vector<32x128xi1>, vector<32x128xf32>
      %c31_i32_53 = arith.constant 31 : i32
      %114 = tpu.dynamic_rotate %109 by %c31_i32_53 dim 0 : vector<32x128xf32>, i32 -> vector<32x128xf32>
      %cst_54 = arith.constant 0.000000e+00 : f32
      %115 = vector.broadcast %cst_54 : f32 to vector<32x128xf32>
      %116 = arith.select %40, %115, %114 : vector<32x128xi1>, vector<32x128xf32>
      %117 = tpu.concatenate %113, %109, %116 in 1 : vector<32x128xf32>, vector<32x128xf32>, vector<32x128xf32> -> vector<32x384xf32>
      %118 = arith.index_cast %110 : i32 to index
      %c0_55 = arith.constant 0 : index
      %c0_56 = arith.constant 0 : index
      %119 = vector.load %arg3[%118, %c0_55, %c0_56] : memref<16x384x128xf32, #tpu.memory_space<vmem>>, vector<1x384x128xf32>
      %120 = vector.shape_cast %119 : vector<1x384x128xf32> to vector<384x128xf32>
      %cst_57 = arith.constant dense<0.000000e+00> : vector<32x128xf32>
      %121 = tpu.matmul %117, %120, %cst_57 {dimension_numbers = #tpu.dot_dimension_numbers<[1], [0], [0], [1], [0, 0, 1, 1], [], []>} : vector<32x384xf32>, vector<384x128xf32>, vector<32x128xf32> -> vector<32x128xf32>
      %122 = vector.extract_strided_slice %121 {offsets = [0, 0], sizes = [16, 128], strides = [1, 1]} : vector<32x128xf32> to vector<16x128xf32>
      %cst_58 = arith.constant dense<0.000000e+00> : vector<128xf32>
      %123 = vector.multi_reduction <add>, %122, %cst_58 [0] : vector<16x128xf32> to vector<128xf32>
      %124 = vector.shape_cast %123 : vector<128xf32> to vector<1x128xf32>
      %125 = arith.mulf %122, %122 : vector<16x128xf32>
      %cst_59 = arith.constant dense<0.000000e+00> : vector<128xf32>
      %126 = vector.multi_reduction <add>, %125, %cst_59 [0] : vector<16x128xf32> to vector<128xf32>
      %127 = vector.shape_cast %126 : vector<128xf32> to vector<1x128xf32>
      %128 = vector.extract_strided_slice %121 {offsets = [16, 0], sizes = [16, 128], strides = [1, 1]} : vector<32x128xf32> to vector<16x128xf32>
      %cst_60 = arith.constant dense<0.000000e+00> : vector<128xf32>
      %129 = vector.multi_reduction <add>, %128, %cst_60 [0] : vector<16x128xf32> to vector<128xf32>
      %130 = vector.shape_cast %129 : vector<128xf32> to vector<1x128xf32>
      %131 = arith.mulf %128, %128 : vector<16x128xf32>
      %cst_61 = arith.constant dense<0.000000e+00> : vector<128xf32>
      %132 = vector.multi_reduction <add>, %131, %cst_61 [0] : vector<16x128xf32> to vector<128xf32>
      %133 = vector.shape_cast %132 : vector<128xf32> to vector<1x128xf32>
      %134 = tpu.concatenate %124, %130, %127, %133 in 0 : vector<1x128xf32>, vector<1x128xf32>, vector<1x128xf32>, vector<1x128xf32> -> vector<4x128xf32>
      %cst_62 = arith.constant dense<0.000000e+00> : vector<4x8xf32>
      %135 = tpu.matmul %134, %0, %cst_62 {dimension_numbers = #tpu.dot_dimension_numbers<[1], [0], [0], [1], [0, 0, 1, 1], [], []>} : vector<4x128xf32>, vector<128x8xf32>, vector<4x8xf32> -> vector<4x8xf32>
      %cst_63 = arith.constant 3.906250e-03 : f32
      %136 = vector.broadcast %cst_63 : f32 to vector<4x8xf32>
      %137 = arith.mulf %135, %136 : vector<4x8xf32>
      %138 = vector.extract_strided_slice %137 {offsets = [0, 0], sizes = [2, 8], strides = [1, 1]} : vector<4x8xf32> to vector<2x8xf32>
      %139 = vector.extract_strided_slice %137 {offsets = [2, 0], sizes = [2, 8], strides = [1, 1]} : vector<4x8xf32> to vector<2x8xf32>
      %140 = arith.mulf %138, %138 : vector<2x8xf32>
      %141 = arith.subf %139, %140 : vector<2x8xf32>
      %cst_64 = arith.constant 9.99999974E-6 : f32
      %142 = vector.broadcast %cst_64 : f32 to vector<2x8xf32>
      %143 = arith.addf %141, %142 : vector<2x8xf32>
      %144 = math.rsqrt %143 : vector<2x8xf32>
      %cst_65 = arith.constant 0.000000e+00 : f32
      %145 = vector.broadcast %cst_65 : f32 to vector<2x8xf32>
      %146 = arith.subf %145, %138 : vector<2x8xf32>
      %147 = arith.mulf %146, %144 : vector<2x8xf32>
      %148 = tpu.concatenate %144, %147 in 0 : vector<2x8xf32>, vector<2x8xf32> -> vector<4x8xf32>
      %cst_66 = arith.constant dense<0.000000e+00> : vector<4x128xf32>
      %149 = tpu.matmul %148, %1, %cst_66 {dimension_numbers = #tpu.dot_dimension_numbers<[1], [0], [0], [1], [0, 0, 1, 1], [], []>} : vector<4x8xf32>, vector<8x128xf32>, vector<4x128xf32> -> vector<4x128xf32>
      %150 = vector.extract_strided_slice %149 {offsets = [0, 0], sizes = [1, 128], strides = [1, 1]} : vector<4x128xf32> to vector<1x128xf32>
      %151 = vector.broadcast %150 : vector<1x128xf32> to vector<16x128xf32>
      %152 = arith.mulf %122, %151 : vector<16x128xf32>
      %153 = vector.extract_strided_slice %149 {offsets = [2, 0], sizes = [1, 128], strides = [1, 1]} : vector<4x128xf32> to vector<1x128xf32>
      %154 = vector.broadcast %153 : vector<1x128xf32> to vector<16x128xf32>
      %155 = arith.addf %152, %154 : vector<16x128xf32>
      %156 = vector.extract_strided_slice %149 {offsets = [1, 0], sizes = [1, 128], strides = [1, 1]} : vector<4x128xf32> to vector<1x128xf32>
      %157 = vector.broadcast %156 : vector<1x128xf32> to vector<16x128xf32>
      %158 = arith.mulf %128, %157 : vector<16x128xf32>
      %159 = vector.extract_strided_slice %149 {offsets = [3, 0], sizes = [1, 128], strides = [1, 1]} : vector<4x128xf32> to vector<1x128xf32>
      %160 = vector.broadcast %159 : vector<1x128xf32> to vector<16x128xf32>
      %161 = arith.addf %158, %160 : vector<16x128xf32>
      %162 = tpu.concatenate %155, %161 in 0 : vector<16x128xf32>, vector<16x128xf32> -> vector<32x128xf32>
      %163 = arith.addf %arg8, %162 : vector<32x128xf32>
      scf.yield %163 : vector<32x128xf32>
    }
    %c2_i32_31 = arith.constant 2 : i32
    %52 = arith.addf %51, %3 : vector<32x128xf32>
    %c0_32 = arith.constant 0 : index
    %c0_33 = arith.constant 0 : index
    %53 = vector.load %arg6[%c0_32, %c0_33] : memref<32x128xf32, #tpu.memory_space<vmem>>, vector<32x128xf32>
    tpu.vector_store %arg6[%c0_32, %c0_33], %52 {strides = array<i32>} : memref<32x128xf32, #tpu.memory_space<vmem>>, vector<32x128xf32>,
    return
  }
  func.func @transform_0(%arg0: i32) -> (i32, i32) {
    %c0_i32 = arith.constant 0 : i32
    %c0_i32_0 = arith.constant 0 : i32
    return %arg0, %c0_i32 : i32, i32
  }
  func.func @transform_1(%arg0: i32) -> (i32, i32) {
    %c0_i32 = arith.constant 0 : i32
    %c0_i32_0 = arith.constant 0 : i32
    return %arg0, %c0_i32 : i32, i32
  }
  func.func @transform_2(%arg0: i32) -> (i32, i32, i32) {
    %c0_i32 = arith.constant 0 : i32
    %c0_i32_0 = arith.constant 0 : i32
    %c0_i32_1 = arith.constant 0 : i32
    %c0_i32_2 = arith.constant 0 : i32
    return %c0_i32, %c0_i32_0, %c0_i32_1 : i32, i32, i32
  }
  func.func @transform_3(%arg0: i32) -> (i32, i32) {
    %c0_i32 = arith.constant 0 : i32
    %c0_i32_0 = arith.constant 0 : i32
    %c0_i32_1 = arith.constant 0 : i32
    return %c0_i32, %c0_i32_0 : i32, i32
  }
  func.func @transform_4(%arg0: i32) -> (i32, i32) {
    %c0_i32 = arith.constant 0 : i32
    %c0_i32_0 = arith.constant 0 : i32
    %c0_i32_1 = arith.constant 0 : i32
    return %c0_i32, %c0_i32_0 : i32, i32
  }
  func.func @transform_5(%arg0: i32) -> (i32, i32) {
    %c0_i32 = arith.constant 0 : i32
    %c0_i32_0 = arith.constant 0 : i32
    return %arg0, %c0_i32 : i32, i32
  }
}

</mosaic_0001>

<llo_original>
// kernel: feature_extractor_with_info.1
$region0: #{feature_extractor_with_info.1}
  #allocation0 [shape = 'u32[]', space=smem, size = 0x4, offset = 0x4, fixed_abs, tag = 'smem constant byte address 0x4 - core index']
  #allocation1 [shape = 'u32[72,128]{1,0:T(1,128)}', space=vmem, size = 0x9000, scoped, tag = 'internal scratch']
  %s0 = inlined_call_operand.vmem [shape: f32[32,128], index: 0, kind: input, shape index: {}]
  %s1 = inlined_call_operand.vmem [shape: f32[32,128], index: 1, kind: input, shape index: {}]
  %s2 = inlined_call_operand.vmem [shape: f32[16,384,128], index: 2, kind: input, shape index: {}]
  %s3 = inlined_call_operand.vmem [shape: f32[128,8], index: 3, kind: input, shape index: {}]
  %s4 = inlined_call_operand.vmem [shape: f32[8,128], index: 4, kind: input, shape index: {}]
  %s5 = inlined_call_operand.vmem [shape: f32[32,128], index: 5, kind: output, shape index: {}]
  %s6 = sld [smem:[#allocation0]]
  $region58: #{feature_extractor_with_info.1} parent=0
    _
  %s8 = ssub.s32 1, %s6
  %s9 = scalar_select 0, %s8, %s6
  // Predicated region
  $region2: #{feature_extractor_with_info.1} parent=0 // pred_check
    _
  $region3: #{feature_extractor_with_info.1} parent=0 // pred_check_branch
    %11 = sbr.rel (0) target = $region5
  $region4: #{feature_extractor_with_info.1} parent=0 // pred_region
    _
  $region5: #{feature_extractor_with_info.1} parent=0 // pred_fallthru
    _
  // Predicated region
  $region6: #{feature_extractor_with_info.1} parent=0 // pred_check
    _
  $region7: #{feature_extractor_with_info.1} parent=0 // pred_check_branch
    %13 = sbr.rel (0) target = $region9
  $region8: #{feature_extractor_with_info.1} parent=0 // pred_region
    _
  $region9: #{feature_extractor_with_info.1} parent=0 // pred_fallthru
    _
  // Predicated region
  $region10: #{feature_extractor_with_info.1} parent=0 // pred_check
    _
  $region11: #{feature_extractor_with_info.1} parent=0 // pred_check_branch
    %15 = sbr.rel (0) target = $region13
  $region12: #{feature_extractor_with_info.1} parent=0 // pred_region
    _
  $region13: #{feature_extractor_with_info.1} parent=0 // pred_fallthru
    _
  // Predicated region
  $region14: #{feature_extractor_with_info.1} parent=0 // pred_check
    _
  $region15: #{feature_extractor_with_info.1} parent=0 // pred_check_branch
    %17 = sbr.rel (0) target = $region17
  $region16: #{feature_extractor_with_info.1} parent=0 // pred_region
    _
  $region17: #{feature_extractor_with_info.1} parent=0 // pred_fallthru
    _
  // Predicated region
  $region18: #{feature_extractor_with_info.1} parent=0 // pred_check
    _
  $region19: #{feature_extractor_with_info.1} parent=0 // pred_check_branch
    %19 = sbr.rel (0) target = $region21
  $region20: #{feature_extractor_with_info.1} parent=0 // pred_region
    _
  $region21: #{feature_extractor_with_info.1} parent=0 // pred_fallthru
    _
  %v20 = vld [vmem:[%s3] sm:$0xff]
  %v21 = vld [vmem:[%s3 + $0x8] sm:$0xff]
  %v22 = vld [vmem:[%s3 + $0x10] sm:$0xff]
  %v23 = vld [vmem:[%s3 + $0x18] sm:$0xff]
  %v24 = vld [vmem:[%s3 + $0x20] sm:$0xff]
  %v25 = vld [vmem:[%s3 + $0x28] sm:$0xff]
  %v26 = vld [vmem:[%s3 + $0x30] sm:$0xff]
  %v27 = vld [vmem:[%s3 + $0x38] sm:$0xff]
  %v28 = vld [vmem:[%s3 + $0x40] sm:$0xff]
  %v29 = vld [vmem:[%s3 + $0x48] sm:$0xff]
  %v30 = vld [vmem:[%s3 + $0x50] sm:$0xff]
  %v31 = vld [vmem:[%s3 + $0x58] sm:$0xff]
  %v32 = vld [vmem:[%s3 + $0x60] sm:$0xff]
  %v33 = vld [vmem:[%s3 + $0x68] sm:$0xff]
  %v34 = vld [vmem:[%s3 + $0x70] sm:$0xff]
  %v35 = vld [vmem:[%s3 + $0x78] sm:$0xff]
  %v36 = vld [vmem:[%s4] sm:$0xff]
  %v37 = vld [vmem:[%s0] sm:$0xff]
  %v38 = vld [vmem:[%s0 + $0x8] sm:$0xff]
  %v39 = vld [vmem:[%s0 + $0x10] sm:$0xff]
  %v40 = vld [vmem:[%s0 + $0x18] sm:$0xff]
  %v41 = vld [vmem:[%s1] sm:$0xff]
  %v42 = vld [vmem:[%s1 + $0x8] sm:$0xff]
  %v43 = vld [vmem:[%s1 + $0x10] sm:$0xff]
  %v44 = vld [vmem:[%s1 + $0x18] sm:$0xff]
  %v45 = vlaneseq
  %v46 = vshrl.u32 %v45, 7
  %v47 = vadd.s32 %v46, 8
  %v48 = vadd.s32 %v46, 16
  %v49 = vadd.s32 %v46, 24
  %vm50 = vcmp.lt.s32.totalorder %v46, 0
  %v51 = vsub.s32 0, %v46
  %v52 = vsel %vm50, %v51, %v46
  %v53 = vshrl.u32 %v52, 4
  %v54 = vand.u32 %v52, 15
  %v55 = vsub.s32 0, %v54
  %v56 = vsel %vm50, %v55, %v54
  %vm57 = vcmp.lt.s32.totalorder %v47, 0
  %v58 = vsub.s32 0, %v47
  %v59 = vsel %vm57, %v58, %v47
  %v60 = vshrl.u32 %v59, 4
  %v61 = vand.u32 %v59, 15
  %v62 = vsub.s32 0, %v61
  %v63 = vsel %vm57, %v62, %v61
  %vm64 = vcmp.lt.s32.totalorder %v48, 0
  %v65 = vsub.s32 0, %v48
  %v66 = vsel %vm64, %v65, %v48
  %v67 = vshrl.u32 %v66, 4
  %v68 = vand.u32 %v66, 15
  %v69 = vsub.s32 0, %v68
  %v70 = vsel %vm64, %v69, %v68
  %vm71 = vcmp.lt.s32.totalorder %v49, 0
  %v72 = vsub.s32 0, %v49
  %v73 = vsel %vm71, %v72, %v49
  %v74 = vshrl.u32 %v73, 4
  %v75 = vand.u32 %v73, 15
  %v76 = vsub.s32 0, %v75
  %v77 = vsel %vm71, %v76, %v75
  %vm78 = vcmp.ne.s32.totalorder %v56, 0
  %vm79 = vcmp.ne.s32.totalorder %v63, 0
  %vm80 = vcmp.ne.s32.totalorder %v70, 0
  %vm81 = vcmp.ne.s32.totalorder %v77, 0
  %vm82 = vcmp.lt.s32.totalorder %v56, 0
  %vm83 = vcmp.lt.s32.totalorder %v63, 0
  %vm84 = vcmp.lt.s32.totalorder %v70, 0
  %vm85 = vcmp.lt.s32.totalorder %v77, 0
  %vm86 = vmand %vm82, %vm78
  %vm87 = vmand %vm83, %vm79
  %vm88 = vmand %vm84, %vm80
  %vm89 = vmand %vm85, %vm81
  %v90 = vadd.s32 %v56, 16
  %v91 = vadd.s32 %v63, 16
  %v92 = vadd.s32 %v70, 16
  %v93 = vadd.s32 %v77, 16
  %v94 = vsel %vm86, %v90, %v56
  %v95 = vsel %vm87, %v91, %v63
  %v96 = vsel %vm88, %v92, %v70
  %v97 = vsel %vm89, %v93, %v77
  %vm98 = vcmp.eq.s32.totalorder %v94, 0
  %vm99 = vcmp.eq.s32.totalorder %v95, 0
  %vm100 = vcmp.eq.s32.totalorder %v96, 0
  %vm101 = vcmp.eq.s32.totalorder %v97, 0
  %vm102 = vcmp.eq.s32.totalorder %v94, 15
  %vm103 = vcmp.eq.s32.totalorder %v95, 15
  %vm104 = vcmp.eq.s32.totalorder %v96, 15
  %vm105 = vcmp.eq.s32.totalorder %v97, 15
  loop: start=0, step=1, limit=2
  $region22: #{feature_extractor_with_info.1} parent=0 // loop_pre_header
    _
  $region23: #{feature_extractor_with_info.1} parent=0 // loop_header
    %s107 = sphi 0, %s111
    %p108 = scmp.ge.s32.totalorder %s107, 2
    %v112 = vphi %v37, %v682
    %v113 = vphi %v38, %v683
    %v114 = vphi %v39, %v684
    %v115 = vphi %v40, %v685
  $region24: #{feature_extractor_with_info.1} parent=0 // loop_header_branch
    %110 = sbr.rel (%p108) target = $region28
  $region25: #{feature_extractor_with_info.1} parent=0 // loop_body
    %s116 = smul.u32 %s107, 2
    %v117 = vrot.slane %v112, 7
    %v118 = vrot.slane %v113, 7
    %v119 = vrot.slane %v114, 7
    %v120 = vrot.slane %v115, 7
    %vm121 = vcmp.lt.s32.totalorder %v46, 1
    %v122 = vsel %vm121, %v119, %v120
    %v123 = vsel %vm121, %v118, %v119
    %v124 = vsel %vm121, %v117, %v118
    %v125 = vsel %vm121, %v120, %v117
    %v126 = vsel %vm98, 0.0, %v125
    %v127 = vsel %vm99, 0.0, %v124
    %v128 = vsel %vm100, 0.0, %v123
    %v129 = vsel %vm101, 0.0, %v122
    %v130 = vrot.slane %v112, 1
    %v131 = vrot.slane %v113, 1
    %v132 = vrot.slane %v114, 1
    %v133 = vrot.slane %v115, 1
    %vm134 = vcmp.lt.s32.totalorder %v46, 7
    %v135 = vsel %vm134, %v132, %v133
    %v136 = vsel %vm134, %v131, %v132
    %v137 = vsel %vm134, %v130, %v131
    %v138 = vsel %vm134, %v133, %v130
    %v139 = vsel %vm102, 0.0, %v137
    %v140 = vsel %vm103, 0.0, %v136
    %v141 = vsel %vm104, 0.0, %v135
    %v142 = vsel %vm105, 0.0, %v138
    %s143 = smul.u32 %s116, 384
    %s144 = scalar_lea.vmem %s2, %s143
    %v145 = vld [vmem:[%s144] sm:$0xff]
    %v146 = vld [vmem:[%s144 + $0x8] sm:$0xff]
    %v147 = vld [vmem:[%s144 + $0x10] sm:$0xff]
    %v148 = vld [vmem:[%s144 + $0x18] sm:$0xff]
    %v149 = vld [vmem:[%s144 + $0x20] sm:$0xff]
    %v150 = vld [vmem:[%s144 + $0x28] sm:$0xff]
    %v151 = vld [vmem:[%s144 + $0x30] sm:$0xff]
    %v152 = vld [vmem:[%s144 + $0x38] sm:$0xff]
    %v153 = vld [vmem:[%s144 + $0x40] sm:$0xff]
    %v154 = vld [vmem:[%s144 + $0x48] sm:$0xff]
    %v155 = vld [vmem:[%s144 + $0x50] sm:$0xff]
    %v156 = vld [vmem:[%s144 + $0x58] sm:$0xff]
    %v157 = vld [vmem:[%s144 + $0x60] sm:$0xff]
    %v158 = vld [vmem:[%s144 + $0x68] sm:$0xff]
    %v159 = vld [vmem:[%s144 + $0x70] sm:$0xff]
    %v160 = vld [vmem:[%s144 + $0x78] sm:$0xff]
    %v161 = vld [vmem:[%s144 + $0x80] sm:$0xff]
    %v162 = vld [vmem:[%s144 + $0x88] sm:$0xff]
    %v163 = vld [vmem:[%s144 + $0x90] sm:$0xff]
    %v164 = vld [vmem:[%s144 + $0x98] sm:$0xff]
    %v165 = vld [vmem:[%s144 + $0xa0] sm:$0xff]
    %v166 = vld [vmem:[%s144 + $0xa8] sm:$0xff]
    %v167 = vld [vmem:[%s144 + $0xb0] sm:$0xff]
    %v168 = vld [vmem:[%s144 + $0xb8] sm:$0xff]
    %v169 = vld [vmem:[%s144 + $0xc0] sm:$0xff]
    %v170 = vld [vmem:[%s144 + $0xc8] sm:$0xff]
    %v171 = vld [vmem:[%s144 + $0xd0] sm:$0xff]
    %v172 = vld [vmem:[%s144 + $0xd8] sm:$0xff]
    %v173 = vld [vmem:[%s144 + $0xe0] sm:$0xff]
    %v174 = vld [vmem:[%s144 + $0xe8] sm:$0xff]
    %v175 = vld [vmem:[%s144 + $0xf0] sm:$0xff]
    %v176 = vld [vmem:[%s144 + $0xf8] sm:$0xff]
    %v177 = vld [vmem:[%s144 + $0x100] sm:$0xff]
    %v178 = vld [vmem:[%s144 + $0x108] sm:$0xff]
    %v179 = vld [vmem:[%s144 + $0x110] sm:$0xff]
    %v180 = vld [vmem:[%s144 + $0x118] sm:$0xff]
    %v181 = vld [vmem:[%s144 + $0x120] sm:$0xff]
    %v182 = vld [vmem:[%s144 + $0x128] sm:$0xff]
    %v183 = vld [vmem:[%s144 + $0x130] sm:$0xff]
    %v184 = vld [vmem:[%s144 + $0x138] sm:$0xff]
    %v185 = vld [vmem:[%s144 + $0x140] sm:$0xff]
    %v186 = vld [vmem:[%s144 + $0x148] sm:$0xff]
    %v187 = vld [vmem:[%s144 + $0x150] sm:$0xff]
    %v188 = vld [vmem:[%s144 + $0x158] sm:$0xff]
    %v189 = vld [vmem:[%s144 + $0x160] sm:$0xff]
    %v190 = vld [vmem:[%s144 + $0x168] sm:$0xff]
    %v191 = vld [vmem:[%s144 + $0x170] sm:$0xff]
    %v192 = vld [vmem:[%s144 + $0x178] sm:$0xff]
    %193 = vmatpush.msra.mxu0 %v160
    %194 = vmatpush.msra.mxu0 %v159
    %195 = vmatpush.msra.mxu0 %v158
    %196 = vmatpush.msra.mxu0 %v157
    %197 = vmatpush.msra.mxu0 %v156
    %198 = vmatpush.msra.mxu0 %v155
    %199 = vmatpush.msra.mxu0 %v154
    %200 = vmatpush.msra.mxu0 %v153
    %201 = vmatpush.msra.mxu0 %v152
    %202 = vmatpush.msra.mxu0 %v151
    %203 = vmatpush.msra.mxu0 %v150
    %204 = vmatpush.msra.mxu0 %v149
    %205 = vmatpush.msra.mxu0 %v148
    %206 = vmatpush.msra.mxu0 %v147
    %207 = vmatpush.msra.mxu0 %v146
    %208 = vmatpush.msra.mxu0 %v145
    %209 = vmatmul.f32.gmra.mxu0 %v126
    %v210 = vpop.f32.mrf.mxu0
    %v211 = vadd.f32 0.0, %v210
    %212 = vmatmul.f32.gmra.mxu0 %v127
    %v213 = vpop.f32.mrf.mxu0
    %v214 = vadd.f32 0.0, %v213
    %215 = vmatmul.f32.gmra.mxu0 %v128
    %v216 = vpop.f32.mrf.mxu0
    %v217 = vadd.f32 0.0, %v216
    %218 = vmatmul.f32.gmra.mxu0 %v129
    %v219 = vpop.f32.mrf.mxu0
    %v220 = vadd.f32 0.0, %v219
    %221 = vdwg.mxu0
    %222 = vmatpush.msra.mxu0 %v176
    %223 = vmatpush.msra.mxu0 %v175
    %224 = vmatpush.msra.mxu0 %v174
    %225 = vmatpush.msra.mxu0 %v173
    %226 = vmatpush.msra.mxu0 %v172
    %227 = vmatpush.msra.mxu0 %v171
    %228 = vmatpush.msra.mxu0 %v170
    %229 = vmatpush.msra.mxu0 %v169
    %230 = vmatpush.msra.mxu0 %v168
    %231 = vmatpush.msra.mxu0 %v167
    %232 = vmatpush.msra.mxu0 %v166
    %233 = vmatpush.msra.mxu0 %v165
    %234 = vmatpush.msra.mxu0 %v164
    %235 = vmatpush.msra.mxu0 %v163
    %236 = vmatpush.msra.mxu0 %v162
    %237 = vmatpush.msra.mxu0 %v161
    %238 = vmatmul.f32.gmra.mxu0 %v112
    %v239 = vpop.f32.mrf.mxu0
    %v240 = vadd.f32 %v211, %v239
    %241 = vmatmul.f32.gmra.mxu0 %v113
    %v242 = vpop.f32.mrf.mxu0
    %v243 = vadd.f32 %v214, %v242
    %244 = vmatmul.f32.gmra.mxu0 %v114
    %v245 = vpop.f32.mrf.mxu0
    %v246 = vadd.f32 %v217, %v245
    %247 = vmatmul.f32.gmra.mxu0 %v115
    %v248 = vpop.f32.mrf.mxu0
    %v249 = vadd.f32 %v220, %v248
    %250 = vdwg.mxu0
    %251 = vmatpush.msra.mxu0 %v192
    %252 = vmatpush.msra.mxu0 %v191
    %253 = vmatpush.msra.mxu0 %v190
    %254 = vmatpush.msra.mxu0 %v189
    %255 = vmatpush.msra.mxu0 %v188
    %256 = vmatpush.msra.mxu0 %v187
    %257 = vmatpush.msra.mxu0 %v186
    %258 = vmatpush.msra.mxu0 %v185
    %259 = vmatpush.msra.mxu0 %v184
    %260 = vmatpush.msra.mxu0 %v183
    %261 = vmatpush.msra.mxu0 %v182
    %262 = vmatpush.msra.mxu0 %v181
    %263 = vmatpush.msra.mxu0 %v180
    %264 = vmatpush.msra.mxu0 %v179
    %265 = vmatpush.msra.mxu0 %v178
    %266 = vmatpush.msra.mxu0 %v177
    %267 = vmatmul.f32.gmra.mxu0 %v139
    %v268 = vpop.f32.mrf.mxu0
    %v269 = vadd.f32 %v240, %v268
    %270 = vmatmul.f32.gmra.mxu0 %v140
    %v271 = vpop.f32.mrf.mxu0
    %v272 = vadd.f32 %v243, %v271
    %273 = vmatmul.f32.gmra.mxu0 %v141
    %v274 = vpop.f32.mrf.mxu0
    %v275 = vadd.f32 %v246, %v274
    %276 = vmatmul.f32.gmra.mxu0 %v142
    %v277 = vpop.f32.mrf.mxu0
    %v278 = vadd.f32 %v249, %v277
    %279 = vdwg.mxu0
    %v280 = vadd.f32 %v269, %v272
    %v281 = vrot.slane %v280, 4
    %v282 = vadd.f32 %v280, %v281
    %v283 = vrot.slane %v282, 2
    %v284 = vadd.f32 %v282, %v283
    %v285 = vrot.slane %v284, 1
    %v286 = vadd.f32 %v284, %v285
    %v287 = vmul.f32 %v269, %v269
    %v288 = vmul.f32 %v272, %v272
    %v289 = vadd.f32 %v287, %v288
    %v290 = vrot.slane %v289, 4
    %v291 = vadd.f32 %v289, %v290
    %v292 = vrot.slane %v291, 2
    %v293 = vadd.f32 %v291, %v292
    %v294 = vrot.slane %v293, 1
    %v295 = vadd.f32 %v293, %v294
    %v296 = vadd.f32 %v275, %v278
    %v297 = vrot.slane %v296, 4
    %v298 = vadd.f32 %v296, %v297
    %v299 = vrot.slane %v298, 2
    %v300 = vadd.f32 %v298, %v299
    %v301 = vrot.slane %v300, 1
    %v302 = vadd.f32 %v300, %v301
    %v303 = vmul.f32 %v275, %v275
    %v304 = vmul.f32 %v278, %v278
    %v305 = vadd.f32 %v303, %v304
    %v306 = vrot.slane %v305, 4
    %v307 = vadd.f32 %v305, %v306
    %v308 = vrot.slane %v307, 2
    %v309 = vadd.f32 %v307, %v308
    %v310 = vrot.slane %v309, 1
    %v311 = vadd.f32 %v309, %v310
    %vm312 = vcmask 1040384
    %v313 = vsel %vm312, %v286, %v302
    %vm314 = vcmask 1041408
    %v315 = vsel %vm314, %v313, %v295
    %vm316 = vcmask 1042432
    %v317 = vsel %vm316, %v315, %v311
    %318 = vmatpush.msra.mxu0 %v35
    %319 = vmatpush.msra.mxu0 %v34
    %320 = vmatpush.msra.mxu0 %v33
    %321 = vmatpush.msra.mxu0 %v32
    %322 = vmatpush.msra.mxu0 %v31
    %323 = vmatpush.msra.mxu0 %v30
    %324 = vmatpush.msra.mxu0 %v29
    %325 = vmatpush.msra.mxu0 %v28
    %326 = vmatpush.msra.mxu0 %v27
    %327 = vmatpush.msra.mxu0 %v26
    %328 = vmatpush.msra.mxu0 %v25
    %329 = vmatpush.msra.mxu0 %v24
    %330 = vmatpush.msra.mxu0 %v23
    %331 = vmatpush.msra.mxu0 %v22
    %332 = vmatpush.msra.mxu0 %v21
    %333 = vmatpush.msra.mxu0 %v20
    %334 = vmatmul.f32.gmra.mxu0 %v317
    %v335 = vpop.f32.mrf.mxu0
    %v336 = vadd.f32 0.0, %v335
    %337 = vdwg.mxu0
    %v338 = vmul.f32 %v336, 0.00390625
    %v339 = vmul.f32 %v338, %v338
    %v341 = vrot.slane %v339, 6
    %v343 = vsub.f32 %v338, %v341
    %v344 = vadd.f32 %v343, 1e-05
    %v345 = vrsqrt.pop %v344
    %v346 = vmul.f32 %v345, %v344
    %v347 = vmul.f32 %v346, %v345
    %v348 = vmul.f32 0.5, %v347
    %v349 = vsub.f32 1.5, %v348
    %v350 = vmul.f32 %v345, %v349
    %vm351 = vweird.f32 %v344
    %vm352 = vweird.f32 %v345
    %vm353 = vmor %vm351, %vm352
    %v354 = vsel %vm353, %v345, %v350
    %v355 = vsub.f32 0.0, %v338
    %v357 = vrot.slane %v354, 2
    %v359 = vmul.f32 %v355, %v357
    %v361 = vrot.slane %v359, 6
    %v363 = vsel %vm314, %v357, %v361
    %vm364 = vcmask 64512
    %v366 = vsel %vm364, %v363, 0
    %368 = vmatpush.msra.mxu0 0.0
    %369 = vmatpush.msra.mxu0 0.0
    %370 = vmatpush.msra.mxu0 0.0
    %371 = vmatpush.msra.mxu0 0.0
    %372 = vmatpush.msra.mxu0 0.0
    %373 = vmatpush.msra.mxu0 0.0
    %374 = vmatpush.msra.mxu0 0.0
    %375 = vmatpush.msra.mxu0 0.0
    %376 = vmatpush.msra.mxu0 0.0
    %377 = vmatpush.msra.mxu0 0.0
    %378 = vmatpush.msra.mxu0 0.0
    %379 = vmatpush.msra.mxu0 0.0
    %380 = vmatpush.msra.mxu0 0.0
    %381 = vmatpush.msra.mxu0 0.0
    %382 = vmatpush.msra.mxu0 0.0
    %383 = vmatpush.msra.mxu0 %v36
    %384 = vmatmul.f32.gmra.mxu0 %v366
    %v385 = vpop.f32.mrf.mxu0
    %v386 = vadd.f32 0.0, %v385
    %387 = vdwg.mxu0
    %v388 = vperm.slane %v386, 0
    %v389 = vmul.f32 %v269, %v388
    %v390 = vmul.f32 %v272, %v388
    %v391 = vperm.slane %v386, 2
    %v392 = vadd.f32 %v389, %v391
    %v393 = vadd.f32 %v390, %v391
    %v394 = vperm.slane %v386, 1
    %v395 = vmul.f32 %v275, %v394
    %v396 = vmul.f32 %v278, %v394
    %v397 = vperm.slane %v386, 3
    %v398 = vadd.f32 %v395, %v397
    %v399 = vadd.f32 %v396, %v397
    %v400 = vmax.f32 %v392, 0.0
    %v401 = vmax.f32 %v393, 0.0
    %v402 = vmax.f32 %v398, 0.0
    %v403 = vmax.f32 %v399, 0.0
    %s404 = sadd.s32 %s116, 1
    %v405 = vrot.slane %v400, 7
    %v406 = vrot.slane %v401, 7
    %v407 = vrot.slane %v402, 7
    %v408 = vrot.slane %v403, 7
    %v409 = vsel %vm121, %v407, %v408
    %v410 = vsel %vm121, %v406, %v407
    %v411 = vsel %vm121, %v405, %v406
    %v412 = vsel %vm121, %v408, %v405
    %v413 = vsel %vm98, 0.0, %v412
    %v414 = vsel %vm99, 0.0, %v411
    %v415 = vsel %vm100, 0.0, %v410
    %v416 = vsel %vm101, 0.0, %v409
    %v417 = vrot.slane %v400, 1
    %v418 = vrot.slane %v401, 1
    %v419 = vrot.slane %v402, 1
    %v420 = vrot.slane %v403, 1
    %v421 = vsel %vm134, %v419, %v420
    %v422 = vsel %vm134, %v418, %v419
    %v423 = vsel %vm134, %v417, %v418
    %v424 = vsel %vm134, %v420, %v417
    %v425 = vsel %vm102, 0.0, %v423
    %v426 = vsel %vm103, 0.0, %v422
    %v427 = vsel %vm104, 0.0, %v421
    %v428 = vsel %vm105, 0.0, %v424
    %s429 = smul.u32 %s404, 384
    %s430 = scalar_lea.vmem %s2, %s429
    %v431 = vld [vmem:[%s430] sm:$0xff]
    %v432 = vld [vmem:[%s430 + $0x8] sm:$0xff]
    %v433 = vld [vmem:[%s430 + $0x10] sm:$0xff]
    %v434 = vld [vmem:[%s430 + $0x18] sm:$0xff]
    %v435 = vld [vmem:[%s430 + $0x20] sm:$0xff]
    %v436 = vld [vmem:[%s430 + $0x28] sm:$0xff]
    %v437 = vld [vmem:[%s430 + $0x30] sm:$0xff]
    %v438 = vld [vmem:[%s430 + $0x38] sm:$0xff]
    %v439 = vld [vmem:[%s430 + $0x40] sm:$0xff]
    %v440 = vld [vmem:[%s430 + $0x48] sm:$0xff]
    %v441 = vld [vmem:[%s430 + $0x50] sm:$0xff]
    %v442 = vld [vmem:[%s430 + $0x58] sm:$0xff]
    %v443 = vld [vmem:[%s430 + $0x60] sm:$0xff]
    %v444 = vld [vmem:[%s430 + $0x68] sm:$0xff]
    %v445 = vld [vmem:[%s430 + $0x70] sm:$0xff]
    %v446 = vld [vmem:[%s430 + $0x78] sm:$0xff]
    %v447 = vld [vmem:[%s430 + $0x80] sm:$0xff]
    %v448 = vld [vmem:[%s430 + $0x88] sm:$0xff]
    %v449 = vld [vmem:[%s430 + $0x90] sm:$0xff]
    %v450 = vld [vmem:[%s430 + $0x98] sm:$0xff]
    %v451 = vld [vmem:[%s430 + $0xa0] sm:$0xff]
    %v452 = vld [vmem:[%s430 + $0xa8] sm:$0xff]
    %v453 = vld [vmem:[%s430 + $0xb0] sm:$0xff]
    %v454 = vld [vmem:[%s430 + $0xb8] sm:$0xff]
    %v455 = vld [vmem:[%s430 + $0xc0] sm:$0xff]
    %v456 = vld [vmem:[%s430 + $0xc8] sm:$0xff]
    %v457 = vld [vmem:[%s430 + $0xd0] sm:$0xff]
    %v458 = vld [vmem:[%s430 + $0xd8] sm:$0xff]
    %v459 = vld [vmem:[%s430 + $0xe0] sm:$0xff]
    %v460 = vld [vmem:[%s430 + $0xe8] sm:$0xff]
    %v461 = vld [vmem:[%s430 + $0xf0] sm:$0xff]
    %v462 = vld [vmem:[%s430 + $0xf8] sm:$0xff]
    %v463 = vld [vmem:[%s430 + $0x100] sm:$0xff]
    %v464 = vld [vmem:[%s430 + $0x108] sm:$0xff]
    %v465 = vld [vmem:[%s430 + $0x110] sm:$0xff]
    %v466 = vld [vmem:[%s430 + $0x118] sm:$0xff]
    %v467 = vld [vmem:[%s430 + $0x120] sm:$0xff]
    %v468 = vld [vmem:[%s430 + $0x128] sm:$0xff]
    %v469 = vld [vmem:[%s430 + $0x130] sm:$0xff]
    %v470 = vld [vmem:[%s430 + $0x138] sm:$0xff]
    %v471 = vld [vmem:[%s430 + $0x140] sm:$0xff]
    %v472 = vld [vmem:[%s430 + $0x148] sm:$0xff]
    %v473 = vld [vmem:[%s430 + $0x150] sm:$0xff]
    %v474 = vld [vmem:[%s430 + $0x158] sm:$0xff]
    %v475 = vld [vmem:[%s430 + $0x160] sm:$0xff]
    %v476 = vld [vmem:[%s430 + $0x168] sm:$0xff]
    %v477 = vld [vmem:[%s430 + $0x170] sm:$0xff]
    %v478 = vld [vmem:[%s430 + $0x178] sm:$0xff]
    %479 = vmatpush.msra.mxu0 %v446
    %480 = vmatpush.msra.mxu0 %v445
    %481 = vmatpush.msra.mxu0 %v444
    %482 = vmatpush.msra.mxu0 %v443
    %483 = vmatpush.msra.mxu0 %v442
    %484 = vmatpush.msra.mxu0 %v441
    %485 = vmatpush.msra.mxu0 %v440
    %486 = vmatpush.msra.mxu0 %v439
    %487 = vmatpush.msra.mxu0 %v438
    %488 = vmatpush.msra.mxu0 %v437
    %489 = vmatpush.msra.mxu0 %v436
    %490 = vmatpush.msra.mxu0 %v435
    %491 = vmatpush.msra.mxu0 %v434
    %492 = vmatpush.msra.mxu0 %v433
    %493 = vmatpush.msra.mxu0 %v432
    %494 = vmatpush.msra.mxu0 %v431
    %495 = vmatmul.f32.gmra.mxu0 %v413
    %v496 = vpop.f32.mrf.mxu0
    %v497 = vadd.f32 0.0, %v496
    %498 = vmatmul.f32.gmra.mxu0 %v414
    %v499 = vpop.f32.mrf.mxu0
    %v500 = vadd.f32 0.0, %v499
    %501 = vmatmul.f32.gmra.mxu0 %v415
    %v502 = vpop.f32.mrf.mxu0
    %v503 = vadd.f32 0.0, %v502
    %504 = vmatmul.f32.gmra.mxu0 %v416
    %v505 = vpop.f32.mrf.mxu0
    %v506 = vadd.f32 0.0, %v505
    %507 = vdwg.mxu0
    %508 = vmatpush.msra.mxu0 %v462
    %509 = vmatpush.msra.mxu0 %v461
    %510 = vmatpush.msra.mxu0 %v460
    %511 = vmatpush.msra.mxu0 %v459
    %512 = vmatpush.msra.mxu0 %v458
    %513 = vmatpush.msra.mxu0 %v457
    %514 = vmatpush.msra.mxu0 %v456
    %515 = vmatpush.msra.mxu0 %v455
    %516 = vmatpush.msra.mxu0 %v454
    %517 = vmatpush.msra.mxu0 %v453
    %518 = vmatpush.msra.mxu0 %v452
    %519 = vmatpush.msra.mxu0 %v451
    %520 = vmatpush.msra.mxu0 %v450
    %521 = vmatpush.msra.mxu0 %v449
    %522 = vmatpush.msra.mxu0 %v448
    %523 = vmatpush.msra.mxu0 %v447
    %524 = vmatmul.f32.gmra.mxu0 %v400
    %v525 = vpop.f32.mrf.mxu0
    %v526 = vadd.f32 %v497, %v525
    %527 = vmatmul.f32.gmra.mxu0 %v401
    %v528 = vpop.f32.mrf.mxu0
    %v529 = vadd.f32 %v500, %v528
    %530 = vmatmul.f32.gmra.mxu0 %v402
    %v531 = vpop.f32.mrf.mxu0
    %v532 = vadd.f32 %v503, %v531
    %533 = vmatmul.f32.gmra.mxu0 %v403
    %v534 = vpop.f32.mrf.mxu0
    %v535 = vadd.f32 %v506, %v534
    %536 = vdwg.mxu0
    %537 = vmatpush.msra.mxu0 %v478
    %538 = vmatpush.msra.mxu0 %v477
    %539 = vmatpush.msra.mxu0 %v476
    %540 = vmatpush.msra.mxu0 %v475
    %541 = vmatpush.msra.mxu0 %v474
    %542 = vmatpush.msra.mxu0 %v473
    %543 = vmatpush.msra.mxu0 %v472
    %544 = vmatpush.msra.mxu0 %v471
    %545 = vmatpush.msra.mxu0 %v470
    %546 = vmatpush.msra.mxu0 %v469
    %547 = vmatpush.msra.mxu0 %v468
    %548 = vmatpush.msra.mxu0 %v467
    %549 = vmatpush.msra.mxu0 %v466
    %550 = vmatpush.msra.mxu0 %v465
    %551 = vmatpush.msra.mxu0 %v464
    %552 = vmatpush.msra.mxu0 %v463
    %553 = vmatmul.f32.gmra.mxu0 %v425
    %v554 = vpop.f32.mrf.mxu0
    %v555 = vadd.f32 %v526, %v554
    %556 = vmatmul.f32.gmra.mxu0 %v426
    %v557 = vpop.f32.mrf.mxu0
    %v558 = vadd.f32 %v529, %v557
    %559 = vmatmul.f32.gmra.mxu0 %v427
    %v560 = vpop.f32.mrf.mxu0
    %v561 = vadd.f32 %v532, %v560
    %562 = vmatmul.f32.gmra.mxu0 %v428
    %v563 = vpop.f32.mrf.mxu0
    %v564 = vadd.f32 %v535, %v563
    %565 = vdwg.mxu0
    %v566 = vadd.f32 %v555, %v558
    %v567 = vrot.slane %v566, 4
    %v568 = vadd.f32 %v566, %v567
    %v569 = vrot.slane %v568, 2
    %v570 = vadd.f32 %v568, %v569
    %v571 = vrot.slane %v570, 1
    %v572 = vadd.f32 %v570, %v571
    %v573 = vmul.f32 %v555, %v555
    %v574 = vmul.f32 %v558, %v558
    %v575 = vadd.f32 %v573, %v574
    %v576 = vrot.slane %v575, 4
    %v577 = vadd.f32 %v575, %v576
    %v578 = vrot.slane %v577, 2
    %v579 = vadd.f32 %v577, %v578
    %v580 = vrot.slane %v579, 1
    %v581 = vadd.f32 %v579, %v580
    %v582 = vadd.f32 %v561, %v564
    %v583 = vrot.slane %v582, 4
    %v584 = vadd.f32 %v582, %v583
    %v585 = vrot.slane %v584, 2
    %v586 = vadd.f32 %v584, %v585
    %v587 = vrot.slane %v586, 1
    %v588 = vadd.f32 %v586, %v587
    %v589 = vmul.f32 %v561, %v561
    %v590 = vmul.f32 %v564, %v564
    %v591 = vadd.f32 %v589, %v590
    %v592 = vrot.slane %v591, 4
    %v593 = vadd.f32 %v591, %v592
    %v594 = vrot.slane %v593, 2
    %v595 = vadd.f32 %v593, %v594
    %v596 = vrot.slane %v595, 1
    %v597 = vadd.f32 %v595, %v596
    %v598 = vsel %vm312, %v572, %v588
    %v599 = vsel %vm314, %v598, %v581
    %v600 = vsel %vm316, %v599, %v597
    %601 = vmatpush.msra.mxu0 %v35
    %602 = vmatpush.msra.mxu0 %v34
    %603 = vmatpush.msra.mxu0 %v33
    %604 = vmatpush.msra.mxu0 %v32
    %605 = vmatpush.msra.mxu0 %v31
    %606 = vmatpush.msra.mxu0 %v30
    %607 = vmatpush.msra.mxu0 %v29
    %608 = vmatpush.msra.mxu0 %v28
    %609 = vmatpush.msra.mxu0 %v27
    %610 = vmatpush.msra.mxu0 %v26
    %611 = vmatpush.msra.mxu0 %v25
    %612 = vmatpush.msra.mxu0 %v24
    %613 = vmatpush.msra.mxu0 %v23
    %614 = vmatpush.msra.mxu0 %v22
    %615 = vmatpush.msra.mxu0 %v21
    %616 = vmatpush.msra.mxu0 %v20
    %617 = vmatmul.f32.gmra.mxu0 %v600
    %v618 = vpop.f32.mrf.mxu0
    %v619 = vadd.f32 0.0, %v618
    %620 = vdwg.mxu0
    %v621 = vmul.f32 %v619, 0.00390625
    %v622 = vmul.f32 %v621, %v621
    %v624 = vrot.slane %v622, 6
    %v626 = vsub.f32 %v621, %v624
    %v627 = vadd.f32 %v626, 1e-05
    %v628 = vrsqrt.pop %v627
    %v629 = vmul.f32 %v628, %v627
    %v630 = vmul.f32 %v629, %v628
    %v631 = vmul.f32 0.5, %v630
    %v632 = vsub.f32 1.5, %v631
    %v633 = vmul.f32 %v628, %v632
    %vm634 = vweird.f32 %v627
    %vm635 = vweird.f32 %v628
    %vm636 = vmor %vm634, %vm635
    %v637 = vsel %vm636, %v628, %v633
    %v638 = vsub.f32 0.0, %v621
    %v640 = vrot.slane %v637, 2
    %v642 = vmul.f32 %v638, %v640
    %v644 = vrot.slane %v642, 6
    %v646 = vsel %vm314, %v640, %v644
    %v648 = vsel %vm364, %v646, 0
    %650 = vmatpush.msra.mxu0 0.0
    %651 = vmatpush.msra.mxu0 0.0
    %652 = vmatpush.msra.mxu0 0.0
    %653 = vmatpush.msra.mxu0 0.0
    %654 = vmatpush.msra.mxu0 0.0
    %655 = vmatpush.msra.mxu0 0.0
    %656 = vmatpush.msra.mxu0 0.0
    %657 = vmatpush.msra.mxu0 0.0
    %658 = vmatpush.msra.mxu0 0.0
    %659 = vmatpush.msra.mxu0 0.0
    %660 = vmatpush.msra.mxu0 0.0
    %661 = vmatpush.msra.mxu0 0.0
    %662 = vmatpush.msra.mxu0 0.0
    %663 = vmatpush.msra.mxu0 0.0
    %664 = vmatpush.msra.mxu0 0.0
    %665 = vmatpush.msra.mxu0 %v36
    %666 = vmatmul.f32.gmra.mxu0 %v648
    %v667 = vpop.f32.mrf.mxu0
    %v668 = vadd.f32 0.0, %v667
    %669 = vdwg.mxu0
    %v670 = vperm.slane %v668, 0
    %v671 = vmul.f32 %v555, %v670
    %v672 = vmul.f32 %v558, %v670
    %v673 = vperm.slane %v668, 2
    %v674 = vadd.f32 %v671, %v673
    %v675 = vadd.f32 %v672, %v673
    %v676 = vperm.slane %v668, 1
    %v677 = vmul.f32 %v561, %v676
    %v678 = vmul.f32 %v564, %v676
    %v679 = vperm.slane %v668, 3
    %v680 = vadd.f32 %v677, %v679
    %v681 = vadd.f32 %v678, %v679
    %v682 = vadd.f32 %v112, %v674
    %v683 = vadd.f32 %v113, %v675
    %v684 = vadd.f32 %v114, %v680
    %v685 = vadd.f32 %v115, %v681
  $region26: #{feature_extractor_with_info.1} parent=0 // loop_footer
    %s111 = sadd.s32 1, %s107
  $region27: #{feature_extractor_with_info.1} parent=0 // loop_footer_branch
    %106 = sbr.rel target = $region23
  $region28: #{feature_extractor_with_info.1} parent=0 // loop_exit
    _
  %v686 = vadd.f32 %v112, %v41
  %v687 = vadd.f32 %v113, %v42
  %v688 = vadd.f32 %v114, %v43
  %v689 = vadd.f32 %v115, %v44
  loop: start=0, step=1, limit=2
  $region29: #{feature_extractor_with_info.1} parent=0 // loop_pre_header
    _
  $region30: #{feature_extractor_with_info.1} parent=0 // loop_header
    %s691 = sphi 0, %s695
    %p692 = scmp.ge.s32.totalorder %s691, 2
    %v696 = vphi %v686, %v1267
    %v697 = vphi %v687, %v1268
    %v698 = vphi %v688, %v1269
    %v699 = vphi %v689, %v1270
  $region31: #{feature_extractor_with_info.1} parent=0 // loop_header_branch
    %694 = sbr.rel (%p692) target = $region35
  $region32: #{feature_extractor_with_info.1} parent=0 // loop_body
    %s700 = sadd.s32 %s691, 2
    %s701 = smul.u32 %s700, 2
    %v702 = vrot.slane %v696, 7
    %v703 = vrot.slane %v697, 7
    %v704 = vrot.slane %v698, 7
    %v705 = vrot.slane %v699, 7
    %vm706 = vcmp.lt.s32.totalorder %v46, 1
    %v707 = vsel %vm706, %v704, %v705
    %v708 = vsel %vm706, %v703, %v704
    %v709 = vsel %vm706, %v702, %v703
    %v710 = vsel %vm706, %v705, %v702
    %v711 = vsel %vm98, 0.0, %v710
    %v712 = vsel %vm99, 0.0, %v709
    %v713 = vsel %vm100, 0.0, %v708
    %v714 = vsel %vm101, 0.0, %v707
    %v715 = vrot.slane %v696, 1
    %v716 = vrot.slane %v697, 1
    %v717 = vrot.slane %v698, 1
    %v718 = vrot.slane %v699, 1
    %vm719 = vcmp.lt.s32.totalorder %v46, 7
    %v720 = vsel %vm719, %v717, %v718
    %v721 = vsel %vm719, %v716, %v717
    %v722 = vsel %vm719, %v715, %v716
    %v723 = vsel %vm719, %v718, %v715
    %v724 = vsel %vm102, 0.0, %v722
    %v725 = vsel %vm103, 0.0, %v721
    %v726 = vsel %vm104, 0.0, %v720
    %v727 = vsel %vm105, 0.0, %v723
    %s728 = smul.u32 %s701, 384
    %s729 = scalar_lea.vmem %s2, %s728
    %v730 = vld [vmem:[%s729] sm:$0xff]
    %v731 = vld [vmem:[%s729 + $0x8] sm:$0xff]
    %v732 = vld [vmem:[%s729 + $0x10] sm:$0xff]
    %v733 = vld [vmem:[%s729 + $0x18] sm:$0xff]
    %v734 = vld [vmem:[%s729 + $0x20] sm:$0xff]
    %v735 = vld [vmem:[%s729 + $0x28] sm:$0xff]
    %v736 = vld [vmem:[%s729 + $0x30] sm:$0xff]
    %v737 = vld [vmem:[%s729 + $0x38] sm:$0xff]
    %v738 = vld [vmem:[%s729 + $0x40] sm:$0xff]
    %v739 = vld [vmem:[%s729 + $0x48] sm:$0xff]
    %v740 = vld [vmem:[%s729 + $0x50] sm:$0xff]
    %v741 = vld [vmem:[%s729 + $0x58] sm:$0xff]
    %v742 = vld [vmem:[%s729 + $0x60] sm:$0xff]
    %v743 = vld [vmem:[%s729 + $0x68] sm:$0xff]
    %v744 = vld [vmem:[%s729 + $0x70] sm:$0xff]
    %v745 = vld [vmem:[%s729 + $0x78] sm:$0xff]
    %v746 = vld [vmem:[%s729 + $0x80] sm:$0xff]
    %v747 = vld [vmem:[%s729 + $0x88] sm:$0xff]
    %v748 = vld [vmem:[%s729 + $0x90] sm:$0xff]
    %v749 = vld [vmem:[%s729 + $0x98] sm:$0xff]
    %v750 = vld [vmem:[%s729 + $0xa0] sm:$0xff]
    %v751 = vld [vmem:[%s729 + $0xa8] sm:$0xff]
    %v752 = vld [vmem:[%s729 + $0xb0] sm:$0xff]
    %v753 = vld [vmem:[%s729 + $0xb8] sm:$0xff]
    %v754 = vld [vmem:[%s729 + $0xc0] sm:$0xff]
    %v755 = vld [vmem:[%s729 + $0xc8] sm:$0xff]
    %v756 = vld [vmem:[%s729 + $0xd0] sm:$0xff]
    %v757 = vld [vmem:[%s729 + $0xd8] sm:$0xff]
    %v758 = vld [vmem:[%s729 + $0xe0] sm:$0xff]
    %v759 = vld [vmem:[%s729 + $0xe8] sm:$0xff]
    %v760 = vld [vmem:[%s729 + $0xf0] sm:$0xff]
    %v761 = vld [vmem:[%s729 + $0xf8] sm:$0xff]
    %v762 = vld [vmem:[%s729 + $0x100] sm:$0xff]
    %v763 = vld [vmem:[%s729 + $0x108] sm:$0xff]
    %v764 = vld [vmem:[%s729 + $0x110] sm:$0xff]
    %v765 = vld [vmem:[%s729 + $0x118] sm:$0xff]
    %v766 = vld [vmem:[%s729 + $0x120] sm:$0xff]
    %v767 = vld [vmem:[%s729 + $0x128] sm:$0xff]
    %v768 = vld [vmem:[%s729 + $0x130] sm:$0xff]
    %v769 = vld [vmem:[%s729 + $0x138] sm:$0xff]
    %v770 = vld [vmem:[%s729 + $0x140] sm:$0xff]
    %v771 = vld [vmem:[%s729 + $0x148] sm:$0xff]
    %v772 = vld [vmem:[%s729 + $0x150] sm:$0xff]
    %v773 = vld [vmem:[%s729 + $0x158] sm:$0xff]
    %v774 = vld [vmem:[%s729 + $0x160] sm:$0xff]
    %v775 = vld [vmem:[%s729 + $0x168] sm:$0xff]
    %v776 = vld [vmem:[%s729 + $0x170] sm:$0xff]
    %v777 = vld [vmem:[%s729 + $0x178] sm:$0xff]
    %778 = vmatpush.msra.mxu0 %v745
    %779 = vmatpush.msra.mxu0 %v744
    %780 = vmatpush.msra.mxu0 %v743
    %781 = vmatpush.msra.mxu0 %v742
    %782 = vmatpush.msra.mxu0 %v741
    %783 = vmatpush.msra.mxu0 %v740
    %784 = vmatpush.msra.mxu0 %v739
    %785 = vmatpush.msra.mxu0 %v738
    %786 = vmatpush.msra.mxu0 %v737
    %787 = vmatpush.msra.mxu0 %v736
    %788 = vmatpush.msra.mxu0 %v735
    %789 = vmatpush.msra.mxu0 %v734
    %790 = vmatpush.msra.mxu0 %v733
    %791 = vmatpush.msra.mxu0 %v732
    %792 = vmatpush.msra.mxu0 %v731
    %793 = vmatpush.msra.mxu0 %v730
    %794 = vmatmul.f32.gmra.mxu0 %v711
    %v795 = vpop.f32.mrf.mxu0
    %v796 = vadd.f32 0.0, %v795
    %797 = vmatmul.f32.gmra.mxu0 %v712
    %v798 = vpop.f32.mrf.mxu0
    %v799 = vadd.f32 0.0, %v798
    %800 = vmatmul.f32.gmra.mxu0 %v713
    %v801 = vpop.f32.mrf.mxu0
    %v802 = vadd.f32 0.0, %v801
    %803 = vmatmul.f32.gmra.mxu0 %v714
    %v804 = vpop.f32.mrf.mxu0
    %v805 = vadd.f32 0.0, %v804
    %806 = vdwg.mxu0
    %807 = vmatpush.msra.mxu0 %v761
    %808 = vmatpush.msra.mxu0 %v760
    %809 = vmatpush.msra.mxu0 %v759
    %810 = vmatpush.msra.mxu0 %v758
    %811 = vmatpush.msra.mxu0 %v757
    %812 = vmatpush.msra.mxu0 %v756
    %813 = vmatpush.msra.mxu0 %v755
    %814 = vmatpush.msra.mxu0 %v754
    %815 = vmatpush.msra.mxu0 %v753
    %816 = vmatpush.msra.mxu0 %v752
    %817 = vmatpush.msra.mxu0 %v751
    %818 = vmatpush.msra.mxu0 %v750
    %819 = vmatpush.msra.mxu0 %v749
    %820 = vmatpush.msra.mxu0 %v748
    %821 = vmatpush.msra.mxu0 %v747
    %822 = vmatpush.msra.mxu0 %v746
    %823 = vmatmul.f32.gmra.mxu0 %v696
    %v824 = vpop.f32.mrf.mxu0
    %v825 = vadd.f32 %v796, %v824
    %826 = vmatmul.f32.gmra.mxu0 %v697
    %v827 = vpop.f32.mrf.mxu0
    %v828 = vadd.f32 %v799, %v827
    %829 = vmatmul.f32.gmra.mxu0 %v698
    %v830 = vpop.f32.mrf.mxu0
    %v831 = vadd.f32 %v802, %v830
    %832 = vmatmul.f32.gmra.mxu0 %v699
    %v833 = vpop.f32.mrf.mxu0
    %v834 = vadd.f32 %v805, %v833
    %835 = vdwg.mxu0
    %836 = vmatpush.msra.mxu0 %v777
    %837 = vmatpush.msra.mxu0 %v776
    %838 = vmatpush.msra.mxu0 %v775
    %839 = vmatpush.msra.mxu0 %v774
    %840 = vmatpush.msra.mxu0 %v773
    %841 = vmatpush.msra.mxu0 %v772
    %842 = vmatpush.msra.mxu0 %v771
    %843 = vmatpush.msra.mxu0 %v770
    %844 = vmatpush.msra.mxu0 %v769
    %845 = vmatpush.msra.mxu0 %v768
    %846 = vmatpush.msra.mxu0 %v767
    %847 = vmatpush.msra.mxu0 %v766
    %848 = vmatpush.msra.mxu0 %v765
    %849 = vmatpush.msra.mxu0 %v764
    %850 = vmatpush.msra.mxu0 %v763
    %851 = vmatpush.msra.mxu0 %v762
    %852 = vmatmul.f32.gmra.mxu0 %v724
    %v853 = vpop.f32.mrf.mxu0
    %v854 = vadd.f32 %v825, %v853
    %855 = vmatmul.f32.gmra.mxu0 %v725
    %v856 = vpop.f32.mrf.mxu0
    %v857 = vadd.f32 %v828, %v856
    %858 = vmatmul.f32.gmra.mxu0 %v726
    %v859 = vpop.f32.mrf.mxu0
    %v860 = vadd.f32 %v831, %v859
    %861 = vmatmul.f32.gmra.mxu0 %v727
    %v862 = vpop.f32.mrf.mxu0
    %v863 = vadd.f32 %v834, %v862
    %864 = vdwg.mxu0
    %v865 = vadd.f32 %v854, %v857
    %v866 = vrot.slane %v865, 4
    %v867 = vadd.f32 %v865, %v866
    %v868 = vrot.slane %v867, 2
    %v869 = vadd.f32 %v867, %v868
    %v870 = vrot.slane %v869, 1
    %v871 = vadd.f32 %v869, %v870
    %v872 = vmul.f32 %v854, %v854
    %v873 = vmul.f32 %v857, %v857
    %v874 = vadd.f32 %v872, %v873
    %v875 = vrot.slane %v874, 4
    %v876 = vadd.f32 %v874, %v875
    %v877 = vrot.slane %v876, 2
    %v878 = vadd.f32 %v876, %v877
    %v879 = vrot.slane %v878, 1
    %v880 = vadd.f32 %v878, %v879
    %v881 = vadd.f32 %v860, %v863
    %v882 = vrot.slane %v881, 4
    %v883 = vadd.f32 %v881, %v882
    %v884 = vrot.slane %v883, 2
    %v885 = vadd.f32 %v883, %v884
    %v886 = vrot.slane %v885, 1
    %v887 = vadd.f32 %v885, %v886
    %v888 = vmul.f32 %v860, %v860
    %v889 = vmul.f32 %v863, %v863
    %v890 = vadd.f32 %v888, %v889
    %v891 = vrot.slane %v890, 4
    %v892 = vadd.f32 %v890, %v891
    %v893 = vrot.slane %v892, 2
    %v894 = vadd.f32 %v892, %v893
    %v895 = vrot.slane %v894, 1
    %v896 = vadd.f32 %v894, %v895
    %vm897 = vcmask 1040384
    %v898 = vsel %vm897, %v871, %v887
    %vm899 = vcmask 1041408
    %v900 = vsel %vm899, %v898, %v880
    %vm901 = vcmask 1042432
    %v902 = vsel %vm901, %v900, %v896
    %903 = vmatpush.msra.mxu0 %v35
    %904 = vmatpush.msra.mxu0 %v34
    %905 = vmatpush.msra.mxu0 %v33
    %906 = vmatpush.msra.mxu0 %v32
    %907 = vmatpush.msra.mxu0 %v31
    %908 = vmatpush.msra.mxu0 %v30
    %909 = vmatpush.msra.mxu0 %v29
    %910 = vmatpush.msra.mxu0 %v28
    %911 = vmatpush.msra.mxu0 %v27
    %912 = vmatpush.msra.mxu0 %v26
    %913 = vmatpush.msra.mxu0 %v25
    %914 = vmatpush.msra.mxu0 %v24
    %915 = vmatpush.msra.mxu0 %v23
    %916 = vmatpush.msra.mxu0 %v22
    %917 = vmatpush.msra.mxu0 %v21
    %918 = vmatpush.msra.mxu0 %v20
    %919 = vmatmul.f32.gmra.mxu0 %v902
    %v920 = vpop.f32.mrf.mxu0
    %v921 = vadd.f32 0.0, %v920
    %922 = vdwg.mxu0
    %v923 = vmul.f32 %v921, 0.00390625
    %v924 = vmul.f32 %v923, %v923
    %v926 = vrot.slane %v924, 6
    %v928 = vsub.f32 %v923, %v926
    %v929 = vadd.f32 %v928, 1e-05
    %v930 = vrsqrt.pop %v929
    %v931 = vmul.f32 %v930, %v929
    %v932 = vmul.f32 %v931, %v930
    %v933 = vmul.f32 0.5, %v932
    %v934 = vsub.f32 1.5, %v933
    %v935 = vmul.f32 %v930, %v934
    %vm936 = vweird.f32 %v929
    %vm937 = vweird.f32 %v930
    %vm938 = vmor %vm936, %vm937
    %v939 = vsel %vm938, %v930, %v935
    %v940 = vsub.f32 0.0, %v923
    %v942 = vrot.slane %v939, 2
    %v944 = vmul.f32 %v940, %v942
    %v946 = vrot.slane %v944, 6
    %v948 = vsel %vm899, %v942, %v946
    %vm949 = vcmask 64512
    %v951 = vsel %vm949, %v948, 0
    %953 = vmatpush.msra.mxu0 0.0
    %954 = vmatpush.msra.mxu0 0.0
    %955 = vmatpush.msra.mxu0 0.0
    %956 = vmatpush.msra.mxu0 0.0
    %957 = vmatpush.msra.mxu0 0.0
    %958 = vmatpush.msra.mxu0 0.0
    %959 = vmatpush.msra.mxu0 0.0
    %960 = vmatpush.msra.mxu0 0.0
    %961 = vmatpush.msra.mxu0 0.0
    %962 = vmatpush.msra.mxu0 0.0
    %963 = vmatpush.msra.mxu0 0.0
    %964 = vmatpush.msra.mxu0 0.0
    %965 = vmatpush.msra.mxu0 0.0
    %966 = vmatpush.msra.mxu0 0.0
    %967 = vmatpush.msra.mxu0 0.0
    %968 = vmatpush.msra.mxu0 %v36
    %969 = vmatmul.f32.gmra.mxu0 %v951
    %v970 = vpop.f32.mrf.mxu0
    %v971 = vadd.f32 0.0, %v970
    %972 = vdwg.mxu0
    %v973 = vperm.slane %v971, 0
    %v974 = vmul.f32 %v854, %v973
    %v975 = vmul.f32 %v857, %v973
    %v976 = vperm.slane %v971, 2
    %v977 = vadd.f32 %v974, %v976
    %v978 = vadd.f32 %v975, %v976
    %v979 = vperm.slane %v971, 1
    %v980 = vmul.f32 %v860, %v979
    %v981 = vmul.f32 %v863, %v979
    %v982 = vperm.slane %v971, 3
    %v983 = vadd.f32 %v980, %v982
    %v984 = vadd.f32 %v981, %v982
    %v985 = vmax.f32 %v977, 0.0
    %v986 = vmax.f32 %v978, 0.0
    %v987 = vmax.f32 %v983, 0.0
    %v988 = vmax.f32 %v984, 0.0
    %s989 = sadd.s32 %s701, 1
    %v990 = vrot.slane %v985, 7
    %v991 = vrot.slane %v986, 7
    %v992 = vrot.slane %v987, 7
    %v993 = vrot.slane %v988, 7
    %v994 = vsel %vm706, %v992, %v993
    %v995 = vsel %vm706, %v991, %v992
    %v996 = vsel %vm706, %v990, %v991
    %v997 = vsel %vm706, %v993, %v990
    %v998 = vsel %vm98, 0.0, %v997
    %v999 = vsel %vm99, 0.0, %v996
    %v1000 = vsel %vm100, 0.0, %v995
    %v1001 = vsel %vm101, 0.0, %v994
    %v1002 = vrot.slane %v985, 1
    %v1003 = vrot.slane %v986, 1
    %v1004 = vrot.slane %v987, 1
    %v1005 = vrot.slane %v988, 1
    %v1006 = vsel %vm719, %v1004, %v1005
    %v1007 = vsel %vm719, %v1003, %v1004
    %v1008 = vsel %vm719, %v1002, %v1003
    %v1009 = vsel %vm719, %v1005, %v1002
    %v1010 = vsel %vm102, 0.0, %v1008
    %v1011 = vsel %vm103, 0.0, %v1007
    %v1012 = vsel %vm104, 0.0, %v1006
    %v1013 = vsel %vm105, 0.0, %v1009
    %s1014 = smul.u32 %s989, 384
    %s1015 = scalar_lea.vmem %s2, %s1014
    %v1016 = vld [vmem:[%s1015] sm:$0xff]
    %v1017 = vld [vmem:[%s1015 + $0x8] sm:$0xff]
    %v1018 = vld [vmem:[%s1015 + $0x10] sm:$0xff]
    %v1019 = vld [vmem:[%s1015 + $0x18] sm:$0xff]
    %v1020 = vld [vmem:[%s1015 + $0x20] sm:$0xff]
    %v1021 = vld [vmem:[%s1015 + $0x28] sm:$0xff]
    %v1022 = vld [vmem:[%s1015 + $0x30] sm:$0xff]
    %v1023 = vld [vmem:[%s1015 + $0x38] sm:$0xff]
    %v1024 = vld [vmem:[%s1015 + $0x40] sm:$0xff]
    %v1025 = vld [vmem:[%s1015 + $0x48] sm:$0xff]
    %v1026 = vld [vmem:[%s1015 + $0x50] sm:$0xff]
    %v1027 = vld [vmem:[%s1015 + $0x58] sm:$0xff]
    %v1028 = vld [vmem:[%s1015 + $0x60] sm:$0xff]
    %v1029 = vld [vmem:[%s1015 + $0x68] sm:$0xff]
    %v1030 = vld [vmem:[%s1015 + $0x70] sm:$0xff]
    %v1031 = vld [vmem:[%s1015 + $0x78] sm:$0xff]
    %v1032 = vld [vmem:[%s1015 + $0x80] sm:$0xff]
    %v1033 = vld [vmem:[%s1015 + $0x88] sm:$0xff]
    %v1034 = vld [vmem:[%s1015 + $0x90] sm:$0xff]
    %v1035 = vld [vmem:[%s1015 + $0x98] sm:$0xff]
    %v1036 = vld [vmem:[%s1015 + $0xa0] sm:$0xff]
    %v1037 = vld [vmem:[%s1015 + $0xa8] sm:$0xff]
    %v1038 = vld [vmem:[%s1015 + $0xb0] sm:$0xff]
    %v1039 = vld [vmem:[%s1015 + $0xb8] sm:$0xff]
    %v1040 = vld [vmem:[%s1015 + $0xc0] sm:$0xff]
    %v1041 = vld [vmem:[%s1015 + $0xc8] sm:$0xff]
    %v1042 = vld [vmem:[%s1015 + $0xd0] sm:$0xff]
    %v1043 = vld [vmem:[%s1015 + $0xd8] sm:$0xff]
    %v1044 = vld [vmem:[%s1015 + $0xe0] sm:$0xff]
    %v1045 = vld [vmem:[%s1015 + $0xe8] sm:$0xff]
    %v1046 = vld [vmem:[%s1015 + $0xf0] sm:$0xff]
    %v1047 = vld [vmem:[%s1015 + $0xf8] sm:$0xff]
    %v1048 = vld [vmem:[%s1015 + $0x100] sm:$0xff]
    %v1049 = vld [vmem:[%s1015 + $0x108] sm:$0xff]
    %v1050 = vld [vmem:[%s1015 + $0x110] sm:$0xff]
    %v1051 = vld [vmem:[%s1015 + $0x118] sm:$0xff]
    %v1052 = vld [vmem:[%s1015 + $0x120] sm:$0xff]
    %v1053 = vld [vmem:[%s1015 + $0x128] sm:$0xff]
    %v1054 = vld [vmem:[%s1015 + $0x130] sm:$0xff]
    %v1055 = vld [vmem:[%s1015 + $0x138] sm:$0xff]
    %v1056 = vld [vmem:[%s1015 + $0x140] sm:$0xff]
    %v1057 = vld [vmem:[%s1015 + $0x148] sm:$0xff]
    %v1058 = vld [vmem:[%s1015 + $0x150] sm:$0xff]
    %v1059 = vld [vmem:[%s1015 + $0x158] sm:$0xff]
    %v1060 = vld [vmem:[%s1015 + $0x160] sm:$0xff]
    %v1061 = vld [vmem:[%s1015 + $0x168] sm:$0xff]
    %v1062 = vld [vmem:[%s1015 + $0x170] sm:$0xff]
    %v1063 = vld [vmem:[%s1015 + $0x178] sm:$0xff]
    %1064 = vmatpush.msra.mxu0 %v1031
    %1065 = vmatpush.msra.mxu0 %v1030
    %1066 = vmatpush.msra.mxu0 %v1029
    %1067 = vmatpush.msra.mxu0 %v1028
    %1068 = vmatpush.msra.mxu0 %v1027
    %1069 = vmatpush.msra.mxu0 %v1026
    %1070 = vmatpush.msra.mxu0 %v1025
    %1071 = vmatpush.msra.mxu0 %v1024
    %1072 = vmatpush.msra.mxu0 %v1023
    %1073 = vmatpush.msra.mxu0 %v1022
    %1074 = vmatpush.msra.mxu0 %v1021
    %1075 = vmatpush.msra.mxu0 %v1020
    %1076 = vmatpush.msra.mxu0 %v1019
    %1077 = vmatpush.msra.mxu0 %v1018
    %1078 = vmatpush.msra.mxu0 %v1017
    %1079 = vmatpush.msra.mxu0 %v1016
    %1080 = vmatmul.f32.gmra.mxu0 %v998
    %v1081 = vpop.f32.mrf.mxu0
    %v1082 = vadd.f32 0.0, %v1081
    %1083 = vmatmul.f32.gmra.mxu0 %v999
    %v1084 = vpop.f32.mrf.mxu0
    %v1085 = vadd.f32 0.0, %v1084
    %1086 = vmatmul.f32.gmra.mxu0 %v1000
    %v1087 = vpop.f32.mrf.mxu0
    %v1088 = vadd.f32 0.0, %v1087
    %1089 = vmatmul.f32.gmra.mxu0 %v1001
    %v1090 = vpop.f32.mrf.mxu0
    %v1091 = vadd.f32 0.0, %v1090
    %1092 = vdwg.mxu0
    %1093 = vmatpush.msra.mxu0 %v1047
    %1094 = vmatpush.msra.mxu0 %v1046
    %1095 = vmatpush.msra.mxu0 %v1045
    %1096 = vmatpush.msra.mxu0 %v1044
    %1097 = vmatpush.msra.mxu0 %v1043
    %1098 = vmatpush.msra.mxu0 %v1042
    %1099 = vmatpush.msra.mxu0 %v1041
    %1100 = vmatpush.msra.mxu0 %v1040
    %1101 = vmatpush.msra.mxu0 %v1039
    %1102 = vmatpush.msra.mxu0 %v1038
    %1103 = vmatpush.msra.mxu0 %v1037
    %1104 = vmatpush.msra.mxu0 %v1036
    %1105 = vmatpush.msra.mxu0 %v1035
    %1106 = vmatpush.msra.mxu0 %v1034
    %1107 = vmatpush.msra.mxu0 %v1033
    %1108 = vmatpush.msra.mxu0 %v1032
    %1109 = vmatmul.f32.gmra.mxu0 %v985
    %v1110 = vpop.f32.mrf.mxu0
    %v1111 = vadd.f32 %v1082, %v1110
    %1112 = vmatmul.f32.gmra.mxu0 %v986
    %v1113 = vpop.f32.mrf.mxu0
    %v1114 = vadd.f32 %v1085, %v1113
    %1115 = vmatmul.f32.gmra.mxu0 %v987
    %v1116 = vpop.f32.mrf.mxu0
    %v1117 = vadd.f32 %v1088, %v1116
    %1118 = vmatmul.f32.gmra.mxu0 %v988
    %v1119 = vpop.f32.mrf.mxu0
    %v1120 = vadd.f32 %v1091, %v1119
    %1121 = vdwg.mxu0
    %1122 = vmatpush.msra.mxu0 %v1063
    %1123 = vmatpush.msra.mxu0 %v1062
    %1124 = vmatpush.msra.mxu0 %v1061
    %1125 = vmatpush.msra.mxu0 %v1060
    %1126 = vmatpush.msra.mxu0 %v1059
    %1127 = vmatpush.msra.mxu0 %v1058
    %1128 = vmatpush.msra.mxu0 %v1057
    %1129 = vmatpush.msra.mxu0 %v1056
    %1130 = vmatpush.msra.mxu0 %v1055
    %1131 = vmatpush.msra.mxu0 %v1054
    %1132 = vmatpush.msra.mxu0 %v1053
    %1133 = vmatpush.msra.mxu0 %v1052
    %1134 = vmatpush.msra.mxu0 %v1051
    %1135 = vmatpush.msra.mxu0 %v1050
    %1136 = vmatpush.msra.mxu0 %v1049
    %1137 = vmatpush.msra.mxu0 %v1048
    %1138 = vmatmul.f32.gmra.mxu0 %v1010
    %v1139 = vpop.f32.mrf.mxu0
    %v1140 = vadd.f32 %v1111, %v1139
    %1141 = vmatmul.f32.gmra.mxu0 %v1011
    %v1142 = vpop.f32.mrf.mxu0
    %v1143 = vadd.f32 %v1114, %v1142
    %1144 = vmatmul.f32.gmra.mxu0 %v1012
    %v1145 = vpop.f32.mrf.mxu0
    %v1146 = vadd.f32 %v1117, %v1145
    %1147 = vmatmul.f32.gmra.mxu0 %v1013
    %v1148 = vpop.f32.mrf.mxu0
    %v1149 = vadd.f32 %v1120, %v1148
    %1150 = vdwg.mxu0
    %v1151 = vadd.f32 %v1140, %v1143
    %v1152 = vrot.slane %v1151, 4
    %v1153 = vadd.f32 %v1151, %v1152
    %v1154 = vrot.slane %v1153, 2
    %v1155 = vadd.f32 %v1153, %v1154
    %v1156 = vrot.slane %v1155, 1
    %v1157 = vadd.f32 %v1155, %v1156
    %v1158 = vmul.f32 %v1140, %v1140
    %v1159 = vmul.f32 %v1143, %v1143
    %v1160 = vadd.f32 %v1158, %v1159
    %v1161 = vrot.slane %v1160, 4
    %v1162 = vadd.f32 %v1160, %v1161
    %v1163 = vrot.slane %v1162, 2
    %v1164 = vadd.f32 %v1162, %v1163
    %v1165 = vrot.slane %v1164, 1
    %v1166 = vadd.f32 %v1164, %v1165
    %v1167 = vadd.f32 %v1146, %v1149
    %v1168 = vrot.slane %v1167, 4
    %v1169 = vadd.f32 %v1167, %v1168
    %v1170 = vrot.slane %v1169, 2
    %v1171 = vadd.f32 %v1169, %v1170
    %v1172 = vrot.slane %v1171, 1
    %v1173 = vadd.f32 %v1171, %v1172
    %v1174 = vmul.f32 %v1146, %v1146
    %v1175 = vmul.f32 %v1149, %v1149
    %v1176 = vadd.f32 %v1174, %v1175
    %v1177 = vrot.slane %v1176, 4
    %v1178 = vadd.f32 %v1176, %v1177
    %v1179 = vrot.slane %v1178, 2
    %v1180 = vadd.f32 %v1178, %v1179
    %v1181 = vrot.slane %v1180, 1
    %v1182 = vadd.f32 %v1180, %v1181
    %v1183 = vsel %vm897, %v1157, %v1173
    %v1184 = vsel %vm899, %v1183, %v1166
    %v1185 = vsel %vm901, %v1184, %v1182
    %1186 = vmatpush.msra.mxu0 %v35
    %1187 = vmatpush.msra.mxu0 %v34
    %1188 = vmatpush.msra.mxu0 %v33
    %1189 = vmatpush.msra.mxu0 %v32
    %1190 = vmatpush.msra.mxu0 %v31
    %1191 = vmatpush.msra.mxu0 %v30
    %1192 = vmatpush.msra.mxu0 %v29
    %1193 = vmatpush.msra.mxu0 %v28
    %1194 = vmatpush.msra.mxu0 %v27
    %1195 = vmatpush.msra.mxu0 %v26
    %1196 = vmatpush.msra.mxu0 %v25
    %1197 = vmatpush.msra.mxu0 %v24
    %1198 = vmatpush.msra.mxu0 %v23
    %1199 = vmatpush.msra.mxu0 %v22
    %1200 = vmatpush.msra.mxu0 %v21
    %1201 = vmatpush.msra.mxu0 %v20
    %1202 = vmatmul.f32.gmra.mxu0 %v1185
    %v1203 = vpop.f32.mrf.mxu0
    %v1204 = vadd.f32 0.0, %v1203
    %1205 = vdwg.mxu0
    %v1206 = vmul.f32 %v1204, 0.00390625
    %v1207 = vmul.f32 %v1206, %v1206
    %v1209 = vrot.slane %v1207, 6
    %v1211 = vsub.f32 %v1206, %v1209
    %v1212 = vadd.f32 %v1211, 1e-05
    %v1213 = vrsqrt.pop %v1212
    %v1214 = vmul.f32 %v1213, %v1212
    %v1215 = vmul.f32 %v1214, %v1213
    %v1216 = vmul.f32 0.5, %v1215
    %v1217 = vsub.f32 1.5, %v1216
    %v1218 = vmul.f32 %v1213, %v1217
    %vm1219 = vweird.f32 %v1212
    %vm1220 = vweird.f32 %v1213
    %vm1221 = vmor %vm1219, %vm1220
    %v1222 = vsel %vm1221, %v1213, %v1218
    %v1223 = vsub.f32 0.0, %v1206
    %v1225 = vrot.slane %v1222, 2
    %v1227 = vmul.f32 %v1223, %v1225
    %v1229 = vrot.slane %v1227, 6
    %v1231 = vsel %vm899, %v1225, %v1229
    %v1233 = vsel %vm949, %v1231, 0
    %1235 = vmatpush.msra.mxu0 0.0
    %1236 = vmatpush.msra.mxu0 0.0
    %1237 = vmatpush.msra.mxu0 0.0
    %1238 = vmatpush.msra.mxu0 0.0
    %1239 = vmatpush.msra.mxu0 0.0
    %1240 = vmatpush.msra.mxu0 0.0
    %1241 = vmatpush.msra.mxu0 0.0
    %1242 = vmatpush.msra.mxu0 0.0
    %1243 = vmatpush.msra.mxu0 0.0
    %1244 = vmatpush.msra.mxu0 0.0
    %1245 = vmatpush.msra.mxu0 0.0
    %1246 = vmatpush.msra.mxu0 0.0
    %1247 = vmatpush.msra.mxu0 0.0
    %1248 = vmatpush.msra.mxu0 0.0
    %1249 = vmatpush.msra.mxu0 0.0
    %1250 = vmatpush.msra.mxu0 %v36
    %1251 = vmatmul.f32.gmra.mxu0 %v1233
    %v1252 = vpop.f32.mrf.mxu0
    %v1253 = vadd.f32 0.0, %v1252
    %1254 = vdwg.mxu0
    %v1255 = vperm.slane %v1253, 0
    %v1256 = vmul.f32 %v1140, %v1255
    %v1257 = vmul.f32 %v1143, %v1255
    %v1258 = vperm.slane %v1253, 2
    %v1259 = vadd.f32 %v1256, %v1258
    %v1260 = vadd.f32 %v1257, %v1258
    %v1261 = vperm.slane %v1253, 1
    %v1262 = vmul.f32 %v1146, %v1261
    %v1263 = vmul.f32 %v1149, %v1261
    %v1264 = vperm.slane %v1253, 3
    %v1265 = vadd.f32 %v1262, %v1264
    %v1266 = vadd.f32 %v1263, %v1264
    %v1267 = vadd.f32 %v696, %v1259
    %v1268 = vadd.f32 %v697, %v1260
    %v1269 = vadd.f32 %v698, %v1265
    %v1270 = vadd.f32 %v699, %v1266
  $region33: #{feature_extractor_with_info.1} parent=0 // loop_footer
    %s695 = sadd.s32 1, %s691
  $region34: #{feature_extractor_with_info.1} parent=0 // loop_footer_branch
    %690 = sbr.rel target = $region30
  $region35: #{feature_extractor_with_info.1} parent=0 // loop_exit
    _
  %v1271 = vadd.f32 %v696, %v41
  %v1272 = vadd.f32 %v697, %v42
  %v1273 = vadd.f32 %v698, %v43
  %v1274 = vadd.f32 %v699, %v44
  loop: start=0, step=1, limit=2
  $region36: #{feature_extractor_with_info.1} parent=0 // loop_pre_header
    _
  $region37: #{feature_extractor_with_info.1} parent=0 // loop_header
    %s1276 = sphi 0, %s1280
    %p1277 = scmp.ge.s32.totalorder %s1276, 2
    %v1281 = vphi %v1271, %v1852
    %v1282 = vphi %v1272, %v1853
    %v1283 = vphi %v1273, %v1854
    %v1284 = vphi %v1274, %v1855
  $region38: #{feature_extractor_with_info.1} parent=0 // loop_header_branch
    %1279 = sbr.rel (%p1277) target = $region42
  $region39: #{feature_extractor_with_info.1} parent=0 // loop_body
    %s1285 = sadd.s32 %s1276, 4
    %s1286 = smul.u32 %s1285, 2
    %v1287 = vrot.slane %v1281, 7
    %v1288 = vrot.slane %v1282, 7
    %v1289 = vrot.slane %v1283, 7
    %v1290 = vrot.slane %v1284, 7
    %vm1291 = vcmp.lt.s32.totalorder %v46, 1
    %v1292 = vsel %vm1291, %v1289, %v1290
    %v1293 = vsel %vm1291, %v1288, %v1289
    %v1294 = vsel %vm1291, %v1287, %v1288
    %v1295 = vsel %vm1291, %v1290, %v1287
    %v1296 = vsel %vm98, 0.0, %v1295
    %v1297 = vsel %vm99, 0.0, %v1294
    %v1298 = vsel %vm100, 0.0, %v1293
    %v1299 = vsel %vm101, 0.0, %v1292
    %v1300 = vrot.slane %v1281, 1
    %v1301 = vrot.slane %v1282, 1
    %v1302 = vrot.slane %v1283, 1
    %v1303 = vrot.slane %v1284, 1
    %vm1304 = vcmp.lt.s32.totalorder %v46, 7
    %v1305 = vsel %vm1304, %v1302, %v1303
    %v1306 = vsel %vm1304, %v1301, %v1302
    %v1307 = vsel %vm1304, %v1300, %v1301
    %v1308 = vsel %vm1304, %v1303, %v1300
    %v1309 = vsel %vm102, 0.0, %v1307
    %v1310 = vsel %vm103, 0.0, %v1306
    %v1311 = vsel %vm104, 0.0, %v1305
    %v1312 = vsel %vm105, 0.0, %v1308
    %s1313 = smul.u32 %s1286, 384
    %s1314 = scalar_lea.vmem %s2, %s1313
    %v1315 = vld [vmem:[%s1314] sm:$0xff]
    %v1316 = vld [vmem:[%s1314 + $0x8] sm:$0xff]
    %v1317 = vld [vmem:[%s1314 + $0x10] sm:$0xff]
    %v1318 = vld [vmem:[%s1314 + $0x18] sm:$0xff]
    %v1319 = vld [vmem:[%s1314 + $0x20] sm:$0xff]
    %v1320 = vld [vmem:[%s1314 + $0x28] sm:$0xff]
    %v1321 = vld [vmem:[%s1314 + $0x30] sm:$0xff]
    %v1322 = vld [vmem:[%s1314 + $0x38] sm:$0xff]
    %v1323 = vld [vmem:[%s1314 + $0x40] sm:$0xff]
    %v1324 = vld [vmem:[%s1314 + $0x48] sm:$0xff]
    %v1325 = vld [vmem:[%s1314 + $0x50] sm:$0xff]
    %v1326 = vld [vmem:[%s1314 + $0x58] sm:$0xff]
    %v1327 = vld [vmem:[%s1314 + $0x60] sm:$0xff]
    %v1328 = vld [vmem:[%s1314 + $0x68] sm:$0xff]
    %v1329 = vld [vmem:[%s1314 + $0x70] sm:$0xff]
    %v1330 = vld [vmem:[%s1314 + $0x78] sm:$0xff]
    %v1331 = vld [vmem:[%s1314 + $0x80] sm:$0xff]
    %v1332 = vld [vmem:[%s1314 + $0x88] sm:$0xff]
    %v1333 = vld [vmem:[%s1314 + $0x90] sm:$0xff]
    %v1334 = vld [vmem:[%s1314 + $0x98] sm:$0xff]
    %v1335 = vld [vmem:[%s1314 + $0xa0] sm:$0xff]
    %v1336 = vld [vmem:[%s1314 + $0xa8] sm:$0xff]
    %v1337 = vld [vmem:[%s1314 + $0xb0] sm:$0xff]
    %v1338 = vld [vmem:[%s1314 + $0xb8] sm:$0xff]
    %v1339 = vld [vmem:[%s1314 + $0xc0] sm:$0xff]
    %v1340 = vld [vmem:[%s1314 + $0xc8] sm:$0xff]
    %v1341 = vld [vmem:[%s1314 + $0xd0] sm:$0xff]
    %v1342 = vld [vmem:[%s1314 + $0xd8] sm:$0xff]
    %v1343 = vld [vmem:[%s1314 + $0xe0] sm:$0xff]
    %v1344 = vld [vmem:[%s1314 + $0xe8] sm:$0xff]
    %v1345 = vld [vmem:[%s1314 + $0xf0] sm:$0xff]
    %v1346 = vld [vmem:[%s1314 + $0xf8] sm:$0xff]
    %v1347 = vld [vmem:[%s1314 + $0x100] sm:$0xff]
    %v1348 = vld [vmem:[%s1314 + $0x108] sm:$0xff]
    %v1349 = vld [vmem:[%s1314 + $0x110] sm:$0xff]
    %v1350 = vld [vmem:[%s1314 + $0x118] sm:$0xff]
    %v1351 = vld [vmem:[%s1314 + $0x120] sm:$0xff]
    %v1352 = vld [vmem:[%s1314 + $0x128] sm:$0xff]
    %v1353 = vld [vmem:[%s1314 + $0x130] sm:$0xff]
    %v1354 = vld [vmem:[%s1314 + $0x138] sm:$0xff]
    %v1355 = vld [vmem:[%s1314 + $0x140] sm:$0xff]
    %v1356 = vld [vmem:[%s1314 + $0x148] sm:$0xff]
    %v1357 = vld [vmem:[%s1314 + $0x150] sm:$0xff]
    %v1358 = vld [vmem:[%s1314 + $0x158] sm:$0xff]
    %v1359 = vld [vmem:[%s1314 + $0x160] sm:$0xff]
    %v1360 = vld [vmem:[%s1314 + $0x168] sm:$0xff]
    %v1361 = vld [vmem:[%s1314 + $0x170] sm:$0xff]
    %v1362 = vld [vmem:[%s1314 + $0x178] sm:$0xff]
    %1363 = vmatpush.msra.mxu0 %v1330
    %1364 = vmatpush.msra.mxu0 %v1329
    %1365 = vmatpush.msra.mxu0 %v1328
    %1366 = vmatpush.msra.mxu0 %v1327
    %1367 = vmatpush.msra.mxu0 %v1326
    %1368 = vmatpush.msra.mxu0 %v1325
    %1369 = vmatpush.msra.mxu0 %v1324
    %1370 = vmatpush.msra.mxu0 %v1323
    %1371 = vmatpush.msra.mxu0 %v1322
    %1372 = vmatpush.msra.mxu0 %v1321
    %1373 = vmatpush.msra.mxu0 %v1320
    %1374 = vmatpush.msra.mxu0 %v1319
    %1375 = vmatpush.msra.mxu0 %v1318
    %1376 = vmatpush.msra.mxu0 %v1317
    %1377 = vmatpush.msra.mxu0 %v1316
    %1378 = vmatpush.msra.mxu0 %v1315
    %1379 = vmatmul.f32.gmra.mxu0 %v1296
    %v1380 = vpop.f32.mrf.mxu0
    %v1381 = vadd.f32 0.0, %v1380
    %1382 = vmatmul.f32.gmra.mxu0 %v1297
    %v1383 = vpop.f32.mrf.mxu0
    %v1384 = vadd.f32 0.0, %v1383
    %1385 = vmatmul.f32.gmra.mxu0 %v1298
    %v1386 = vpop.f32.mrf.mxu0
    %v1387 = vadd.f32 0.0, %v1386
    %1388 = vmatmul.f32.gmra.mxu0 %v1299
    %v1389 = vpop.f32.mrf.mxu0
    %v1390 = vadd.f32 0.0, %v1389
    %1391 = vdwg.mxu0
    %1392 = vmatpush.msra.mxu0 %v1346
    %1393 = vmatpush.msra.mxu0 %v1345
    %1394 = vmatpush.msra.mxu0 %v1344
    %1395 = vmatpush.msra.mxu0 %v1343
    %1396 = vmatpush.msra.mxu0 %v1342
    %1397 = vmatpush.msra.mxu0 %v1341
    %1398 = vmatpush.msra.mxu0 %v1340
    %1399 = vmatpush.msra.mxu0 %v1339
    %1400 = vmatpush.msra.mxu0 %v1338
    %1401 = vmatpush.msra.mxu0 %v1337
    %1402 = vmatpush.msra.mxu0 %v1336
    %1403 = vmatpush.msra.mxu0 %v1335
    %1404 = vmatpush.msra.mxu0 %v1334
    %1405 = vmatpush.msra.mxu0 %v1333
    %1406 = vmatpush.msra.mxu0 %v1332
    %1407 = vmatpush.msra.mxu0 %v1331
    %1408 = vmatmul.f32.gmra.mxu0 %v1281
    %v1409 = vpop.f32.mrf.mxu0
    %v1410 = vadd.f32 %v1381, %v1409
    %1411 = vmatmul.f32.gmra.mxu0 %v1282
    %v1412 = vpop.f32.mrf.mxu0
    %v1413 = vadd.f32 %v1384, %v1412
    %1414 = vmatmul.f32.gmra.mxu0 %v1283
    %v1415 = vpop.f32.mrf.mxu0
    %v1416 = vadd.f32 %v1387, %v1415
    %1417 = vmatmul.f32.gmra.mxu0 %v1284
    %v1418 = vpop.f32.mrf.mxu0
    %v1419 = vadd.f32 %v1390, %v1418
    %1420 = vdwg.mxu0
    %1421 = vmatpush.msra.mxu0 %v1362
    %1422 = vmatpush.msra.mxu0 %v1361
    %1423 = vmatpush.msra.mxu0 %v1360
    %1424 = vmatpush.msra.mxu0 %v1359
    %1425 = vmatpush.msra.mxu0 %v1358
    %1426 = vmatpush.msra.mxu0 %v1357
    %1427 = vmatpush.msra.mxu0 %v1356
    %1428 = vmatpush.msra.mxu0 %v1355
    %1429 = vmatpush.msra.mxu0 %v1354
    %1430 = vmatpush.msra.mxu0 %v1353
    %1431 = vmatpush.msra.mxu0 %v1352
    %1432 = vmatpush.msra.mxu0 %v1351
    %1433 = vmatpush.msra.mxu0 %v1350
    %1434 = vmatpush.msra.mxu0 %v1349
    %1435 = vmatpush.msra.mxu0 %v1348
    %1436 = vmatpush.msra.mxu0 %v1347
    %1437 = vmatmul.f32.gmra.mxu0 %v1309
    %v1438 = vpop.f32.mrf.mxu0
    %v1439 = vadd.f32 %v1410, %v1438
    %1440 = vmatmul.f32.gmra.mxu0 %v1310
    %v1441 = vpop.f32.mrf.mxu0
    %v1442 = vadd.f32 %v1413, %v1441
    %1443 = vmatmul.f32.gmra.mxu0 %v1311
    %v1444 = vpop.f32.mrf.mxu0
    %v1445 = vadd.f32 %v1416, %v1444
    %1446 = vmatmul.f32.gmra.mxu0 %v1312
    %v1447 = vpop.f32.mrf.mxu0
    %v1448 = vadd.f32 %v1419, %v1447
    %1449 = vdwg.mxu0
    %v1450 = vadd.f32 %v1439, %v1442
    %v1451 = vrot.slane %v1450, 4
    %v1452 = vadd.f32 %v1450, %v1451
    %v1453 = vrot.slane %v1452, 2
    %v1454 = vadd.f32 %v1452, %v1453
    %v1455 = vrot.slane %v1454, 1
    %v1456 = vadd.f32 %v1454, %v1455
    %v1457 = vmul.f32 %v1439, %v1439
    %v1458 = vmul.f32 %v1442, %v1442
    %v1459 = vadd.f32 %v1457, %v1458
    %v1460 = vrot.slane %v1459, 4
    %v1461 = vadd.f32 %v1459, %v1460
    %v1462 = vrot.slane %v1461, 2
    %v1463 = vadd.f32 %v1461, %v1462
    %v1464 = vrot.slane %v1463, 1
    %v1465 = vadd.f32 %v1463, %v1464
    %v1466 = vadd.f32 %v1445, %v1448
    %v1467 = vrot.slane %v1466, 4
    %v1468 = vadd.f32 %v1466, %v1467
    %v1469 = vrot.slane %v1468, 2
    %v1470 = vadd.f32 %v1468, %v1469
    %v1471 = vrot.slane %v1470, 1
    %v1472 = vadd.f32 %v1470, %v1471
    %v1473 = vmul.f32 %v1445, %v1445
    %v1474 = vmul.f32 %v1448, %v1448
    %v1475 = vadd.f32 %v1473, %v1474
    %v1476 = vrot.slane %v1475, 4
    %v1477 = vadd.f32 %v1475, %v1476
    %v1478 = vrot.slane %v1477, 2
    %v1479 = vadd.f32 %v1477, %v1478
    %v1480 = vrot.slane %v1479, 1
    %v1481 = vadd.f32 %v1479, %v1480
    %vm1482 = vcmask 1040384
    %v1483 = vsel %vm1482, %v1456, %v1472
    %vm1484 = vcmask 1041408
    %v1485 = vsel %vm1484, %v1483, %v1465
    %vm1486 = vcmask 1042432
    %v1487 = vsel %vm1486, %v1485, %v1481
    %1488 = vmatpush.msra.mxu0 %v35
    %1489 = vmatpush.msra.mxu0 %v34
    %1490 = vmatpush.msra.mxu0 %v33
    %1491 = vmatpush.msra.mxu0 %v32
    %1492 = vmatpush.msra.mxu0 %v31
    %1493 = vmatpush.msra.mxu0 %v30
    %1494 = vmatpush.msra.mxu0 %v29
    %1495 = vmatpush.msra.mxu0 %v28
    %1496 = vmatpush.msra.mxu0 %v27
    %1497 = vmatpush.msra.mxu0 %v26
    %1498 = vmatpush.msra.mxu0 %v25
    %1499 = vmatpush.msra.mxu0 %v24
    %1500 = vmatpush.msra.mxu0 %v23
    %1501 = vmatpush.msra.mxu0 %v22
    %1502 = vmatpush.msra.mxu0 %v21
    %1503 = vmatpush.msra.mxu0 %v20
    %1504 = vmatmul.f32.gmra.mxu0 %v1487
    %v1505 = vpop.f32.mrf.mxu0
    %v1506 = vadd.f32 0.0, %v1505
    %1507 = vdwg.mxu0
    %v1508 = vmul.f32 %v1506, 0.00390625
    %v1509 = vmul.f32 %v1508, %v1508
    %v1511 = vrot.slane %v1509, 6
    %v1513 = vsub.f32 %v1508, %v1511
    %v1514 = vadd.f32 %v1513, 1e-05
    %v1515 = vrsqrt.pop %v1514
    %v1516 = vmul.f32 %v1515, %v1514
    %v1517 = vmul.f32 %v1516, %v1515
    %v1518 = vmul.f32 0.5, %v1517
    %v1519 = vsub.f32 1.5, %v1518
    %v1520 = vmul.f32 %v1515, %v1519
    %vm1521 = vweird.f32 %v1514
    %vm1522 = vweird.f32 %v1515
    %vm1523 = vmor %vm1521, %vm1522
    %v1524 = vsel %vm1523, %v1515, %v1520
    %v1525 = vsub.f32 0.0, %v1508
    %v1527 = vrot.slane %v1524, 2
    %v1529 = vmul.f32 %v1525, %v1527
    %v1531 = vrot.slane %v1529, 6
    %v1533 = vsel %vm1484, %v1527, %v1531
    %vm1534 = vcmask 64512
    %v1536 = vsel %vm1534, %v1533, 0
    %1538 = vmatpush.msra.mxu0 0.0
    %1539 = vmatpush.msra.mxu0 0.0
    %1540 = vmatpush.msra.mxu0 0.0
    %1541 = vmatpush.msra.mxu0 0.0
    %1542 = vmatpush.msra.mxu0 0.0
    %1543 = vmatpush.msra.mxu0 0.0
    %1544 = vmatpush.msra.mxu0 0.0
    %1545 = vmatpush.msra.mxu0 0.0
    %1546 = vmatpush.msra.mxu0 0.0
    %1547 = vmatpush.msra.mxu0 0.0
    %1548 = vmatpush.msra.mxu0 0.0
    %1549 = vmatpush.msra.mxu0 0.0
    %1550 = vmatpush.msra.mxu0 0.0
    %1551 = vmatpush.msra.mxu0 0.0
    %1552 = vmatpush.msra.mxu0 0.0
    %1553 = vmatpush.msra.mxu0 %v36
    %1554 = vmatmul.f32.gmra.mxu0 %v1536
    %v1555 = vpop.f32.mrf.mxu0
    %v1556 = vadd.f32 0.0, %v1555
    %1557 = vdwg.mxu0
    %v1558 = vperm.slane %v1556, 0
    %v1559 = vmul.f32 %v1439, %v1558
    %v1560 = vmul.f32 %v1442, %v1558
    %v1561 = vperm.slane %v1556, 2
    %v1562 = vadd.f32 %v1559, %v1561
    %v1563 = vadd.f32 %v1560, %v1561
    %v1564 = vperm.slane %v1556, 1
    %v1565 = vmul.f32 %v1445, %v1564
    %v1566 = vmul.f32 %v1448, %v1564
    %v1567 = vperm.slane %v1556, 3
    %v1568 = vadd.f32 %v1565, %v1567
    %v1569 = vadd.f32 %v1566, %v1567
    %v1570 = vmax.f32 %v1562, 0.0
    %v1571 = vmax.f32 %v1563, 0.0
    %v1572 = vmax.f32 %v1568, 0.0
    %v1573 = vmax.f32 %v1569, 0.0
    %s1574 = sadd.s32 %s1286, 1
    %v1575 = vrot.slane %v1570, 7
    %v1576 = vrot.slane %v1571, 7
    %v1577 = vrot.slane %v1572, 7
    %v1578 = vrot.slane %v1573, 7
    %v1579 = vsel %vm1291, %v1577, %v1578
    %v1580 = vsel %vm1291, %v1576, %v1577
    %v1581 = vsel %vm1291, %v1575, %v1576
    %v1582 = vsel %vm1291, %v1578, %v1575
    %v1583 = vsel %vm98, 0.0, %v1582
    %v1584 = vsel %vm99, 0.0, %v1581
    %v1585 = vsel %vm100, 0.0, %v1580
    %v1586 = vsel %vm101, 0.0, %v1579
    %v1587 = vrot.slane %v1570, 1
    %v1588 = vrot.slane %v1571, 1
    %v1589 = vrot.slane %v1572, 1
    %v1590 = vrot.slane %v1573, 1
    %v1591 = vsel %vm1304, %v1589, %v1590
    %v1592 = vsel %vm1304, %v1588, %v1589
    %v1593 = vsel %vm1304, %v1587, %v1588
    %v1594 = vsel %vm1304, %v1590, %v1587
    %v1595 = vsel %vm102, 0.0, %v1593
    %v1596 = vsel %vm103, 0.0, %v1592
    %v1597 = vsel %vm104, 0.0, %v1591
    %v1598 = vsel %vm105, 0.0, %v1594
    %s1599 = smul.u32 %s1574, 384
    %s1600 = scalar_lea.vmem %s2, %s1599
    %v1601 = vld [vmem:[%s1600] sm:$0xff]
    %v1602 = vld [vmem:[%s1600 + $0x8] sm:$0xff]
    %v1603 = vld [vmem:[%s1600 + $0x10] sm:$0xff]
    %v1604 = vld [vmem:[%s1600 + $0x18] sm:$0xff]
    %v1605 = vld [vmem:[%s1600 + $0x20] sm:$0xff]
    %v1606 = vld [vmem:[%s1600 + $0x28] sm:$0xff]
    %v1607 = vld [vmem:[%s1600 + $0x30] sm:$0xff]
    %v1608 = vld [vmem:[%s1600 + $0x38] sm:$0xff]
    %v1609 = vld [vmem:[%s1600 + $0x40] sm:$0xff]
    %v1610 = vld [vmem:[%s1600 + $0x48] sm:$0xff]
    %v1611 = vld [vmem:[%s1600 + $0x50] sm:$0xff]
    %v1612 = vld [vmem:[%s1600 + $0x58] sm:$0xff]
    %v1613 = vld [vmem:[%s1600 + $0x60] sm:$0xff]
    %v1614 = vld [vmem:[%s1600 + $0x68] sm:$0xff]
    %v1615 = vld [vmem:[%s1600 + $0x70] sm:$0xff]
    %v1616 = vld [vmem:[%s1600 + $0x78] sm:$0xff]
    %v1617 = vld [vmem:[%s1600 + $0x80] sm:$0xff]
    %v1618 = vld [vmem:[%s1600 + $0x88] sm:$0xff]
    %v1619 = vld [vmem:[%s1600 + $0x90] sm:$0xff]
    %v1620 = vld [vmem:[%s1600 + $0x98] sm:$0xff]
    %v1621 = vld [vmem:[%s1600 + $0xa0] sm:$0xff]
    %v1622 = vld [vmem:[%s1600 + $0xa8] sm:$0xff]
    %v1623 = vld [vmem:[%s1600 + $0xb0] sm:$0xff]
    %v1624 = vld [vmem:[%s1600 + $0xb8] sm:$0xff]
    %v1625 = vld [vmem:[%s1600 + $0xc0] sm:$0xff]
    %v1626 = vld [vmem:[%s1600 + $0xc8] sm:$0xff]
    %v1627 = vld [vmem:[%s1600 + $0xd0] sm:$0xff]
    %v1628 = vld [vmem:[%s1600 + $0xd8] sm:$0xff]
    %v1629 = vld [vmem:[%s1600 + $0xe0] sm:$0xff]
    %v1630 = vld [vmem:[%s1600 + $0xe8] sm:$0xff]
    %v1631 = vld [vmem:[%s1600 + $0xf0] sm:$0xff]
    %v1632 = vld [vmem:[%s1600 + $0xf8] sm:$0xff]
    %v1633 = vld [vmem:[%s1600 + $0x100] sm:$0xff]
    %v1634 = vld [vmem:[%s1600 + $0x108] sm:$0xff]
    %v1635 = vld [vmem:[%s1600 + $0x110] sm:$0xff]
    %v1636 = vld [vmem:[%s1600 + $0x118] sm:$0xff]
    %v1637 = vld [vmem:[%s1600 + $0x120] sm:$0xff]
    %v1638 = vld [vmem:[%s1600 + $0x128] sm:$0xff]
    %v1639 = vld [vmem:[%s1600 + $0x130] sm:$0xff]
    %v1640 = vld [vmem:[%s1600 + $0x138] sm:$0xff]
    %v1641 = vld [vmem:[%s1600 + $0x140] sm:$0xff]
    %v1642 = vld [vmem:[%s1600 + $0x148] sm:$0xff]
    %v1643 = vld [vmem:[%s1600 + $0x150] sm:$0xff]
    %v1644 = vld [vmem:[%s1600 + $0x158] sm:$0xff]
    %v1645 = vld [vmem:[%s1600 + $0x160] sm:$0xff]
    %v1646 = vld [vmem:[%s1600 + $0x168] sm:$0xff]
    %v1647 = vld [vmem:[%s1600 + $0x170] sm:$0xff]
    %v1648 = vld [vmem:[%s1600 + $0x178] sm:$0xff]
    %1649 = vmatpush.msra.mxu0 %v1616
    %1650 = vmatpush.msra.mxu0 %v1615
    %1651 = vmatpush.msra.mxu0 %v1614
    %1652 = vmatpush.msra.mxu0 %v1613
    %1653 = vmatpush.msra.mxu0 %v1612
    %1654 = vmatpush.msra.mxu0 %v1611
    %1655 = vmatpush.msra.mxu0 %v1610
    %1656 = vmatpush.msra.mxu0 %v1609
    %1657 = vmatpush.msra.mxu0 %v1608
    %1658 = vmatpush.msra.mxu0 %v1607
    %1659 = vmatpush.msra.mxu0 %v1606
    %1660 = vmatpush.msra.mxu0 %v1605
    %1661 = vmatpush.msra.mxu0 %v1604
    %1662 = vmatpush.msra.mxu0 %v1603
    %1663 = vmatpush.msra.mxu0 %v1602
    %1664 = vmatpush.msra.mxu0 %v1601
    %1665 = vmatmul.f32.gmra.mxu0 %v1583
    %v1666 = vpop.f32.mrf.mxu0
    %v1667 = vadd.f32 0.0, %v1666
    %1668 = vmatmul.f32.gmra.mxu0 %v1584
    %v1669 = vpop.f32.mrf.mxu0
    %v1670 = vadd.f32 0.0, %v1669
    %1671 = vmatmul.f32.gmra.mxu0 %v1585
    %v1672 = vpop.f32.mrf.mxu0
    %v1673 = vadd.f32 0.0, %v1672
    %1674 = vmatmul.f32.gmra.mxu0 %v1586
    %v1675 = vpop.f32.mrf.mxu0
    %v1676 = vadd.f32 0.0, %v1675
    %1677 = vdwg.mxu0
    %1678 = vmatpush.msra.mxu0 %v1632
    %1679 = vmatpush.msra.mxu0 %v1631
    %1680 = vmatpush.msra.mxu0 %v1630
    %1681 = vmatpush.msra.mxu0 %v1629
    %1682 = vmatpush.msra.mxu0 %v1628
    %1683 = vmatpush.msra.mxu0 %v1627
    %1684 = vmatpush.msra.mxu0 %v1626
    %1685 = vmatpush.msra.mxu0 %v1625
    %1686 = vmatpush.msra.mxu0 %v1624
    %1687 = vmatpush.msra.mxu0 %v1623
    %1688 = vmatpush.msra.mxu0 %v1622
    %1689 = vmatpush.msra.mxu0 %v1621
    %1690 = vmatpush.msra.mxu0 %v1620
    %1691 = vmatpush.msra.mxu0 %v1619
    %1692 = vmatpush.msra.mxu0 %v1618
    %1693 = vmatpush.msra.mxu0 %v1617
    %1694 = vmatmul.f32.gmra.mxu0 %v1570
    %v1695 = vpop.f32.mrf.mxu0
    %v1696 = vadd.f32 %v1667, %v1695
    %1697 = vmatmul.f32.gmra.mxu0 %v1571
    %v1698 = vpop.f32.mrf.mxu0
    %v1699 = vadd.f32 %v1670, %v1698
    %1700 = vmatmul.f32.gmra.mxu0 %v1572
    %v1701 = vpop.f32.mrf.mxu0
    %v1702 = vadd.f32 %v1673, %v1701
    %1703 = vmatmul.f32.gmra.mxu0 %v1573
    %v1704 = vpop.f32.mrf.mxu0
    %v1705 = vadd.f32 %v1676, %v1704
    %1706 = vdwg.mxu0
    %1707 = vmatpush.msra.mxu0 %v1648
    %1708 = vmatpush.msra.mxu0 %v1647
    %1709 = vmatpush.msra.mxu0 %v1646
    %1710 = vmatpush.msra.mxu0 %v1645
    %1711 = vmatpush.msra.mxu0 %v1644
    %1712 = vmatpush.msra.mxu0 %v1643
    %1713 = vmatpush.msra.mxu0 %v1642
    %1714 = vmatpush.msra.mxu0 %v1641
    %1715 = vmatpush.msra.mxu0 %v1640
    %1716 = vmatpush.msra.mxu0 %v1639
    %1717 = vmatpush.msra.mxu0 %v1638
    %1718 = vmatpush.msra.mxu0 %v1637
    %1719 = vmatpush.msra.mxu0 %v1636
    %1720 = vmatpush.msra.mxu0 %v1635
    %1721 = vmatpush.msra.mxu0 %v1634
    %1722 = vmatpush.msra.mxu0 %v1633
    %1723 = vmatmul.f32.gmra.mxu0 %v1595
    %v1724 = vpop.f32.mrf.mxu0
    %v1725 = vadd.f32 %v1696, %v1724
    %1726 = vmatmul.f32.gmra.mxu0 %v1596
    %v1727 = vpop.f32.mrf.mxu0
    %v1728 = vadd.f32 %v1699, %v1727
    %1729 = vmatmul.f32.gmra.mxu0 %v1597
    %v1730 = vpop.f32.mrf.mxu0
    %v1731 = vadd.f32 %v1702, %v1730
    %1732 = vmatmul.f32.gmra.mxu0 %v1598
    %v1733 = vpop.f32.mrf.mxu0
    %v1734 = vadd.f32 %v1705, %v1733
    %1735 = vdwg.mxu0
    %v1736 = vadd.f32 %v1725, %v1728
    %v1737 = vrot.slane %v1736, 4
    %v1738 = vadd.f32 %v1736, %v1737
    %v1739 = vrot.slane %v1738, 2
    %v1740 = vadd.f32 %v1738, %v1739
    %v1741 = vrot.slane %v1740, 1
    %v1742 = vadd.f32 %v1740, %v1741
    %v1743 = vmul.f32 %v1725, %v1725
    %v1744 = vmul.f32 %v1728, %v1728
    %v1745 = vadd.f32 %v1743, %v1744
    %v1746 = vrot.slane %v1745, 4
    %v1747 = vadd.f32 %v1745, %v1746
    %v1748 = vrot.slane %v1747, 2
    %v1749 = vadd.f32 %v1747, %v1748
    %v1750 = vrot.slane %v1749, 1
    %v1751 = vadd.f32 %v1749, %v1750
    %v1752 = vadd.f32 %v1731, %v1734
    %v1753 = vrot.slane %v1752, 4
    %v1754 = vadd.f32 %v1752, %v1753
    %v1755 = vrot.slane %v1754, 2
    %v1756 = vadd.f32 %v1754, %v1755
    %v1757 = vrot.slane %v1756, 1
    %v1758 = vadd.f32 %v1756, %v1757
    %v1759 = vmul.f32 %v1731, %v1731
    %v1760 = vmul.f32 %v1734, %v1734
    %v1761 = vadd.f32 %v1759, %v1760
    %v1762 = vrot.slane %v1761, 4
    %v1763 = vadd.f32 %v1761, %v1762
    %v1764 = vrot.slane %v1763, 2
    %v1765 = vadd.f32 %v1763, %v1764
    %v1766 = vrot.slane %v1765, 1
    %v1767 = vadd.f32 %v1765, %v1766
    %v1768 = vsel %vm1482, %v1742, %v1758
    %v1769 = vsel %vm1484, %v1768, %v1751
    %v1770 = vsel %vm1486, %v1769, %v1767
    %1771 = vmatpush.msra.mxu0 %v35
    %1772 = vmatpush.msra.mxu0 %v34
    %1773 = vmatpush.msra.mxu0 %v33
    %1774 = vmatpush.msra.mxu0 %v32
    %1775 = vmatpush.msra.mxu0 %v31
    %1776 = vmatpush.msra.mxu0 %v30
    %1777 = vmatpush.msra.mxu0 %v29
    %1778 = vmatpush.msra.mxu0 %v28
    %1779 = vmatpush.msra.mxu0 %v27
    %1780 = vmatpush.msra.mxu0 %v26
    %1781 = vmatpush.msra.mxu0 %v25
    %1782 = vmatpush.msra.mxu0 %v24
    %1783 = vmatpush.msra.mxu0 %v23
    %1784 = vmatpush.msra.mxu0 %v22
    %1785 = vmatpush.msra.mxu0 %v21
    %1786 = vmatpush.msra.mxu0 %v20
    %1787 = vmatmul.f32.gmra.mxu0 %v1770
    %v1788 = vpop.f32.mrf.mxu0
    %v1789 = vadd.f32 0.0, %v1788
    %1790 = vdwg.mxu0
    %v1791 = vmul.f32 %v1789, 0.00390625
    %v1792 = vmul.f32 %v1791, %v1791
    %v1794 = vrot.slane %v1792, 6
    %v1796 = vsub.f32 %v1791, %v1794
    %v1797 = vadd.f32 %v1796, 1e-05
    %v1798 = vrsqrt.pop %v1797
    %v1799 = vmul.f32 %v1798, %v1797
    %v1800 = vmul.f32 %v1799, %v1798
    %v1801 = vmul.f32 0.5, %v1800
    %v1802 = vsub.f32 1.5, %v1801
    %v1803 = vmul.f32 %v1798, %v1802
    %vm1804 = vweird.f32 %v1797
    %vm1805 = vweird.f32 %v1798
    %vm1806 = vmor %vm1804, %vm1805
    %v1807 = vsel %vm1806, %v1798, %v1803
    %v1808 = vsub.f32 0.0, %v1791
    %v1810 = vrot.slane %v1807, 2
    %v1812 = vmul.f32 %v1808, %v1810
    %v1814 = vrot.slane %v1812, 6
    %v1816 = vsel %vm1484, %v1810, %v1814
    %v1818 = vsel %vm1534, %v1816, 0
    %1820 = vmatpush.msra.mxu0 0.0
    %1821 = vmatpush.msra.mxu0 0.0
    %1822 = vmatpush.msra.mxu0 0.0
    %1823 = vmatpush.msra.mxu0 0.0
    %1824 = vmatpush.msra.mxu0 0.0
    %1825 = vmatpush.msra.mxu0 0.0
    %1826 = vmatpush.msra.mxu0 0.0
    %1827 = vmatpush.msra.mxu0 0.0
    %1828 = vmatpush.msra.mxu0 0.0
    %1829 = vmatpush.msra.mxu0 0.0
    %1830 = vmatpush.msra.mxu0 0.0
    %1831 = vmatpush.msra.mxu0 0.0
    %1832 = vmatpush.msra.mxu0 0.0
    %1833 = vmatpush.msra.mxu0 0.0
    %1834 = vmatpush.msra.mxu0 0.0
    %1835 = vmatpush.msra.mxu0 %v36
    %1836 = vmatmul.f32.gmra.mxu0 %v1818
    %v1837 = vpop.f32.mrf.mxu0
    %v1838 = vadd.f32 0.0, %v1837
    %1839 = vdwg.mxu0
    %v1840 = vperm.slane %v1838, 0
    %v1841 = vmul.f32 %v1725, %v1840
    %v1842 = vmul.f32 %v1728, %v1840
    %v1843 = vperm.slane %v1838, 2
    %v1844 = vadd.f32 %v1841, %v1843
    %v1845 = vadd.f32 %v1842, %v1843
    %v1846 = vperm.slane %v1838, 1
    %v1847 = vmul.f32 %v1731, %v1846
    %v1848 = vmul.f32 %v1734, %v1846
    %v1849 = vperm.slane %v1838, 3
    %v1850 = vadd.f32 %v1847, %v1849
    %v1851 = vadd.f32 %v1848, %v1849
    %v1852 = vadd.f32 %v1281, %v1844
    %v1853 = vadd.f32 %v1282, %v1845
    %v1854 = vadd.f32 %v1283, %v1850
    %v1855 = vadd.f32 %v1284, %v1851
  $region40: #{feature_extractor_with_info.1} parent=0 // loop_footer
    %s1280 = sadd.s32 1, %s1276
  $region41: #{feature_extractor_with_info.1} parent=0 // loop_footer_branch
    %1275 = sbr.rel target = $region37
  $region42: #{feature_extractor_with_info.1} parent=0 // loop_exit
    _
  %v1856 = vadd.f32 %v1281, %v41
  %v1857 = vadd.f32 %v1282, %v42
  %v1858 = vadd.f32 %v1283, %v43
  %v1859 = vadd.f32 %v1284, %v44
  loop: start=0, step=1, limit=2
  $region43: #{feature_extractor_with_info.1} parent=0 // loop_pre_header
    _
  $region44: #{feature_extractor_with_info.1} parent=0 // loop_header
    %s1861 = sphi 0, %s1865
    %p1862 = scmp.ge.s32.totalorder %s1861, 2
    %v1866 = vphi %v1856, %v2437
    %v1867 = vphi %v1857, %v2438
    %v1868 = vphi %v1858, %v2439
    %v1869 = vphi %v1859, %v2440
  $region45: #{feature_extractor_with_info.1} parent=0 // loop_header_branch
    %1864 = sbr.rel (%p1862) target = $region49
  $region46: #{feature_extractor_with_info.1} parent=0 // loop_body
    %s1870 = sadd.s32 %s1861, 6
    %s1871 = smul.u32 %s1870, 2
    %v1872 = vrot.slane %v1866, 7
    %v1873 = vrot.slane %v1867, 7
    %v1874 = vrot.slane %v1868, 7
    %v1875 = vrot.slane %v1869, 7
    %vm1876 = vcmp.lt.s32.totalorder %v46, 1
    %v1877 = vsel %vm1876, %v1874, %v1875
    %v1878 = vsel %vm1876, %v1873, %v1874
    %v1879 = vsel %vm1876, %v1872, %v1873
    %v1880 = vsel %vm1876, %v1875, %v1872
    %v1881 = vsel %vm98, 0.0, %v1880
    %v1882 = vsel %vm99, 0.0, %v1879
    %v1883 = vsel %vm100, 0.0, %v1878
    %v1884 = vsel %vm101, 0.0, %v1877
    %v1885 = vrot.slane %v1866, 1
    %v1886 = vrot.slane %v1867, 1
    %v1887 = vrot.slane %v1868, 1
    %v1888 = vrot.slane %v1869, 1
    %vm1889 = vcmp.lt.s32.totalorder %v46, 7
    %v1890 = vsel %vm1889, %v1887, %v1888
    %v1891 = vsel %vm1889, %v1886, %v1887
    %v1892 = vsel %vm1889, %v1885, %v1886
    %v1893 = vsel %vm1889, %v1888, %v1885
    %v1894 = vsel %vm102, 0.0, %v1892
    %v1895 = vsel %vm103, 0.0, %v1891
    %v1896 = vsel %vm104, 0.0, %v1890
    %v1897 = vsel %vm105, 0.0, %v1893
    %s1898 = smul.u32 %s1871, 384
    %s1899 = scalar_lea.vmem %s2, %s1898
    %v1900 = vld [vmem:[%s1899] sm:$0xff]
    %v1901 = vld [vmem:[%s1899 + $0x8] sm:$0xff]
    %v1902 = vld [vmem:[%s1899 + $0x10] sm:$0xff]
    %v1903 = vld [vmem:[%s1899 + $0x18] sm:$0xff]
    %v1904 = vld [vmem:[%s1899 + $0x20] sm:$0xff]
    %v1905 = vld [vmem:[%s1899 + $0x28] sm:$0xff]
    %v1906 = vld [vmem:[%s1899 + $0x30] sm:$0xff]
    %v1907 = vld [vmem:[%s1899 + $0x38] sm:$0xff]
    %v1908 = vld [vmem:[%s1899 + $0x40] sm:$0xff]
    %v1909 = vld [vmem:[%s1899 + $0x48] sm:$0xff]
    %v1910 = vld [vmem:[%s1899 + $0x50] sm:$0xff]
    %v1911 = vld [vmem:[%s1899 + $0x58] sm:$0xff]
    %v1912 = vld [vmem:[%s1899 + $0x60] sm:$0xff]
    %v1913 = vld [vmem:[%s1899 + $0x68] sm:$0xff]
    %v1914 = vld [vmem:[%s1899 + $0x70] sm:$0xff]
    %v1915 = vld [vmem:[%s1899 + $0x78] sm:$0xff]
    %v1916 = vld [vmem:[%s1899 + $0x80] sm:$0xff]
    %v1917 = vld [vmem:[%s1899 + $0x88] sm:$0xff]
    %v1918 = vld [vmem:[%s1899 + $0x90] sm:$0xff]
    %v1919 = vld [vmem:[%s1899 + $0x98] sm:$0xff]
    %v1920 = vld [vmem:[%s1899 + $0xa0] sm:$0xff]
    %v1921 = vld [vmem:[%s1899 + $0xa8] sm:$0xff]
    %v1922 = vld [vmem:[%s1899 + $0xb0] sm:$0xff]
    %v1923 = vld [vmem:[%s1899 + $0xb8] sm:$0xff]
    %v1924 = vld [vmem:[%s1899 + $0xc0] sm:$0xff]
    %v1925 = vld [vmem:[%s1899 + $0xc8] sm:$0xff]
    %v1926 = vld [vmem:[%s1899 + $0xd0] sm:$0xff]
    %v1927 = vld [vmem:[%s1899 + $0xd8] sm:$0xff]
    %v1928 = vld [vmem:[%s1899 + $0xe0] sm:$0xff]
    %v1929 = vld [vmem:[%s1899 + $0xe8] sm:$0xff]
    %v1930 = vld [vmem:[%s1899 + $0xf0] sm:$0xff]
    %v1931 = vld [vmem:[%s1899 + $0xf8] sm:$0xff]
    %v1932 = vld [vmem:[%s1899 + $0x100] sm:$0xff]
    %v1933 = vld [vmem:[%s1899 + $0x108] sm:$0xff]
    %v1934 = vld [vmem:[%s1899 + $0x110] sm:$0xff]
    %v1935 = vld [vmem:[%s1899 + $0x118] sm:$0xff]
    %v1936 = vld [vmem:[%s1899 + $0x120] sm:$0xff]
    %v1937 = vld [vmem:[%s1899 + $0x128] sm:$0xff]
    %v1938 = vld [vmem:[%s1899 + $0x130] sm:$0xff]
    %v1939 = vld [vmem:[%s1899 + $0x138] sm:$0xff]
    %v1940 = vld [vmem:[%s1899 + $0x140] sm:$0xff]
    %v1941 = vld [vmem:[%s1899 + $0x148] sm:$0xff]
    %v1942 = vld [vmem:[%s1899 + $0x150] sm:$0xff]
    %v1943 = vld [vmem:[%s1899 + $0x158] sm:$0xff]
    %v1944 = vld [vmem:[%s1899 + $0x160] sm:$0xff]
    %v1945 = vld [vmem:[%s1899 + $0x168] sm:$0xff]
    %v1946 = vld [vmem:[%s1899 + $0x170] sm:$0xff]
    %v1947 = vld [vmem:[%s1899 + $0x178] sm:$0xff]
    %1948 = vmatpush.msra.mxu0 %v1915
    %1949 = vmatpush.msra.mxu0 %v1914
    %1950 = vmatpush.msra.mxu0 %v1913
    %1951 = vmatpush.msra.mxu0 %v1912
    %1952 = vmatpush.msra.mxu0 %v1911
    %1953 = vmatpush.msra.mxu0 %v1910
    %1954 = vmatpush.msra.mxu0 %v1909
    %1955 = vmatpush.msra.mxu0 %v1908
    %1956 = vmatpush.msra.mxu0 %v1907
    %1957 = vmatpush.msra.mxu0 %v1906
    %1958 = vmatpush.msra.mxu0 %v1905
    %1959 = vmatpush.msra.mxu0 %v1904
    %1960 = vmatpush.msra.mxu0 %v1903
    %1961 = vmatpush.msra.mxu0 %v1902
    %1962 = vmatpush.msra.mxu0 %v1901
    %1963 = vmatpush.msra.mxu0 %v1900
    %1964 = vmatmul.f32.gmra.mxu0 %v1881
    %v1965 = vpop.f32.mrf.mxu0
    %v1966 = vadd.f32 0.0, %v1965
    %1967 = vmatmul.f32.gmra.mxu0 %v1882
    %v1968 = vpop.f32.mrf.mxu0
    %v1969 = vadd.f32 0.0, %v1968
    %1970 = vmatmul.f32.gmra.mxu0 %v1883
    %v1971 = vpop.f32.mrf.mxu0
    %v1972 = vadd.f32 0.0, %v1971
    %1973 = vmatmul.f32.gmra.mxu0 %v1884
    %v1974 = vpop.f32.mrf.mxu0
    %v1975 = vadd.f32 0.0, %v1974
    %1976 = vdwg.mxu0
    %1977 = vmatpush.msra.mxu0 %v1931
    %1978 = vmatpush.msra.mxu0 %v1930
    %1979 = vmatpush.msra.mxu0 %v1929
    %1980 = vmatpush.msra.mxu0 %v1928
    %1981 = vmatpush.msra.mxu0 %v1927
    %1982 = vmatpush.msra.mxu0 %v1926
    %1983 = vmatpush.msra.mxu0 %v1925
    %1984 = vmatpush.msra.mxu0 %v1924
    %1985 = vmatpush.msra.mxu0 %v1923
    %1986 = vmatpush.msra.mxu0 %v1922
    %1987 = vmatpush.msra.mxu0 %v1921
    %1988 = vmatpush.msra.mxu0 %v1920
    %1989 = vmatpush.msra.mxu0 %v1919
    %1990 = vmatpush.msra.mxu0 %v1918
    %1991 = vmatpush.msra.mxu0 %v1917
    %1992 = vmatpush.msra.mxu0 %v1916
    %1993 = vmatmul.f32.gmra.mxu0 %v1866
    %v1994 = vpop.f32.mrf.mxu0
    %v1995 = vadd.f32 %v1966, %v1994
    %1996 = vmatmul.f32.gmra.mxu0 %v1867
    %v1997 = vpop.f32.mrf.mxu0
    %v1998 = vadd.f32 %v1969, %v1997
    %1999 = vmatmul.f32.gmra.mxu0 %v1868
    %v2000 = vpop.f32.mrf.mxu0
    %v2001 = vadd.f32 %v1972, %v2000
    %2002 = vmatmul.f32.gmra.mxu0 %v1869
    %v2003 = vpop.f32.mrf.mxu0
    %v2004 = vadd.f32 %v1975, %v2003
    %2005 = vdwg.mxu0
    %2006 = vmatpush.msra.mxu0 %v1947
    %2007 = vmatpush.msra.mxu0 %v1946
    %2008 = vmatpush.msra.mxu0 %v1945
    %2009 = vmatpush.msra.mxu0 %v1944
    %2010 = vmatpush.msra.mxu0 %v1943
    %2011 = vmatpush.msra.mxu0 %v1942
    %2012 = vmatpush.msra.mxu0 %v1941
    %2013 = vmatpush.msra.mxu0 %v1940
    %2014 = vmatpush.msra.mxu0 %v1939
    %2015 = vmatpush.msra.mxu0 %v1938
    %2016 = vmatpush.msra.mxu0 %v1937
    %2017 = vmatpush.msra.mxu0 %v1936
    %2018 = vmatpush.msra.mxu0 %v1935
    %2019 = vmatpush.msra.mxu0 %v1934
    %2020 = vmatpush.msra.mxu0 %v1933
    %2021 = vmatpush.msra.mxu0 %v1932
    %2022 = vmatmul.f32.gmra.mxu0 %v1894
    %v2023 = vpop.f32.mrf.mxu0
    %v2024 = vadd.f32 %v1995, %v2023
    %2025 = vmatmul.f32.gmra.mxu0 %v1895
    %v2026 = vpop.f32.mrf.mxu0
    %v2027 = vadd.f32 %v1998, %v2026
    %2028 = vmatmul.f32.gmra.mxu0 %v1896
    %v2029 = vpop.f32.mrf.mxu0
    %v2030 = vadd.f32 %v2001, %v2029
    %2031 = vmatmul.f32.gmra.mxu0 %v1897
    %v2032 = vpop.f32.mrf.mxu0
    %v2033 = vadd.f32 %v2004, %v2032
    %2034 = vdwg.mxu0
    %v2035 = vadd.f32 %v2024, %v2027
    %v2036 = vrot.slane %v2035, 4
    %v2037 = vadd.f32 %v2035, %v2036
    %v2038 = vrot.slane %v2037, 2
    %v2039 = vadd.f32 %v2037, %v2038
    %v2040 = vrot.slane %v2039, 1
    %v2041 = vadd.f32 %v2039, %v2040
    %v2042 = vmul.f32 %v2024, %v2024
    %v2043 = vmul.f32 %v2027, %v2027
    %v2044 = vadd.f32 %v2042, %v2043
    %v2045 = vrot.slane %v2044, 4
    %v2046 = vadd.f32 %v2044, %v2045
    %v2047 = vrot.slane %v2046, 2
    %v2048 = vadd.f32 %v2046, %v2047
    %v2049 = vrot.slane %v2048, 1
    %v2050 = vadd.f32 %v2048, %v2049
    %v2051 = vadd.f32 %v2030, %v2033
    %v2052 = vrot.slane %v2051, 4
    %v2053 = vadd.f32 %v2051, %v2052
    %v2054 = vrot.slane %v2053, 2
    %v2055 = vadd.f32 %v2053, %v2054
    %v2056 = vrot.slane %v2055, 1
    %v2057 = vadd.f32 %v2055, %v2056
    %v2058 = vmul.f32 %v2030, %v2030
    %v2059 = vmul.f32 %v2033, %v2033
    %v2060 = vadd.f32 %v2058, %v2059
    %v2061 = vrot.slane %v2060, 4
    %v2062 = vadd.f32 %v2060, %v2061
    %v2063 = vrot.slane %v2062, 2
    %v2064 = vadd.f32 %v2062, %v2063
    %v2065 = vrot.slane %v2064, 1
    %v2066 = vadd.f32 %v2064, %v2065
    %vm2067 = vcmask 1040384
    %v2068 = vsel %vm2067, %v2041, %v2057
    %vm2069 = vcmask 1041408
    %v2070 = vsel %vm2069, %v2068, %v2050
    %vm2071 = vcmask 1042432
    %v2072 = vsel %vm2071, %v2070, %v2066
    %2073 = vmatpush.msra.mxu0 %v35
    %2074 = vmatpush.msra.mxu0 %v34
    %2075 = vmatpush.msra.mxu0 %v33
    %2076 = vmatpush.msra.mxu0 %v32
    %2077 = vmatpush.msra.mxu0 %v31
    %2078 = vmatpush.msra.mxu0 %v30
    %2079 = vmatpush.msra.mxu0 %v29
    %2080 = vmatpush.msra.mxu0 %v28
    %2081 = vmatpush.msra.mxu0 %v27
    %2082 = vmatpush.msra.mxu0 %v26
    %2083 = vmatpush.msra.mxu0 %v25
    %2084 = vmatpush.msra.mxu0 %v24
    %2085 = vmatpush.msra.mxu0 %v23
    %2086 = vmatpush.msra.mxu0 %v22
    %2087 = vmatpush.msra.mxu0 %v21
    %2088 = vmatpush.msra.mxu0 %v20
    %2089 = vmatmul.f32.gmra.mxu0 %v2072
    %v2090 = vpop.f32.mrf.mxu0
    %v2091 = vadd.f32 0.0, %v2090
    %2092 = vdwg.mxu0
    %v2093 = vmul.f32 %v2091, 0.00390625
    %v2094 = vmul.f32 %v2093, %v2093
    %v2096 = vrot.slane %v2094, 6
    %v2098 = vsub.f32 %v2093, %v2096
    %v2099 = vadd.f32 %v2098, 1e-05
    %v2100 = vrsqrt.pop %v2099
    %v2101 = vmul.f32 %v2100, %v2099
    %v2102 = vmul.f32 %v2101, %v2100
    %v2103 = vmul.f32 0.5, %v2102
    %v2104 = vsub.f32 1.5, %v2103
    %v2105 = vmul.f32 %v2100, %v2104
    %vm2106 = vweird.f32 %v2099
    %vm2107 = vweird.f32 %v2100
    %vm2108 = vmor %vm2106, %vm2107
    %v2109 = vsel %vm2108, %v2100, %v2105
    %v2110 = vsub.f32 0.0, %v2093
    %v2112 = vrot.slane %v2109, 2
    %v2114 = vmul.f32 %v2110, %v2112
    %v2116 = vrot.slane %v2114, 6
    %v2118 = vsel %vm2069, %v2112, %v2116
    %vm2119 = vcmask 64512
    %v2121 = vsel %vm2119, %v2118, 0
    %2123 = vmatpush.msra.mxu0 0.0
    %2124 = vmatpush.msra.mxu0 0.0
    %2125 = vmatpush.msra.mxu0 0.0
    %2126 = vmatpush.msra.mxu0 0.0
    %2127 = vmatpush.msra.mxu0 0.0
    %2128 = vmatpush.msra.mxu0 0.0
    %2129 = vmatpush.msra.mxu0 0.0
    %2130 = vmatpush.msra.mxu0 0.0
    %2131 = vmatpush.msra.mxu0 0.0
    %2132 = vmatpush.msra.mxu0 0.0
    %2133 = vmatpush.msra.mxu0 0.0
    %2134 = vmatpush.msra.mxu0 0.0
    %2135 = vmatpush.msra.mxu0 0.0
    %2136 = vmatpush.msra.mxu0 0.0
    %2137 = vmatpush.msra.mxu0 0.0
    %2138 = vmatpush.msra.mxu0 %v36
    %2139 = vmatmul.f32.gmra.mxu0 %v2121
    %v2140 = vpop.f32.mrf.mxu0
    %v2141 = vadd.f32 0.0, %v2140
    %2142 = vdwg.mxu0
    %v2143 = vperm.slane %v2141, 0
    %v2144 = vmul.f32 %v2024, %v2143
    %v2145 = vmul.f32 %v2027, %v2143
    %v2146 = vperm.slane %v2141, 2
    %v2147 = vadd.f32 %v2144, %v2146
    %v2148 = vadd.f32 %v2145, %v2146
    %v2149 = vperm.slane %v2141, 1
    %v2150 = vmul.f32 %v2030, %v2149
    %v2151 = vmul.f32 %v2033, %v2149
    %v2152 = vperm.slane %v2141, 3
    %v2153 = vadd.f32 %v2150, %v2152
    %v2154 = vadd.f32 %v2151, %v2152
    %v2155 = vmax.f32 %v2147, 0.0
    %v2156 = vmax.f32 %v2148, 0.0
    %v2157 = vmax.f32 %v2153, 0.0
    %v2158 = vmax.f32 %v2154, 0.0
    %s2159 = sadd.s32 %s1871, 1
    %v2160 = vrot.slane %v2155, 7
    %v2161 = vrot.slane %v2156, 7
    %v2162 = vrot.slane %v2157, 7
    %v2163 = vrot.slane %v2158, 7
    %v2164 = vsel %vm1876, %v2162, %v2163
    %v2165 = vsel %vm1876, %v2161, %v2162
    %v2166 = vsel %vm1876, %v2160, %v2161
    %v2167 = vsel %vm1876, %v2163, %v2160
    %v2168 = vsel %vm98, 0.0, %v2167
    %v2169 = vsel %vm99, 0.0, %v2166
    %v2170 = vsel %vm100, 0.0, %v2165
    %v2171 = vsel %vm101, 0.0, %v2164
    %v2172 = vrot.slane %v2155, 1
    %v2173 = vrot.slane %v2156, 1
    %v2174 = vrot.slane %v2157, 1
    %v2175 = vrot.slane %v2158, 1
    %v2176 = vsel %vm1889, %v2174, %v2175
    %v2177 = vsel %vm1889, %v2173, %v2174
    %v2178 = vsel %vm1889, %v2172, %v2173
    %v2179 = vsel %vm1889, %v2175, %v2172
    %v2180 = vsel %vm102, 0.0, %v2178
    %v2181 = vsel %vm103, 0.0, %v2177
    %v2182 = vsel %vm104, 0.0, %v2176
    %v2183 = vsel %vm105, 0.0, %v2179
    %s2184 = smul.u32 %s2159, 384
    %s2185 = scalar_lea.vmem %s2, %s2184
    %v2186 = vld [vmem:[%s2185] sm:$0xff]
    %v2187 = vld [vmem:[%s2185 + $0x8] sm:$0xff]
    %v2188 = vld [vmem:[%s2185 + $0x10] sm:$0xff]
    %v2189 = vld [vmem:[%s2185 + $0x18] sm:$0xff]
    %v2190 = vld [vmem:[%s2185 + $0x20] sm:$0xff]
    %v2191 = vld [vmem:[%s2185 + $0x28] sm:$0xff]
    %v2192 = vld [vmem:[%s2185 + $0x30] sm:$0xff]
    %v2193 = vld [vmem:[%s2185 + $0x38] sm:$0xff]
    %v2194 = vld [vmem:[%s2185 + $0x40] sm:$0xff]
    %v2195 = vld [vmem:[%s2185 + $0x48] sm:$0xff]
    %v2196 = vld [vmem:[%s2185 + $0x50] sm:$0xff]
    %v2197 = vld [vmem:[%s2185 + $0x58] sm:$0xff]
    %v2198 = vld [vmem:[%s2185 + $0x60] sm:$0xff]
    %v2199 = vld [vmem:[%s2185 + $0x68] sm:$0xff]
    %v2200 = vld [vmem:[%s2185 + $0x70] sm:$0xff]
    %v2201 = vld [vmem:[%s2185 + $0x78] sm:$0xff]
    %v2202 = vld [vmem:[%s2185 + $0x80] sm:$0xff]
    %v2203 = vld [vmem:[%s2185 + $0x88] sm:$0xff]
    %v2204 = vld [vmem:[%s2185 + $0x90] sm:$0xff]
    %v2205 = vld [vmem:[%s2185 + $0x98] sm:$0xff]
    %v2206 = vld [vmem:[%s2185 + $0xa0] sm:$0xff]
    %v2207 = vld [vmem:[%s2185 + $0xa8] sm:$0xff]
    %v2208 = vld [vmem:[%s2185 + $0xb0] sm:$0xff]
    %v2209 = vld [vmem:[%s2185 + $0xb8] sm:$0xff]
    %v2210 = vld [vmem:[%s2185 + $0xc0] sm:$0xff]
    %v2211 = vld [vmem:[%s2185 + $0xc8] sm:$0xff]
    %v2212 = vld [vmem:[%s2185 + $0xd0] sm:$0xff]
    %v2213 = vld [vmem:[%s2185 + $0xd8] sm:$0xff]
    %v2214 = vld [vmem:[%s2185 + $0xe0] sm:$0xff]
    %v2215 = vld [vmem:[%s2185 + $0xe8] sm:$0xff]
    %v2216 = vld [vmem:[%s2185 + $0xf0] sm:$0xff]
    %v2217 = vld [vmem:[%s2185 + $0xf8] sm:$0xff]
    %v2218 = vld [vmem:[%s2185 + $0x100] sm:$0xff]
    %v2219 = vld [vmem:[%s2185 + $0x108] sm:$0xff]
    %v2220 = vld [vmem:[%s2185 + $0x110] sm:$0xff]
    %v2221 = vld [vmem:[%s2185 + $0x118] sm:$0xff]
    %v2222 = vld [vmem:[%s2185 + $0x120] sm:$0xff]
    %v2223 = vld [vmem:[%s2185 + $0x128] sm:$0xff]
    %v2224 = vld [vmem:[%s2185 + $0x130] sm:$0xff]
    %v2225 = vld [vmem:[%s2185 + $0x138] sm:$0xff]
    %v2226 = vld [vmem:[%s2185 + $0x140] sm:$0xff]
    %v2227 = vld [vmem:[%s2185 + $0x148] sm:$0xff]
    %v2228 = vld [vmem:[%s2185 + $0x150] sm:$0xff]
    %v2229 = vld [vmem:[%s2185 + $0x158] sm:$0xff]
    %v2230 = vld [vmem:[%s2185 + $0x160] sm:$0xff]
    %v2231 = vld [vmem:[%s2185 + $0x168] sm:$0xff]
    %v2232 = vld [vmem:[%s2185 + $0x170] sm:$0xff]
    %v2233 = vld [vmem:[%s2185 + $0x178] sm:$0xff]
    %2234 = vmatpush.msra.mxu0 %v2201
    %2235 = vmatpush.msra.mxu0 %v2200
    %2236 = vmatpush.msra.mxu0 %v2199
    %2237 = vmatpush.msra.mxu0 %v2198
    %2238 = vmatpush.msra.mxu0 %v2197
    %2239 = vmatpush.msra.mxu0 %v2196
    %2240 = vmatpush.msra.mxu0 %v2195
    %2241 = vmatpush.msra.mxu0 %v2194
    %2242 = vmatpush.msra.mxu0 %v2193
    %2243 = vmatpush.msra.mxu0 %v2192
    %2244 = vmatpush.msra.mxu0 %v2191
    %2245 = vmatpush.msra.mxu0 %v2190
    %2246 = vmatpush.msra.mxu0 %v2189
    %2247 = vmatpush.msra.mxu0 %v2188
    %2248 = vmatpush.msra.mxu0 %v2187
    %2249 = vmatpush.msra.mxu0 %v2186
    %2250 = vmatmul.f32.gmra.mxu0 %v2168
    %v2251 = vpop.f32.mrf.mxu0
    %v2252 = vadd.f32 0.0, %v2251
    %2253 = vmatmul.f32.gmra.mxu0 %v2169
    %v2254 = vpop.f32.mrf.mxu0
    %v2255 = vadd.f32 0.0, %v2254
    %2256 = vmatmul.f32.gmra.mxu0 %v2170
    %v2257 = vpop.f32.mrf.mxu0
    %v2258 = vadd.f32 0.0, %v2257
    %2259 = vmatmul.f32.gmra.mxu0 %v2171
    %v2260 = vpop.f32.mrf.mxu0
    %v2261 = vadd.f32 0.0, %v2260
    %2262 = vdwg.mxu0
    %2263 = vmatpush.msra.mxu0 %v2217
    %2264 = vmatpush.msra.mxu0 %v2216
    %2265 = vmatpush.msra.mxu0 %v2215
    %2266 = vmatpush.msra.mxu0 %v2214
    %2267 = vmatpush.msra.mxu0 %v2213
    %2268 = vmatpush.msra.mxu0 %v2212
    %2269 = vmatpush.msra.mxu0 %v2211
    %2270 = vmatpush.msra.mxu0 %v2210
    %2271 = vmatpush.msra.mxu0 %v2209
    %2272 = vmatpush.msra.mxu0 %v2208
    %2273 = vmatpush.msra.mxu0 %v2207
    %2274 = vmatpush.msra.mxu0 %v2206
    %2275 = vmatpush.msra.mxu0 %v2205
    %2276 = vmatpush.msra.mxu0 %v2204
    %2277 = vmatpush.msra.mxu0 %v2203
    %2278 = vmatpush.msra.mxu0 %v2202
    %2279 = vmatmul.f32.gmra.mxu0 %v2155
    %v2280 = vpop.f32.mrf.mxu0
    %v2281 = vadd.f32 %v2252, %v2280
    %2282 = vmatmul.f32.gmra.mxu0 %v2156
    %v2283 = vpop.f32.mrf.mxu0
    %v2284 = vadd.f32 %v2255, %v2283
    %2285 = vmatmul.f32.gmra.mxu0 %v2157
    %v2286 = vpop.f32.mrf.mxu0
    %v2287 = vadd.f32 %v2258, %v2286
    %2288 = vmatmul.f32.gmra.mxu0 %v2158
    %v2289 = vpop.f32.mrf.mxu0
    %v2290 = vadd.f32 %v2261, %v2289
    %2291 = vdwg.mxu0
    %2292 = vmatpush.msra.mxu0 %v2233
    %2293 = vmatpush.msra.mxu0 %v2232
    %2294 = vmatpush.msra.mxu0 %v2231
    %2295 = vmatpush.msra.mxu0 %v2230
    %2296 = vmatpush.msra.mxu0 %v2229
    %2297 = vmatpush.msra.mxu0 %v2228
    %2298 = vmatpush.msra.mxu0 %v2227
    %2299 = vmatpush.msra.mxu0 %v2226
    %2300 = vmatpush.msra.mxu0 %v2225
    %2301 = vmatpush.msra.mxu0 %v2224
    %2302 = vmatpush.msra.mxu0 %v2223
    %2303 = vmatpush.msra.mxu0 %v2222
    %2304 = vmatpush.msra.mxu0 %v2221
    %2305 = vmatpush.msra.mxu0 %v2220
    %2306 = vmatpush.msra.mxu0 %v2219
    %2307 = vmatpush.msra.mxu0 %v2218
    %2308 = vmatmul.f32.gmra.mxu0 %v2180
    %v2309 = vpop.f32.mrf.mxu0
    %v2310 = vadd.f32 %v2281, %v2309
    %2311 = vmatmul.f32.gmra.mxu0 %v2181
    %v2312 = vpop.f32.mrf.mxu0
    %v2313 = vadd.f32 %v2284, %v2312
    %2314 = vmatmul.f32.gmra.mxu0 %v2182
    %v2315 = vpop.f32.mrf.mxu0
    %v2316 = vadd.f32 %v2287, %v2315
    %2317 = vmatmul.f32.gmra.mxu0 %v2183
    %v2318 = vpop.f32.mrf.mxu0
    %v2319 = vadd.f32 %v2290, %v2318
    %2320 = vdwg.mxu0
    %v2321 = vadd.f32 %v2310, %v2313
    %v2322 = vrot.slane %v2321, 4
    %v2323 = vadd.f32 %v2321, %v2322
    %v2324 = vrot.slane %v2323, 2
    %v2325 = vadd.f32 %v2323, %v2324
    %v2326 = vrot.slane %v2325, 1
    %v2327 = vadd.f32 %v2325, %v2326
    %v2328 = vmul.f32 %v2310, %v2310
    %v2329 = vmul.f32 %v2313, %v2313
    %v2330 = vadd.f32 %v2328, %v2329
    %v2331 = vrot.slane %v2330, 4
    %v2332 = vadd.f32 %v2330, %v2331
    %v2333 = vrot.slane %v2332, 2
    %v2334 = vadd.f32 %v2332, %v2333
    %v2335 = vrot.slane %v2334, 1
    %v2336 = vadd.f32 %v2334, %v2335
    %v2337 = vadd.f32 %v2316, %v2319
    %v2338 = vrot.slane %v2337, 4
    %v2339 = vadd.f32 %v2337, %v2338
    %v2340 = vrot.slane %v2339, 2
    %v2341 = vadd.f32 %v2339, %v2340
    %v2342 = vrot.slane %v2341, 1
    %v2343 = vadd.f32 %v2341, %v2342
    %v2344 = vmul.f32 %v2316, %v2316
    %v2345 = vmul.f32 %v2319, %v2319
    %v2346 = vadd.f32 %v2344, %v2345
    %v2347 = vrot.slane %v2346, 4
    %v2348 = vadd.f32 %v2346, %v2347
    %v2349 = vrot.slane %v2348, 2
    %v2350 = vadd.f32 %v2348, %v2349
    %v2351 = vrot.slane %v2350, 1
    %v2352 = vadd.f32 %v2350, %v2351
    %v2353 = vsel %vm2067, %v2327, %v2343
    %v2354 = vsel %vm2069, %v2353, %v2336
    %v2355 = vsel %vm2071, %v2354, %v2352
    %2356 = vmatpush.msra.mxu0 %v35
    %2357 = vmatpush.msra.mxu0 %v34
    %2358 = vmatpush.msra.mxu0 %v33
    %2359 = vmatpush.msra.mxu0 %v32
    %2360 = vmatpush.msra.mxu0 %v31
    %2361 = vmatpush.msra.mxu0 %v30
    %2362 = vmatpush.msra.mxu0 %v29
    %2363 = vmatpush.msra.mxu0 %v28
    %2364 = vmatpush.msra.mxu0 %v27
    %2365 = vmatpush.msra.mxu0 %v26
    %2366 = vmatpush.msra.mxu0 %v25
    %2367 = vmatpush.msra.mxu0 %v24
    %2368 = vmatpush.msra.mxu0 %v23
    %2369 = vmatpush.msra.mxu0 %v22
    %2370 = vmatpush.msra.mxu0 %v21
    %2371 = vmatpush.msra.mxu0 %v20
    %2372 = vmatmul.f32.gmra.mxu0 %v2355
    %v2373 = vpop.f32.mrf.mxu0
    %v2374 = vadd.f32 0.0, %v2373
    %2375 = vdwg.mxu0
    %v2376 = vmul.f32 %v2374, 0.00390625
    %v2377 = vmul.f32 %v2376, %v2376
    %v2379 = vrot.slane %v2377, 6
    %v2381 = vsub.f32 %v2376, %v2379
    %v2382 = vadd.f32 %v2381, 1e-05
    %v2383 = vrsqrt.pop %v2382
    %v2384 = vmul.f32 %v2383, %v2382
    %v2385 = vmul.f32 %v2384, %v2383
    %v2386 = vmul.f32 0.5, %v2385
    %v2387 = vsub.f32 1.5, %v2386
    %v2388 = vmul.f32 %v2383, %v2387
    %vm2389 = vweird.f32 %v2382
    %vm2390 = vweird.f32 %v2383
    %vm2391 = vmor %vm2389, %vm2390
    %v2392 = vsel %vm2391, %v2383, %v2388
    %v2393 = vsub.f32 0.0, %v2376
    %v2395 = vrot.slane %v2392, 2
    %v2397 = vmul.f32 %v2393, %v2395
    %v2399 = vrot.slane %v2397, 6
    %v2401 = vsel %vm2069, %v2395, %v2399
    %v2403 = vsel %vm2119, %v2401, 0
    %2405 = vmatpush.msra.mxu0 0.0
    %2406 = vmatpush.msra.mxu0 0.0
    %2407 = vmatpush.msra.mxu0 0.0
    %2408 = vmatpush.msra.mxu0 0.0
    %2409 = vmatpush.msra.mxu0 0.0
    %2410 = vmatpush.msra.mxu0 0.0
    %2411 = vmatpush.msra.mxu0 0.0
    %2412 = vmatpush.msra.mxu0 0.0
    %2413 = vmatpush.msra.mxu0 0.0
    %2414 = vmatpush.msra.mxu0 0.0
    %2415 = vmatpush.msra.mxu0 0.0
    %2416 = vmatpush.msra.mxu0 0.0
    %2417 = vmatpush.msra.mxu0 0.0
    %2418 = vmatpush.msra.mxu0 0.0
    %2419 = vmatpush.msra.mxu0 0.0
    %2420 = vmatpush.msra.mxu0 %v36
    %2421 = vmatmul.f32.gmra.mxu0 %v2403
    %v2422 = vpop.f32.mrf.mxu0
    %v2423 = vadd.f32 0.0, %v2422
    %2424 = vdwg.mxu0
    %v2425 = vperm.slane %v2423, 0
    %v2426 = vmul.f32 %v2310, %v2425
    %v2427 = vmul.f32 %v2313, %v2425
    %v2428 = vperm.slane %v2423, 2
    %v2429 = vadd.f32 %v2426, %v2428
    %v2430 = vadd.f32 %v2427, %v2428
    %v2431 = vperm.slane %v2423, 1
    %v2432 = vmul.f32 %v2316, %v2431
    %v2433 = vmul.f32 %v2319, %v2431
    %v2434 = vperm.slane %v2423, 3
    %v2435 = vadd.f32 %v2432, %v2434
    %v2436 = vadd.f32 %v2433, %v2434
    %v2437 = vadd.f32 %v1866, %v2429
    %v2438 = vadd.f32 %v1867, %v2430
    %v2439 = vadd.f32 %v1868, %v2435
    %v2440 = vadd.f32 %v1869, %v2436
  $region47: #{feature_extractor_with_info.1} parent=0 // loop_footer
    %s1865 = sadd.s32 1, %s1861
  $region48: #{feature_extractor_with_info.1} parent=0 // loop_footer_branch
    %1860 = sbr.rel target = $region44
  $region49: #{feature_extractor_with_info.1} parent=0 // loop_exit
    _
  %v2441 = vadd.f32 %v1866, %v41
  %v2442 = vadd.f32 %v1867, %v42
  %v2443 = vadd.f32 %v1868, %v43
  %v2444 = vadd.f32 %v1869, %v44
  %2445 = vst [vmem:[%s5] sm:$0xff] %v2441
  %2446 = vst [vmem:[%s5 + $0x8] sm:$0xff] %v2442
  %2447 = vst [vmem:[%s5 + $0x10] sm:$0xff] %v2443
  %2448 = vst [vmem:[%s5 + $0x18] sm:$0xff] %v2444
  // Predicated region
  $region50: #{feature_extractor_with_info.1} parent=0 // pred_check
    _
  $region51: #{feature_extractor_with_info.1} parent=0 // pred_check_branch
    %2450 = sbr.rel (0) target = $region53
  $region52: #{feature_extractor_with_info.1} parent=0 // pred_region
    _
  $region53: #{feature_extractor_with_info.1} parent=0 // pred_fallthru
    _
  // Predicated region
  $region54: #{feature_extractor_with_info.1} parent=0 // pred_check
    _
  $region55: #{feature_extractor_with_info.1} parent=0 // pred_check_branch
    %2452 = sbr.rel (0) target = $region57
  $region56: #{feature_extractor_with_info.1} parent=0 // pred_region
    _
  $region57: #{feature_extractor_with_info.1} parent=0 // pred_fallthru
    _

</llo_original>
